<compile_context>
chip_gen: v7x
topology: tpu7x:2x2x1
jax: 0.10.0
libtpu: 0.0.40
codegen_flags: <defaults>
</compile_context>

<pallas_src>
import functools

import jax
import jax.numpy as jnp
from jax.experimental import pallas as pl
from jax.experimental.pallas import tpu as pltpu

DTYPE = jnp.float32
LANE = 128      # vreg lane width
SUBLANE = 8     # f32 sublanes per vreg


def _round_up(x, m):
    return ((x + m - 1) // m) * m


# ----------------------------- fused kernel -----------------------------
def _make_fused_kernel(num_layers, seq_len, hidden_pad):
    """Kernel closure: full LSTM stack + last-step gather + MLP head."""

    def kernel(*refs):
        # refs: lens, x, (wcat_l, b_l) * num_layers, w1, b1, w2, b2, out
        lens_ref = refs[0]
        x_ref = refs[1]
        wcat_refs = [refs[2 + 2 * l] for l in range(num_layers)]
        bias_refs = [refs[3 + 2 * l] for l in range(num_layers)]
        w1_ref, b1_ref, w2_ref, b2_ref, out_ref = refs[2 + 2 * num_layers:]

        Bp = x_ref.shape[1]
        Hp = hidden_pad

        lens = lens_ref[...]                                   # (Bp, 1) int32
        # Hoisted broadcast (broadcasts are not CSE'd if left inside the loop).
        lens_b = jnp.broadcast_to(lens, (Bp, Hp))

        h = [jnp.zeros((Bp, Hp), jnp.float32) for _ in range(num_layers)]
        c = [jnp.zeros((Bp, Hp), jnp.float32) for _ in range(num_layers)]
        last = jnp.zeros((Bp, Hp), jnp.float32)

        # L is small -> fully unrolled static loop; h/c are one vreg each.
        for t in range(seq_len):
            inp = x_ref[t]                                     # (Bp, D_pad) full-tile load
            for l in range(num_layers):
                wcat = wcat_refs[l][...]                       # (D_l_pad + Hp, 4*Hp) resident
                bias = bias_refs[l][...]                       # (1, 4*Hp)
                xh = jnp.concatenate([inp, h[l]], axis=1)      # lane-aligned concat
                gates = jnp.dot(xh.astype(wcat.dtype), wcat,
                                preferred_element_type=jnp.float32) + bias
                # PyTorch gate order i, f, g, o; each slice = one full 128-lane tile.
                i_g = jax.nn.sigmoid(gates[:, 0 * Hp:1 * Hp])
                f_g = jax.nn.sigmoid(gates[:, 1 * Hp:2 * Hp])
                g_g = jnp.tanh(gates[:, 2 * Hp:3 * Hp])
                o_g = jax.nn.sigmoid(gates[:, 3 * Hp:4 * Hp])
                c[l] = f_g * c[l] + i_g * g_g
                h[l] = o_g * jnp.tanh(c[l])
                inp = h[l]
            # Packed-sequence gather: keep the top-layer hidden state of the
            # last valid timestep of every sample (lengths == t+1 selects it).
            last = jnp.where(lens_b == (t + 1), inp, last)

        # MLP head: fc2(relu(fc1(last))); single lane-dense (8,128) store.
        w1 = w1_ref[...]
        w2 = w2_ref[...]
        hid = jnp.dot(last.astype(w1.dtype), w1,
                      preferred_element_type=jnp.float32) + b1_ref[...]
        hid = jnp.maximum(hid, 0.0)
        out = jnp.dot(hid.astype(w2.dtype), w2,
                      preferred_element_type=jnp.float32) + b2_ref[...]
        out_ref[...] = out.astype(out_ref.dtype)

    return kernel


# ------------------------------ parameters ------------------------------
def init_params(key, input_dim, hidden_dim, output_dim, num_layers):
    """Raw-shape init, same distribution family as the PyTorch module."""
    raw = {"lstm": []}
    bound = 1.0 / float(jnp.sqrt(jnp.float32(hidden_dim)))
    for layer in range(num_layers):
        in_dim = input_dim if layer == 0 else hidden_dim
        key, k1, k2, k3, k4 = jax.random.split(key, 5)
        raw["lstm"].append({
            "w_ih_t": jax.random.uniform(k1, (in_dim, 4 * hidden_dim), DTYPE, -bound, bound),
            "w_hh_t": jax.random.uniform(k2, (hidden_dim, 4 * hidden_dim), DTYPE, -bound, bound),
            "b_ih": jax.random.uniform(k3, (4 * hidden_dim,), DTYPE, -bound, bound),
            "b_hh": jax.random.uniform(k4, (4 * hidden_dim,), DTYPE, -bound, bound),
        })
    h2 = hidden_dim // 2
    key, k1, k2, k3, k4 = jax.random.split(key, 5)
    b1f = 1.0 / float(jnp.sqrt(jnp.float32(hidden_dim)))
    b2f = 1.0 / float(jnp.sqrt(jnp.float32(h2)))
    raw["w1_t"] = jax.random.uniform(k1, (hidden_dim, h2), DTYPE, -b1f, b1f)
    raw["b1"] = jax.random.uniform(k2, (1, h2), DTYPE, -b1f, b1f)
    raw["w2_t"] = jax.random.uniform(k3, (h2, output_dim), DTYPE, -b2f, b2f)
    raw["b2"] = jax.random.uniform(k4, (1, output_dim), DTYPE, -b2f, b2f)
    return raw


def _pad2(a, shape):
    out = jnp.zeros(shape, a.dtype)
    return out.at[:a.shape[0], :a.shape[1]].set(a)


def prepare_params(raw, input_dim, hidden_dim, output_dim, weight_dtype=DTYPE):
    """Pad to (8,128)-aligned shapes and merge [W_ih^T ; W_hh^T] per layer.

    Zero-padding is exact: padded input columns hit zero weight rows, padded
    gate columns have zero weight+bias so the padded hidden/cell units stay
    exactly 0 through the recurrence.  Use weight_dtype=jnp.bfloat16 on
    v6e/v7x (f32 accumulation is kept via preferred_element_type).
    """
    Hp = _round_up(hidden_dim, LANE)
    H2 = hidden_dim // 2
    H2p = _round_up(H2, LANE)
    Op = _round_up(output_dim, LANE)

    def pad_gates(w_t, rows, rows_pad):
        # (rows, 4*H) with gate blocks [i|f|g|o] -> (rows_pad, 4*Hp), each gate
        # block padded to a full 128-lane tile.
        w = w_t.reshape(rows, 4, hidden_dim)
        w = jnp.pad(w, ((0, rows_pad - rows), (0, 0), (0, Hp - hidden_dim)))
        return w.reshape(rows_pad, 4 * Hp)

    prepared = {"lstm": []}
    for l, lp in enumerate(raw["lstm"]):
        in_dim = input_dim if l == 0 else hidden_dim
        Dp = _round_up(in_dim, LANE) if l == 0 else Hp
        w_ih = pad_gates(lp["w_ih_t"], in_dim, Dp)
        w_hh = pad_gates(lp["w_hh_t"], hidden_dim, Hp)
        wcat = jnp.concatenate([w_ih, w_hh], axis=0).astype(weight_dtype)
        b = (lp["b_ih"] + lp["b_hh"]).reshape(4, hidden_dim)
        b = jnp.pad(b, ((0, 0), (0, Hp - hidden_dim))).reshape(1, 4 * Hp)
        prepared["lstm"].append({"wcat": wcat, "b": b.astype(DTYPE)})

    prepared["w1"] = _pad2(raw["w1_t"], (Hp, H2p)).astype(weight_dtype)
    prepared["b1"] = _pad2(raw["b1"], (1, H2p)).astype(DTYPE)
    prepared["w2"] = _pad2(raw["w2_t"], (H2p, Op)).astype(weight_dtype)
    prepared["b2"] = _pad2(raw["b2"], (1, Op)).astype(DTYPE)
    return prepared


# ------------------------------- forward --------------------------------
@functools.partial(jax.jit, static_argnames=("output_dim",))
def lstm_model_forward(params, x, lengths, *, output_dim):
    """x: (B, L, D) batch-first padded input; lengths: (B,) valid lengths."""
    B, L, D = x.shape
    Bp = _round_up(max(B, SUBLANE), SUBLANE)
    Hp = params["w1"].shape[0]
    Op = params["w2"].shape[1]
    D0p = params["lstm"][0]["wcat"].shape[0] - Hp
    num_layers = len(params["lstm"])

    # One-time input prep (fused under jit, tiny): pad batch -> Bp, features
    # -> D0p, lay out time-major so every timestep is a single full-tile load.
    x_tm = jnp.zeros((L, Bp, D0p), DTYPE).at[:, :B, :D].set(
        jnp.swapaxes(x.astype(DTYPE), 0, 1))
    lens = jnp.zeros((Bp, 1), jnp.int32).at[:B, 0].set(lengths.astype(jnp.int32))

    args = [lens, x_tm]
    for lp in params["lstm"]:
        args += [lp["wcat"], lp["b"]]
    args += [params["w1"], params["b1"], params["w2"], params["b2"]]

    out = pl.pallas_call(
        _make_fused_kernel(num_layers, L, Hp),
        out_shape=jax.ShapeDtypeStruct((Bp, Op), DTYPE),
        # ~1.2 MiB resident here; headroom for larger H.  For production sizes
        # on v7x (64 MiB VMEM / 2 TCs) use bf16 weights and/or tile the 4H
        # gate-column axis instead of the (serial) time axis.
        compiler_params=pltpu.CompilerParams(vmem_limit_bytes=32 * 1024 * 1024),
    )(*args)
    return out[:B, :output_dim]


if __name__ == "__main__":
    B, L = 2, 8
    INPUT_DIM, HIDDEN_DIM, OUTPUT_DIM, NUM_LAYERS = 8, 32, 4, 2

    key = jax.random.PRNGKey(0)
    key, kx = jax.random.split(key)
    x = jax.random.normal(kx, (B, L, INPUT_DIM), DTYPE)   # batch-first padded sequences
    lengths = jnp.array([8, 5], dtype=jnp.int32)          # valid length per sample

    raw = init_params(key, INPUT_DIM, HIDDEN_DIM, OUTPUT_DIM, NUM_LAYERS)
    params = prepare_params(raw, INPUT_DIM, HIDDEN_DIM, OUTPUT_DIM)

    out = lstm_model_forward(params, x, lengths, output_dim=OUTPUT_DIM)
    jax.block_until_ready(out)
    assert out.shape == (B, OUTPUT_DIM)
    print("KERNEL_OK")
</pallas_src>

<mosaic_0001>
module attributes {stable_mosaic.version = 11 : i64} {
  func.func @kernel(%arg0: memref<8x1xi32, #tpu.memory_space<vmem>>, %arg1: memref<8x8x128xf32, #tpu.memory_space<vmem>>, %arg2: memref<256x512xf32, #tpu.memory_space<vmem>>, %arg3: memref<1x512xf32, #tpu.memory_space<vmem>>, %arg4: memref<256x512xf32, #tpu.memory_space<vmem>>, %arg5: memref<1x512xf32, #tpu.memory_space<vmem>>, %arg6: memref<128x128xf32, #tpu.memory_space<vmem>>, %arg7: memref<1x128xf32, #tpu.memory_space<vmem>>, %arg8: memref<128x128xf32, #tpu.memory_space<vmem>>, %arg9: memref<1x128xf32, #tpu.memory_space<vmem>>, %arg10: memref<8x128xf32, #tpu.memory_space<vmem>>) attributes {dimension_semantics = [], scalar_prefetch = 0 : i64, scratch_operands = 0 : i64, tpu.core_type = #tpu.core_type<tc>} {
    %c0 = arith.constant 0 : index
    %c0_0 = arith.constant 0 : index
    %0 = vector.load %arg0[%c0, %c0_0] : memref<8x1xi32, #tpu.memory_space<vmem>>, vector<8x1xi32>
    %1 = vector.shape_cast %0 : vector<8x1xi32> to vector<8x1xi32>
    %2 = vector.broadcast %1 : vector<8x1xi32> to vector<8x128xi32>
    %cst = arith.constant 0.000000e+00 : f32
    %3 = vector.broadcast %cst : f32 to vector<8x128xf32>
    %cst_1 = arith.constant 0.000000e+00 : f32
    %4 = vector.broadcast %cst_1 : f32 to vector<8x128xf32>
    %cst_2 = arith.constant 0.000000e+00 : f32
    %5 = vector.broadcast %cst_2 : f32 to vector<8x128xf32>
    %cst_3 = arith.constant 0.000000e+00 : f32
    %6 = vector.broadcast %cst_3 : f32 to vector<8x128xf32>
    %cst_4 = arith.constant 0.000000e+00 : f32
    %7 = vector.broadcast %cst_4 : f32 to vector<8x128xf32>
    %c0_5 = arith.constant 0 : index
    %c0_6 = arith.constant 0 : index
    %c0_7 = arith.constant 0 : index
    %8 = vector.load %arg1[%c0_5, %c0_6, %c0_7] : memref<8x8x128xf32, #tpu.memory_space<vmem>>, vector<1x8x128xf32>
    %9 = vector.shape_cast %8 : vector<1x8x128xf32> to vector<8x128xf32>
    %c0_8 = arith.constant 0 : index
    %c0_9 = arith.constant 0 : index
    %10 = vector.load %arg2[%c0_8, %c0_9] : memref<256x512xf32, #tpu.memory_space<vmem>>, vector<256x512xf32>
    %c0_10 = arith.constant 0 : index
    %c0_11 = arith.constant 0 : index
    %11 = vector.load %arg3[%c0_10, %c0_11] : memref<1x512xf32, #tpu.memory_space<vmem>>, vector<1x512xf32>
    %12 = tpu.concatenate %9, %3 in 1 : vector<8x128xf32>, vector<8x128xf32> -> vector<8x256xf32>
    %cst_12 = arith.constant dense<0.000000e+00> : vector<8x512xf32>
    %13 = tpu.matmul %12, %10, %cst_12 {dimension_numbers = #tpu.dot_dimension_numbers<[1], [0], [0], [1], [0, 0, 1, 1], [], []>} : vector<8x256xf32>, vector<256x512xf32>, vector<8x512xf32> -> vector<8x512xf32>
    %14 = vector.broadcast %11 : vector<1x512xf32> to vector<8x512xf32>
    %15 = arith.addf %13, %14 : vector<8x512xf32>
    %16 = vector.extract_strided_slice %15 {offsets = [0, 0], sizes = [8, 128], strides = [1, 1]} : vector<8x512xf32> to vector<8x128xf32>
    %17 = arith.negf %16 : vector<8x128xf32>
    %18 = math.exp %17 : vector<8x128xf32>
    %cst_13 = arith.constant 1.000000e+00 : f32
    %19 = vector.broadcast %cst_13 : f32 to vector<8x128xf32>
    %20 = arith.addf %19, %18 : vector<8x128xf32>
    %21 = arith.divf %19, %20 : vector<8x128xf32>
    %22 = vector.extract_strided_slice %15 {offsets = [0, 128], sizes = [8, 128], strides = [1, 1]} : vector<8x512xf32> to vector<8x128xf32>
    %23 = arith.negf %22 : vector<8x128xf32>
    %24 = math.exp %23 : vector<8x128xf32>
    %cst_14 = arith.constant 1.000000e+00 : f32
    %25 = vector.broadcast %cst_14 : f32 to vector<8x128xf32>
    %26 = arith.addf %25, %24 : vector<8x128xf32>
    %27 = arith.divf %25, %26 : vector<8x128xf32>
    %28 = vector.extract_strided_slice %15 {offsets = [0, 256], sizes = [8, 128], strides = [1, 1]} : vector<8x512xf32> to vector<8x128xf32>
    %29 = math.tanh %28 : vector<8x128xf32>
    %30 = vector.extract_strided_slice %15 {offsets = [0, 384], sizes = [8, 128], strides = [1, 1]} : vector<8x512xf32> to vector<8x128xf32>
    %31 = arith.negf %30 : vector<8x128xf32>
    %32 = math.exp %31 : vector<8x128xf32>
    %cst_15 = arith.constant 1.000000e+00 : f32
    %33 = vector.broadcast %cst_15 : f32 to vector<8x128xf32>
    %34 = arith.addf %33, %32 : vector<8x128xf32>
    %35 = arith.divf %33, %34 : vector<8x128xf32>
    %36 = arith.mulf %27, %5 : vector<8x128xf32>
    %37 = arith.mulf %21, %29 : vector<8x128xf32>
    %38 = arith.addf %36, %37 : vector<8x128xf32>
    %39 = math.tanh %38 : vector<8x128xf32>
    %40 = arith.mulf %35, %39 : vector<8x128xf32>
    %c0_16 = arith.constant 0 : index
    %c0_17 = arith.constant 0 : index
    %41 = vector.load %arg4[%c0_16, %c0_17] : memref<256x512xf32, #tpu.memory_space<vmem>>, vector<256x512xf32>
    %c0_18 = arith.constant 0 : index
    %c0_19 = arith.constant 0 : index
    %42 = vector.load %arg5[%c0_18, %c0_19] : memref<1x512xf32, #tpu.memory_space<vmem>>, vector<1x512xf32>
    %43 = tpu.concatenate %40, %4 in 1 : vector<8x128xf32>, vector<8x128xf32> -> vector<8x256xf32>
    %cst_20 = arith.constant dense<0.000000e+00> : vector<8x512xf32>
    %44 = tpu.matmul %43, %41, %cst_20 {dimension_numbers = #tpu.dot_dimension_numbers<[1], [0], [0], [1], [0, 0, 1, 1], [], []>} : vector<8x256xf32>, vector<256x512xf32>, vector<8x512xf32> -> vector<8x512xf32>
    %45 = vector.broadcast %42 : vector<1x512xf32> to vector<8x512xf32>
    %46 = arith.addf %44, %45 : vector<8x512xf32>
    %47 = vector.extract_strided_slice %46 {offsets = [0, 0], sizes = [8, 128], strides = [1, 1]} : vector<8x512xf32> to vector<8x128xf32>
    %48 = arith.negf %47 : vector<8x128xf32>
    %49 = math.exp %48 : vector<8x128xf32>
    %cst_21 = arith.constant 1.000000e+00 : f32
    %50 = vector.broadcast %cst_21 : f32 to vector<8x128xf32>
    %51 = arith.addf %50, %49 : vector<8x128xf32>
    %52 = arith.divf %50, %51 : vector<8x128xf32>
    %53 = vector.extract_strided_slice %46 {offsets = [0, 128], sizes = [8, 128], strides = [1, 1]} : vector<8x512xf32> to vector<8x128xf32>
    %54 = arith.negf %53 : vector<8x128xf32>
    %55 = math.exp %54 : vector<8x128xf32>
    %cst_22 = arith.constant 1.000000e+00 : f32
    %56 = vector.broadcast %cst_22 : f32 to vector<8x128xf32>
    %57 = arith.addf %56, %55 : vector<8x128xf32>
    %58 = arith.divf %56, %57 : vector<8x128xf32>
    %59 = vector.extract_strided_slice %46 {offsets = [0, 256], sizes = [8, 128], strides = [1, 1]} : vector<8x512xf32> to vector<8x128xf32>
    %60 = math.tanh %59 : vector<8x128xf32>
    %61 = vector.extract_strided_slice %46 {offsets = [0, 384], sizes = [8, 128], strides = [1, 1]} : vector<8x512xf32> to vector<8x128xf32>
    %62 = arith.negf %61 : vector<8x128xf32>
    %63 = math.exp %62 : vector<8x128xf32>
    %cst_23 = arith.constant 1.000000e+00 : f32
    %64 = vector.broadcast %cst_23 : f32 to vector<8x128xf32>
    %65 = arith.addf %64, %63 : vector<8x128xf32>
    %66 = arith.divf %64, %65 : vector<8x128xf32>
    %67 = arith.mulf %58, %6 : vector<8x128xf32>
    %68 = arith.mulf %52, %60 : vector<8x128xf32>
    %69 = arith.addf %67, %68 : vector<8x128xf32>
    %70 = math.tanh %69 : vector<8x128xf32>
    %71 = arith.mulf %66, %70 : vector<8x128xf32>
    %c1_i32 = arith.constant 1 : i32
    %72 = vector.broadcast %c1_i32 : i32 to vector<8x128xi32>
    %73 = arith.cmpi eq, %2, %72 : vector<8x128xi32>
    %74 = arith.select %73, %71, %7 : vector<8x128xi1>, vector<8x128xf32>
    %c1 = arith.constant 1 : index
    %c0_24 = arith.constant 0 : index
    %c0_25 = arith.constant 0 : index
    %75 = vector.load %arg1[%c1, %c0_24, %c0_25] : memref<8x8x128xf32, #tpu.memory_space<vmem>>, vector<1x8x128xf32>
    %76 = vector.shape_cast %75 : vector<1x8x128xf32> to vector<8x128xf32>
    %c0_26 = arith.constant 0 : index
    %c0_27 = arith.constant 0 : index
    %77 = vector.load %arg2[%c0_26, %c0_27] : memref<256x512xf32, #tpu.memory_space<vmem>>, vector<256x512xf32>
    %c0_28 = arith.constant 0 : index
    %c0_29 = arith.constant 0 : index
    %78 = vector.load %arg3[%c0_28, %c0_29] : memref<1x512xf32, #tpu.memory_space<vmem>>, vector<1x512xf32>
    %79 = tpu.concatenate %76, %40 in 1 : vector<8x128xf32>, vector<8x128xf32> -> vector<8x256xf32>
    %cst_30 = arith.constant dense<0.000000e+00> : vector<8x512xf32>
    %80 = tpu.matmul %79, %77, %cst_30 {dimension_numbers = #tpu.dot_dimension_numbers<[1], [0], [0], [1], [0, 0, 1, 1], [], []>} : vector<8x256xf32>, vector<256x512xf32>, vector<8x512xf32> -> vector<8x512xf32>
    %81 = vector.broadcast %78 : vector<1x512xf32> to vector<8x512xf32>
    %82 = arith.addf %80, %81 : vector<8x512xf32>
    %83 = vector.extract_strided_slice %82 {offsets = [0, 0], sizes = [8, 128], strides = [1, 1]} : vector<8x512xf32> to vector<8x128xf32>
    %84 = arith.negf %83 : vector<8x128xf32>
    %85 = math.exp %84 : vector<8x128xf32>
    %cst_31 = arith.constant 1.000000e+00 : f32
    %86 = vector.broadcast %cst_31 : f32 to vector<8x128xf32>
    %87 = arith.addf %86, %85 : vector<8x128xf32>
    %88 = arith.divf %86, %87 : vector<8x128xf32>
    %89 = vector.extract_strided_slice %82 {offsets = [0, 128], sizes = [8, 128], strides = [1, 1]} : vector<8x512xf32> to vector<8x128xf32>
    %90 = arith.negf %89 : vector<8x128xf32>
    %91 = math.exp %90 : vector<8x128xf32>
    %cst_32 = arith.constant 1.000000e+00 : f32
    %92 = vector.broadcast %cst_32 : f32 to vector<8x128xf32>
    %93 = arith.addf %92, %91 : vector<8x128xf32>
    %94 = arith.divf %92, %93 : vector<8x128xf32>
    %95 = vector.extract_strided_slice %82 {offsets = [0, 256], sizes = [8, 128], strides = [1, 1]} : vector<8x512xf32> to vector<8x128xf32>
    %96 = math.tanh %95 : vector<8x128xf32>
    %97 = vector.extract_strided_slice %82 {offsets = [0, 384], sizes = [8, 128], strides = [1, 1]} : vector<8x512xf32> to vector<8x128xf32>
    %98 = arith.negf %97 : vector<8x128xf32>
    %99 = math.exp %98 : vector<8x128xf32>
    %cst_33 = arith.constant 1.000000e+00 : f32
    %100 = vector.broadcast %cst_33 : f32 to vector<8x128xf32>
    %101 = arith.addf %100, %99 : vector<8x128xf32>
    %102 = arith.divf %100, %101 : vector<8x128xf32>
    %103 = arith.mulf %94, %38 : vector<8x128xf32>
    %104 = arith.mulf %88, %96 : vector<8x128xf32>
    %105 = arith.addf %103, %104 : vector<8x128xf32>
    %106 = math.tanh %105 : vector<8x128xf32>
    %107 = arith.mulf %102, %106 : vector<8x128xf32>
    %c0_34 = arith.constant 0 : index
    %c0_35 = arith.constant 0 : index
    %108 = vector.load %arg4[%c0_34, %c0_35] : memref<256x512xf32, #tpu.memory_space<vmem>>, vector<256x512xf32>
    %c0_36 = arith.constant 0 : index
    %c0_37 = arith.constant 0 : index
    %109 = vector.load %arg5[%c0_36, %c0_37] : memref<1x512xf32, #tpu.memory_space<vmem>>, vector<1x512xf32>
    %110 = tpu.concatenate %107, %71 in 1 : vector<8x128xf32>, vector<8x128xf32> -> vector<8x256xf32>
    %cst_38 = arith.constant dense<0.000000e+00> : vector<8x512xf32>
    %111 = tpu.matmul %110, %108, %cst_38 {dimension_numbers = #tpu.dot_dimension_numbers<[1], [0], [0], [1], [0, 0, 1, 1], [], []>} : vector<8x256xf32>, vector<256x512xf32>, vector<8x512xf32> -> vector<8x512xf32>
    %112 = vector.broadcast %109 : vector<1x512xf32> to vector<8x512xf32>
    %113 = arith.addf %111, %112 : vector<8x512xf32>
    %114 = vector.extract_strided_slice %113 {offsets = [0, 0], sizes = [8, 128], strides = [1, 1]} : vector<8x512xf32> to vector<8x128xf32>
    %115 = arith.negf %114 : vector<8x128xf32>
    %116 = math.exp %115 : vector<8x128xf32>
    %cst_39 = arith.constant 1.000000e+00 : f32
    %117 = vector.broadcast %cst_39 : f32 to vector<8x128xf32>
    %118 = arith.addf %117, %116 : vector<8x128xf32>
    %119 = arith.divf %117, %118 : vector<8x128xf32>
    %120 = vector.extract_strided_slice %113 {offsets = [0, 128], sizes = [8, 128], strides = [1, 1]} : vector<8x512xf32> to vector<8x128xf32>
    %121 = arith.negf %120 : vector<8x128xf32>
    %122 = math.exp %121 : vector<8x128xf32>
    %cst_40 = arith.constant 1.000000e+00 : f32
    %123 = vector.broadcast %cst_40 : f32 to vector<8x128xf32>
    %124 = arith.addf %123, %122 : vector<8x128xf32>
    %125 = arith.divf %123, %124 : vector<8x128xf32>
    %126 = vector.extract_strided_slice %113 {offsets = [0, 256], sizes = [8, 128], strides = [1, 1]} : vector<8x512xf32> to vector<8x128xf32>
    %127 = math.tanh %126 : vector<8x128xf32>
    %128 = vector.extract_strided_slice %113 {offsets = [0, 384], sizes = [8, 128], strides = [1, 1]} : vector<8x512xf32> to vector<8x128xf32>
    %129 = arith.negf %128 : vector<8x128xf32>
    %130 = math.exp %129 : vector<8x128xf32>
    %cst_41 = arith.constant 1.000000e+00 : f32
    %131 = vector.broadcast %cst_41 : f32 to vector<8x128xf32>
    %132 = arith.addf %131, %130 : vector<8x128xf32>
    %133 = arith.divf %131, %132 : vector<8x128xf32>
    %134 = arith.mulf %125, %69 : vector<8x128xf32>
    %135 = arith.mulf %119, %127 : vector<8x128xf32>
    %136 = arith.addf %134, %135 : vector<8x128xf32>
    %137 = math.tanh %136 : vector<8x128xf32>
    %138 = arith.mulf %133, %137 : vector<8x128xf32>
    %c2_i32 = arith.constant 2 : i32
    %139 = vector.broadcast %c2_i32 : i32 to vector<8x128xi32>
    %140 = arith.cmpi eq, %2, %139 : vector<8x128xi32>
    %141 = arith.select %140, %138, %74 : vector<8x128xi1>, vector<8x128xf32>
    %c2 = arith.constant 2 : index
    %c0_42 = arith.constant 0 : index
    %c0_43 = arith.constant 0 : index
    %142 = vector.load %arg1[%c2, %c0_42, %c0_43] : memref<8x8x128xf32, #tpu.memory_space<vmem>>, vector<1x8x128xf32>
    %143 = vector.shape_cast %142 : vector<1x8x128xf32> to vector<8x128xf32>
    %c0_44 = arith.constant 0 : index
    %c0_45 = arith.constant 0 : index
    %144 = vector.load %arg2[%c0_44, %c0_45] : memref<256x512xf32, #tpu.memory_space<vmem>>, vector<256x512xf32>
    %c0_46 = arith.constant 0 : index
    %c0_47 = arith.constant 0 : index
    %145 = vector.load %arg3[%c0_46, %c0_47] : memref<1x512xf32, #tpu.memory_space<vmem>>, vector<1x512xf32>
    %146 = tpu.concatenate %143, %107 in 1 : vector<8x128xf32>, vector<8x128xf32> -> vector<8x256xf32>
    %cst_48 = arith.constant dense<0.000000e+00> : vector<8x512xf32>
    %147 = tpu.matmul %146, %144, %cst_48 {dimension_numbers = #tpu.dot_dimension_numbers<[1], [0], [0], [1], [0, 0, 1, 1], [], []>} : vector<8x256xf32>, vector<256x512xf32>, vector<8x512xf32> -> vector<8x512xf32>
    %148 = vector.broadcast %145 : vector<1x512xf32> to vector<8x512xf32>
    %149 = arith.addf %147, %148 : vector<8x512xf32>
    %150 = vector.extract_strided_slice %149 {offsets = [0, 0], sizes = [8, 128], strides = [1, 1]} : vector<8x512xf32> to vector<8x128xf32>
    %151 = arith.negf %150 : vector<8x128xf32>
    %152 = math.exp %151 : vector<8x128xf32>
    %cst_49 = arith.constant 1.000000e+00 : f32
    %153 = vector.broadcast %cst_49 : f32 to vector<8x128xf32>
    %154 = arith.addf %153, %152 : vector<8x128xf32>
    %155 = arith.divf %153, %154 : vector<8x128xf32>
    %156 = vector.extract_strided_slice %149 {offsets = [0, 128], sizes = [8, 128], strides = [1, 1]} : vector<8x512xf32> to vector<8x128xf32>
    %157 = arith.negf %156 : vector<8x128xf32>
    %158 = math.exp %157 : vector<8x128xf32>
    %cst_50 = arith.constant 1.000000e+00 : f32
    %159 = vector.broadcast %cst_50 : f32 to vector<8x128xf32>
    %160 = arith.addf %159, %158 : vector<8x128xf32>
    %161 = arith.divf %159, %160 : vector<8x128xf32>
    %162 = vector.extract_strided_slice %149 {offsets = [0, 256], sizes = [8, 128], strides = [1, 1]} : vector<8x512xf32> to vector<8x128xf32>
    %163 = math.tanh %162 : vector<8x128xf32>
    %164 = vector.extract_strided_slice %149 {offsets = [0, 384], sizes = [8, 128], strides = [1, 1]} : vector<8x512xf32> to vector<8x128xf32>
    %165 = arith.negf %164 : vector<8x128xf32>
    %166 = math.exp %165 : vector<8x128xf32>
    %cst_51 = arith.constant 1.000000e+00 : f32
    %167 = vector.broadcast %cst_51 : f32 to vector<8x128xf32>
    %168 = arith.addf %167, %166 : vector<8x128xf32>
    %169 = arith.divf %167, %168 : vector<8x128xf32>
    %170 = arith.mulf %161, %105 : vector<8x128xf32>
    %171 = arith.mulf %155, %163 : vector<8x128xf32>
    %172 = arith.addf %170, %171 : vector<8x128xf32>
    %173 = math.tanh %172 : vector<8x128xf32>
    %174 = arith.mulf %169, %173 : vector<8x128xf32>
    %c0_52 = arith.constant 0 : index
    %c0_53 = arith.constant 0 : index
    %175 = vector.load %arg4[%c0_52, %c0_53] : memref<256x512xf32, #tpu.memory_space<vmem>>, vector<256x512xf32>
    %c0_54 = arith.constant 0 : index
    %c0_55 = arith.constant 0 : index
    %176 = vector.load %arg5[%c0_54, %c0_55] : memref<1x512xf32, #tpu.memory_space<vmem>>, vector<1x512xf32>
    %177 = tpu.concatenate %174, %138 in 1 : vector<8x128xf32>, vector<8x128xf32> -> vector<8x256xf32>
    %cst_56 = arith.constant dense<0.000000e+00> : vector<8x512xf32>
    %178 = tpu.matmul %177, %175, %cst_56 {dimension_numbers = #tpu.dot_dimension_numbers<[1], [0], [0], [1], [0, 0, 1, 1], [], []>} : vector<8x256xf32>, vector<256x512xf32>, vector<8x512xf32> -> vector<8x512xf32>
    %179 = vector.broadcast %176 : vector<1x512xf32> to vector<8x512xf32>
    %180 = arith.addf %178, %179 : vector<8x512xf32>
    %181 = vector.extract_strided_slice %180 {offsets = [0, 0], sizes = [8, 128], strides = [1, 1]} : vector<8x512xf32> to vector<8x128xf32>
    %182 = arith.negf %181 : vector<8x128xf32>
    %183 = math.exp %182 : vector<8x128xf32>
    %cst_57 = arith.constant 1.000000e+00 : f32
    %184 = vector.broadcast %cst_57 : f32 to vector<8x128xf32>
    %185 = arith.addf %184, %183 : vector<8x128xf32>
    %186 = arith.divf %184, %185 : vector<8x128xf32>
    %187 = vector.extract_strided_slice %180 {offsets = [0, 128], sizes = [8, 128], strides = [1, 1]} : vector<8x512xf32> to vector<8x128xf32>
    %188 = arith.negf %187 : vector<8x128xf32>
    %189 = math.exp %188 : vector<8x128xf32>
    %cst_58 = arith.constant 1.000000e+00 : f32
    %190 = vector.broadcast %cst_58 : f32 to vector<8x128xf32>
    %191 = arith.addf %190, %189 : vector<8x128xf32>
    %192 = arith.divf %190, %191 : vector<8x128xf32>
    %193 = vector.extract_strided_slice %180 {offsets = [0, 256], sizes = [8, 128], strides = [1, 1]} : vector<8x512xf32> to vector<8x128xf32>
    %194 = math.tanh %193 : vector<8x128xf32>
    %195 = vector.extract_strided_slice %180 {offsets = [0, 384], sizes = [8, 128], strides = [1, 1]} : vector<8x512xf32> to vector<8x128xf32>
    %196 = arith.negf %195 : vector<8x128xf32>
    %197 = math.exp %196 : vector<8x128xf32>
    %cst_59 = arith.constant 1.000000e+00 : f32
    %198 = vector.broadcast %cst_59 : f32 to vector<8x128xf32>
    %199 = arith.addf %198, %197 : vector<8x128xf32>
    %200 = arith.divf %198, %199 : vector<8x128xf32>
    %201 = arith.mulf %192, %136 : vector<8x128xf32>
    %202 = arith.mulf %186, %194 : vector<8x128xf32>
    %203 = arith.addf %201, %202 : vector<8x128xf32>
    %204 = math.tanh %203 : vector<8x128xf32>
    %205 = arith.mulf %200, %204 : vector<8x128xf32>
    %c3_i32 = arith.constant 3 : i32
    %206 = vector.broadcast %c3_i32 : i32 to vector<8x128xi32>
    %207 = arith.cmpi eq, %2, %206 : vector<8x128xi32>
    %208 = arith.select %207, %205, %141 : vector<8x128xi1>, vector<8x128xf32>
    %c3 = arith.constant 3 : index
    %c0_60 = arith.constant 0 : index
    %c0_61 = arith.constant 0 : index
    %209 = vector.load %arg1[%c3, %c0_60, %c0_61] : memref<8x8x128xf32, #tpu.memory_space<vmem>>, vector<1x8x128xf32>
    %210 = vector.shape_cast %209 : vector<1x8x128xf32> to vector<8x128xf32>
    %c0_62 = arith.constant 0 : index
    %c0_63 = arith.constant 0 : index
    %211 = vector.load %arg2[%c0_62, %c0_63] : memref<256x512xf32, #tpu.memory_space<vmem>>, vector<256x512xf32>
    %c0_64 = arith.constant 0 : index
    %c0_65 = arith.constant 0 : index
    %212 = vector.load %arg3[%c0_64, %c0_65] : memref<1x512xf32, #tpu.memory_space<vmem>>, vector<1x512xf32>
    %213 = tpu.concatenate %210, %174 in 1 : vector<8x128xf32>, vector<8x128xf32> -> vector<8x256xf32>
    %cst_66 = arith.constant dense<0.000000e+00> : vector<8x512xf32>
    %214 = tpu.matmul %213, %211, %cst_66 {dimension_numbers = #tpu.dot_dimension_numbers<[1], [0], [0], [1], [0, 0, 1, 1], [], []>} : vector<8x256xf32>, vector<256x512xf32>, vector<8x512xf32> -> vector<8x512xf32>
    %215 = vector.broadcast %212 : vector<1x512xf32> to vector<8x512xf32>
    %216 = arith.addf %214, %215 : vector<8x512xf32>
    %217 = vector.extract_strided_slice %216 {offsets = [0, 0], sizes = [8, 128], strides = [1, 1]} : vector<8x512xf32> to vector<8x128xf32>
    %218 = arith.negf %217 : vector<8x128xf32>
    %219 = math.exp %218 : vector<8x128xf32>
    %cst_67 = arith.constant 1.000000e+00 : f32
    %220 = vector.broadcast %cst_67 : f32 to vector<8x128xf32>
    %221 = arith.addf %220, %219 : vector<8x128xf32>
    %222 = arith.divf %220, %221 : vector<8x128xf32>
    %223 = vector.extract_strided_slice %216 {offsets = [0, 128], sizes = [8, 128], strides = [1, 1]} : vector<8x512xf32> to vector<8x128xf32>
    %224 = arith.negf %223 : vector<8x128xf32>
    %225 = math.exp %224 : vector<8x128xf32>
    %cst_68 = arith.constant 1.000000e+00 : f32
    %226 = vector.broadcast %cst_68 : f32 to vector<8x128xf32>
    %227 = arith.addf %226, %225 : vector<8x128xf32>
    %228 = arith.divf %226, %227 : vector<8x128xf32>
    %229 = vector.extract_strided_slice %216 {offsets = [0, 256], sizes = [8, 128], strides = [1, 1]} : vector<8x512xf32> to vector<8x128xf32>
    %230 = math.tanh %229 : vector<8x128xf32>
    %231 = vector.extract_strided_slice %216 {offsets = [0, 384], sizes = [8, 128], strides = [1, 1]} : vector<8x512xf32> to vector<8x128xf32>
    %232 = arith.negf %231 : vector<8x128xf32>
    %233 = math.exp %232 : vector<8x128xf32>
    %cst_69 = arith.constant 1.000000e+00 : f32
    %234 = vector.broadcast %cst_69 : f32 to vector<8x128xf32>
    %235 = arith.addf %234, %233 : vector<8x128xf32>
    %236 = arith.divf %234, %235 : vector<8x128xf32>
    %237 = arith.mulf %228, %172 : vector<8x128xf32>
    %238 = arith.mulf %222, %230 : vector<8x128xf32>
    %239 = arith.addf %237, %238 : vector<8x128xf32>
    %240 = math.tanh %239 : vector<8x128xf32>
    %241 = arith.mulf %236, %240 : vector<8x128xf32>
    %c0_70 = arith.constant 0 : index
    %c0_71 = arith.constant 0 : index
    %242 = vector.load %arg4[%c0_70, %c0_71] : memref<256x512xf32, #tpu.memory_space<vmem>>, vector<256x512xf32>
    %c0_72 = arith.constant 0 : index
    %c0_73 = arith.constant 0 : index
    %243 = vector.load %arg5[%c0_72, %c0_73] : memref<1x512xf32, #tpu.memory_space<vmem>>, vector<1x512xf32>
    %244 = tpu.concatenate %241, %205 in 1 : vector<8x128xf32>, vector<8x128xf32> -> vector<8x256xf32>
    %cst_74 = arith.constant dense<0.000000e+00> : vector<8x512xf32>
    %245 = tpu.matmul %244, %242, %cst_74 {dimension_numbers = #tpu.dot_dimension_numbers<[1], [0], [0], [1], [0, 0, 1, 1], [], []>} : vector<8x256xf32>, vector<256x512xf32>, vector<8x512xf32> -> vector<8x512xf32>
    %246 = vector.broadcast %243 : vector<1x512xf32> to vector<8x512xf32>
    %247 = arith.addf %245, %246 : vector<8x512xf32>
    %248 = vector.extract_strided_slice %247 {offsets = [0, 0], sizes = [8, 128], strides = [1, 1]} : vector<8x512xf32> to vector<8x128xf32>
    %249 = arith.negf %248 : vector<8x128xf32>
    %250 = math.exp %249 : vector<8x128xf32>
    %cst_75 = arith.constant 1.000000e+00 : f32
    %251 = vector.broadcast %cst_75 : f32 to vector<8x128xf32>
    %252 = arith.addf %251, %250 : vector<8x128xf32>
    %253 = arith.divf %251, %252 : vector<8x128xf32>
    %254 = vector.extract_strided_slice %247 {offsets = [0, 128], sizes = [8, 128], strides = [1, 1]} : vector<8x512xf32> to vector<8x128xf32>
    %255 = arith.negf %254 : vector<8x128xf32>
    %256 = math.exp %255 : vector<8x128xf32>
    %cst_76 = arith.constant 1.000000e+00 : f32
    %257 = vector.broadcast %cst_76 : f32 to vector<8x128xf32>
    %258 = arith.addf %257, %256 : vector<8x128xf32>
    %259 = arith.divf %257, %258 : vector<8x128xf32>
    %260 = vector.extract_strided_slice %247 {offsets = [0, 256], sizes = [8, 128], strides = [1, 1]} : vector<8x512xf32> to vector<8x128xf32>
    %261 = math.tanh %260 : vector<8x128xf32>
    %262 = vector.extract_strided_slice %247 {offsets = [0, 384], sizes = [8, 128], strides = [1, 1]} : vector<8x512xf32> to vector<8x128xf32>
    %263 = arith.negf %262 : vector<8x128xf32>
    %264 = math.exp %263 : vector<8x128xf32>
    %cst_77 = arith.constant 1.000000e+00 : f32
    %265 = vector.broadcast %cst_77 : f32 to vector<8x128xf32>
    %266 = arith.addf %265, %264 : vector<8x128xf32>
    %267 = arith.divf %265, %266 : vector<8x128xf32>
    %268 = arith.mulf %259, %203 : vector<8x128xf32>
    %269 = arith.mulf %253, %261 : vector<8x128xf32>
    %270 = arith.addf %268, %269 : vector<8x128xf32>
    %271 = math.tanh %270 : vector<8x128xf32>
    %272 = arith.mulf %267, %271 : vector<8x128xf32>
    %c4_i32 = arith.constant 4 : i32
    %273 = vector.broadcast %c4_i32 : i32 to vector<8x128xi32>
    %274 = arith.cmpi eq, %2, %273 : vector<8x128xi32>
    %275 = arith.select %274, %272, %208 : vector<8x128xi1>, vector<8x128xf32>
    %c4 = arith.constant 4 : index
    %c0_78 = arith.constant 0 : index
    %c0_79 = arith.constant 0 : index
    %276 = vector.load %arg1[%c4, %c0_78, %c0_79] : memref<8x8x128xf32, #tpu.memory_space<vmem>>, vector<1x8x128xf32>
    %277 = vector.shape_cast %276 : vector<1x8x128xf32> to vector<8x128xf32>
    %c0_80 = arith.constant 0 : index
    %c0_81 = arith.constant 0 : index
    %278 = vector.load %arg2[%c0_80, %c0_81] : memref<256x512xf32, #tpu.memory_space<vmem>>, vector<256x512xf32>
    %c0_82 = arith.constant 0 : index
    %c0_83 = arith.constant 0 : index
    %279 = vector.load %arg3[%c0_82, %c0_83] : memref<1x512xf32, #tpu.memory_space<vmem>>, vector<1x512xf32>
    %280 = tpu.concatenate %277, %241 in 1 : vector<8x128xf32>, vector<8x128xf32> -> vector<8x256xf32>
    %cst_84 = arith.constant dense<0.000000e+00> : vector<8x512xf32>
    %281 = tpu.matmul %280, %278, %cst_84 {dimension_numbers = #tpu.dot_dimension_numbers<[1], [0], [0], [1], [0, 0, 1, 1], [], []>} : vector<8x256xf32>, vector<256x512xf32>, vector<8x512xf32> -> vector<8x512xf32>
    %282 = vector.broadcast %279 : vector<1x512xf32> to vector<8x512xf32>
    %283 = arith.addf %281, %282 : vector<8x512xf32>
    %284 = vector.extract_strided_slice %283 {offsets = [0, 0], sizes = [8, 128], strides = [1, 1]} : vector<8x512xf32> to vector<8x128xf32>
    %285 = arith.negf %284 : vector<8x128xf32>
    %286 = math.exp %285 : vector<8x128xf32>
    %cst_85 = arith.constant 1.000000e+00 : f32
    %287 = vector.broadcast %cst_85 : f32 to vector<8x128xf32>
    %288 = arith.addf %287, %286 : vector<8x128xf32>
    %289 = arith.divf %287, %288 : vector<8x128xf32>
    %290 = vector.extract_strided_slice %283 {offsets = [0, 128], sizes = [8, 128], strides = [1, 1]} : vector<8x512xf32> to vector<8x128xf32>
    %291 = arith.negf %290 : vector<8x128xf32>
    %292 = math.exp %291 : vector<8x128xf32>
    %cst_86 = arith.constant 1.000000e+00 : f32
    %293 = vector.broadcast %cst_86 : f32 to vector<8x128xf32>
    %294 = arith.addf %293, %292 : vector<8x128xf32>
    %295 = arith.divf %293, %294 : vector<8x128xf32>
    %296 = vector.extract_strided_slice %283 {offsets = [0, 256], sizes = [8, 128], strides = [1, 1]} : vector<8x512xf32> to vector<8x128xf32>
    %297 = math.tanh %296 : vector<8x128xf32>
    %298 = vector.extract_strided_slice %283 {offsets = [0, 384], sizes = [8, 128], strides = [1, 1]} : vector<8x512xf32> to vector<8x128xf32>
    %299 = arith.negf %298 : vector<8x128xf32>
    %300 = math.exp %299 : vector<8x128xf32>
    %cst_87 = arith.constant 1.000000e+00 : f32
    %301 = vector.broadcast %cst_87 : f32 to vector<8x128xf32>
    %302 = arith.addf %301, %300 : vector<8x128xf32>
    %303 = arith.divf %301, %302 : vector<8x128xf32>
    %304 = arith.mulf %295, %239 : vector<8x128xf32>
    %305 = arith.mulf %289, %297 : vector<8x128xf32>
    %306 = arith.addf %304, %305 : vector<8x128xf32>
    %307 = math.tanh %306 : vector<8x128xf32>
    %308 = arith.mulf %303, %307 : vector<8x128xf32>
    %c0_88 = arith.constant 0 : index
    %c0_89 = arith.constant 0 : index
    %309 = vector.load %arg4[%c0_88, %c0_89] : memref<256x512xf32, #tpu.memory_space<vmem>>, vector<256x512xf32>
    %c0_90 = arith.constant 0 : index
    %c0_91 = arith.constant 0 : index
    %310 = vector.load %arg5[%c0_90, %c0_91] : memref<1x512xf32, #tpu.memory_space<vmem>>, vector<1x512xf32>
    %311 = tpu.concatenate %308, %272 in 1 : vector<8x128xf32>, vector<8x128xf32> -> vector<8x256xf32>
    %cst_92 = arith.constant dense<0.000000e+00> : vector<8x512xf32>
    %312 = tpu.matmul %311, %309, %cst_92 {dimension_numbers = #tpu.dot_dimension_numbers<[1], [0], [0], [1], [0, 0, 1, 1], [], []>} : vector<8x256xf32>, vector<256x512xf32>, vector<8x512xf32> -> vector<8x512xf32>
    %313 = vector.broadcast %310 : vector<1x512xf32> to vector<8x512xf32>
    %314 = arith.addf %312, %313 : vector<8x512xf32>
    %315 = vector.extract_strided_slice %314 {offsets = [0, 0], sizes = [8, 128], strides = [1, 1]} : vector<8x512xf32> to vector<8x128xf32>
    %316 = arith.negf %315 : vector<8x128xf32>
    %317 = math.exp %316 : vector<8x128xf32>
    %cst_93 = arith.constant 1.000000e+00 : f32
    %318 = vector.broadcast %cst_93 : f32 to vector<8x128xf32>
    %319 = arith.addf %318, %317 : vector<8x128xf32>
    %320 = arith.divf %318, %319 : vector<8x128xf32>
    %321 = vector.extract_strided_slice %314 {offsets = [0, 128], sizes = [8, 128], strides = [1, 1]} : vector<8x512xf32> to vector<8x128xf32>
    %322 = arith.negf %321 : vector<8x128xf32>
    %323 = math.exp %322 : vector<8x128xf32>
    %cst_94 = arith.constant 1.000000e+00 : f32
    %324 = vector.broadcast %cst_94 : f32 to vector<8x128xf32>
    %325 = arith.addf %324, %323 : vector<8x128xf32>
    %326 = arith.divf %324, %325 : vector<8x128xf32>
    %327 = vector.extract_strided_slice %314 {offsets = [0, 256], sizes = [8, 128], strides = [1, 1]} : vector<8x512xf32> to vector<8x128xf32>
    %328 = math.tanh %327 : vector<8x128xf32>
    %329 = vector.extract_strided_slice %314 {offsets = [0, 384], sizes = [8, 128], strides = [1, 1]} : vector<8x512xf32> to vector<8x128xf32>
    %330 = arith.negf %329 : vector<8x128xf32>
    %331 = math.exp %330 : vector<8x128xf32>
    %cst_95 = arith.constant 1.000000e+00 : f32
    %332 = vector.broadcast %cst_95 : f32 to vector<8x128xf32>
    %333 = arith.addf %332, %331 : vector<8x128xf32>
    %334 = arith.divf %332, %333 : vector<8x128xf32>
    %335 = arith.mulf %326, %270 : vector<8x128xf32>
    %336 = arith.mulf %320, %328 : vector<8x128xf32>
    %337 = arith.addf %335, %336 : vector<8x128xf32>
    %338 = math.tanh %337 : vector<8x128xf32>
    %339 = arith.mulf %334, %338 : vector<8x128xf32>
    %c5_i32 = arith.constant 5 : i32
    %340 = vector.broadcast %c5_i32 : i32 to vector<8x128xi32>
    %341 = arith.cmpi eq, %2, %340 : vector<8x128xi32>
    %342 = arith.select %341, %339, %275 : vector<8x128xi1>, vector<8x128xf32>
    %c5 = arith.constant 5 : index
    %c0_96 = arith.constant 0 : index
    %c0_97 = arith.constant 0 : index
    %343 = vector.load %arg1[%c5, %c0_96, %c0_97] : memref<8x8x128xf32, #tpu.memory_space<vmem>>, vector<1x8x128xf32>
    %344 = vector.shape_cast %343 : vector<1x8x128xf32> to vector<8x128xf32>
    %c0_98 = arith.constant 0 : index
    %c0_99 = arith.constant 0 : index
    %345 = vector.load %arg2[%c0_98, %c0_99] : memref<256x512xf32, #tpu.memory_space<vmem>>, vector<256x512xf32>
    %c0_100 = arith.constant 0 : index
    %c0_101 = arith.constant 0 : index
    %346 = vector.load %arg3[%c0_100, %c0_101] : memref<1x512xf32, #tpu.memory_space<vmem>>, vector<1x512xf32>
    %347 = tpu.concatenate %344, %308 in 1 : vector<8x128xf32>, vector<8x128xf32> -> vector<8x256xf32>
    %cst_102 = arith.constant dense<0.000000e+00> : vector<8x512xf32>
    %348 = tpu.matmul %347, %345, %cst_102 {dimension_numbers = #tpu.dot_dimension_numbers<[1], [0], [0], [1], [0, 0, 1, 1], [], []>} : vector<8x256xf32>, vector<256x512xf32>, vector<8x512xf32> -> vector<8x512xf32>
    %349 = vector.broadcast %346 : vector<1x512xf32> to vector<8x512xf32>
    %350 = arith.addf %348, %349 : vector<8x512xf32>
    %351 = vector.extract_strided_slice %350 {offsets = [0, 0], sizes = [8, 128], strides = [1, 1]} : vector<8x512xf32> to vector<8x128xf32>
    %352 = arith.negf %351 : vector<8x128xf32>
    %353 = math.exp %352 : vector<8x128xf32>
    %cst_103 = arith.constant 1.000000e+00 : f32
    %354 = vector.broadcast %cst_103 : f32 to vector<8x128xf32>
    %355 = arith.addf %354, %353 : vector<8x128xf32>
    %356 = arith.divf %354, %355 : vector<8x128xf32>
    %357 = vector.extract_strided_slice %350 {offsets = [0, 128], sizes = [8, 128], strides = [1, 1]} : vector<8x512xf32> to vector<8x128xf32>
    %358 = arith.negf %357 : vector<8x128xf32>
    %359 = math.exp %358 : vector<8x128xf32>
    %cst_104 = arith.constant 1.000000e+00 : f32
    %360 = vector.broadcast %cst_104 : f32 to vector<8x128xf32>
    %361 = arith.addf %360, %359 : vector<8x128xf32>
    %362 = arith.divf %360, %361 : vector<8x128xf32>
    %363 = vector.extract_strided_slice %350 {offsets = [0, 256], sizes = [8, 128], strides = [1, 1]} : vector<8x512xf32> to vector<8x128xf32>
    %364 = math.tanh %363 : vector<8x128xf32>
    %365 = vector.extract_strided_slice %350 {offsets = [0, 384], sizes = [8, 128], strides = [1, 1]} : vector<8x512xf32> to vector<8x128xf32>
    %366 = arith.negf %365 : vector<8x128xf32>
    %367 = math.exp %366 : vector<8x128xf32>
    %cst_105 = arith.constant 1.000000e+00 : f32
    %368 = vector.broadcast %cst_105 : f32 to vector<8x128xf32>
    %369 = arith.addf %368, %367 : vector<8x128xf32>
    %370 = arith.divf %368, %369 : vector<8x128xf32>
    %371 = arith.mulf %362, %306 : vector<8x128xf32>
    %372 = arith.mulf %356, %364 : vector<8x128xf32>
    %373 = arith.addf %371, %372 : vector<8x128xf32>
    %374 = math.tanh %373 : vector<8x128xf32>
    %375 = arith.mulf %370, %374 : vector<8x128xf32>
    %c0_106 = arith.constant 0 : index
    %c0_107 = arith.constant 0 : index
    %376 = vector.load %arg4[%c0_106, %c0_107] : memref<256x512xf32, #tpu.memory_space<vmem>>, vector<256x512xf32>
    %c0_108 = arith.constant 0 : index
    %c0_109 = arith.constant 0 : index
    %377 = vector.load %arg5[%c0_108, %c0_109] : memref<1x512xf32, #tpu.memory_space<vmem>>, vector<1x512xf32>
    %378 = tpu.concatenate %375, %339 in 1 : vector<8x128xf32>, vector<8x128xf32> -> vector<8x256xf32>
    %cst_110 = arith.constant dense<0.000000e+00> : vector<8x512xf32>
    %379 = tpu.matmul %378, %376, %cst_110 {dimension_numbers = #tpu.dot_dimension_numbers<[1], [0], [0], [1], [0, 0, 1, 1], [], []>} : vector<8x256xf32>, vector<256x512xf32>, vector<8x512xf32> -> vector<8x512xf32>
    %380 = vector.broadcast %377 : vector<1x512xf32> to vector<8x512xf32>
    %381 = arith.addf %379, %380 : vector<8x512xf32>
    %382 = vector.extract_strided_slice %381 {offsets = [0, 0], sizes = [8, 128], strides = [1, 1]} : vector<8x512xf32> to vector<8x128xf32>
    %383 = arith.negf %382 : vector<8x128xf32>
    %384 = math.exp %383 : vector<8x128xf32>
    %cst_111 = arith.constant 1.000000e+00 : f32
    %385 = vector.broadcast %cst_111 : f32 to vector<8x128xf32>
    %386 = arith.addf %385, %384 : vector<8x128xf32>
    %387 = arith.divf %385, %386 : vector<8x128xf32>
    %388 = vector.extract_strided_slice %381 {offsets = [0, 128], sizes = [8, 128], strides = [1, 1]} : vector<8x512xf32> to vector<8x128xf32>
    %389 = arith.negf %388 : vector<8x128xf32>
    %390 = math.exp %389 : vector<8x128xf32>
    %cst_112 = arith.constant 1.000000e+00 : f32
    %391 = vector.broadcast %cst_112 : f32 to vector<8x128xf32>
    %392 = arith.addf %391, %390 : vector<8x128xf32>
    %393 = arith.divf %391, %392 : vector<8x128xf32>
    %394 = vector.extract_strided_slice %381 {offsets = [0, 256], sizes = [8, 128], strides = [1, 1]} : vector<8x512xf32> to vector<8x128xf32>
    %395 = math.tanh %394 : vector<8x128xf32>
    %396 = vector.extract_strided_slice %381 {offsets = [0, 384], sizes = [8, 128], strides = [1, 1]} : vector<8x512xf32> to vector<8x128xf32>
    %397 = arith.negf %396 : vector<8x128xf32>
    %398 = math.exp %397 : vector<8x128xf32>
    %cst_113 = arith.constant 1.000000e+00 : f32
    %399 = vector.broadcast %cst_113 : f32 to vector<8x128xf32>
    %400 = arith.addf %399, %398 : vector<8x128xf32>
    %401 = arith.divf %399, %400 : vector<8x128xf32>
    %402 = arith.mulf %393, %337 : vector<8x128xf32>
    %403 = arith.mulf %387, %395 : vector<8x128xf32>
    %404 = arith.addf %402, %403 : vector<8x128xf32>
    %405 = math.tanh %404 : vector<8x128xf32>
    %406 = arith.mulf %401, %405 : vector<8x128xf32>
    %c6_i32 = arith.constant 6 : i32
    %407 = vector.broadcast %c6_i32 : i32 to vector<8x128xi32>
    %408 = arith.cmpi eq, %2, %407 : vector<8x128xi32>
    %409 = arith.select %408, %406, %342 : vector<8x128xi1>, vector<8x128xf32>
    %c6 = arith.constant 6 : index
    %c0_114 = arith.constant 0 : index
    %c0_115 = arith.constant 0 : index
    %410 = vector.load %arg1[%c6, %c0_114, %c0_115] : memref<8x8x128xf32, #tpu.memory_space<vmem>>, vector<1x8x128xf32>
    %411 = vector.shape_cast %410 : vector<1x8x128xf32> to vector<8x128xf32>
    %c0_116 = arith.constant 0 : index
    %c0_117 = arith.constant 0 : index
    %412 = vector.load %arg2[%c0_116, %c0_117] : memref<256x512xf32, #tpu.memory_space<vmem>>, vector<256x512xf32>
    %c0_118 = arith.constant 0 : index
    %c0_119 = arith.constant 0 : index
    %413 = vector.load %arg3[%c0_118, %c0_119] : memref<1x512xf32, #tpu.memory_space<vmem>>, vector<1x512xf32>
    %414 = tpu.concatenate %411, %375 in 1 : vector<8x128xf32>, vector<8x128xf32> -> vector<8x256xf32>
    %cst_120 = arith.constant dense<0.000000e+00> : vector<8x512xf32>
    %415 = tpu.matmul %414, %412, %cst_120 {dimension_numbers = #tpu.dot_dimension_numbers<[1], [0], [0], [1], [0, 0, 1, 1], [], []>} : vector<8x256xf32>, vector<256x512xf32>, vector<8x512xf32> -> vector<8x512xf32>
    %416 = vector.broadcast %413 : vector<1x512xf32> to vector<8x512xf32>
    %417 = arith.addf %415, %416 : vector<8x512xf32>
    %418 = vector.extract_strided_slice %417 {offsets = [0, 0], sizes = [8, 128], strides = [1, 1]} : vector<8x512xf32> to vector<8x128xf32>
    %419 = arith.negf %418 : vector<8x128xf32>
    %420 = math.exp %419 : vector<8x128xf32>
    %cst_121 = arith.constant 1.000000e+00 : f32
    %421 = vector.broadcast %cst_121 : f32 to vector<8x128xf32>
    %422 = arith.addf %421, %420 : vector<8x128xf32>
    %423 = arith.divf %421, %422 : vector<8x128xf32>
    %424 = vector.extract_strided_slice %417 {offsets = [0, 128], sizes = [8, 128], strides = [1, 1]} : vector<8x512xf32> to vector<8x128xf32>
    %425 = arith.negf %424 : vector<8x128xf32>
    %426 = math.exp %425 : vector<8x128xf32>
    %cst_122 = arith.constant 1.000000e+00 : f32
    %427 = vector.broadcast %cst_122 : f32 to vector<8x128xf32>
    %428 = arith.addf %427, %426 : vector<8x128xf32>
    %429 = arith.divf %427, %428 : vector<8x128xf32>
    %430 = vector.extract_strided_slice %417 {offsets = [0, 256], sizes = [8, 128], strides = [1, 1]} : vector<8x512xf32> to vector<8x128xf32>
    %431 = math.tanh %430 : vector<8x128xf32>
    %432 = vector.extract_strided_slice %417 {offsets = [0, 384], sizes = [8, 128], strides = [1, 1]} : vector<8x512xf32> to vector<8x128xf32>
    %433 = arith.negf %432 : vector<8x128xf32>
    %434 = math.exp %433 : vector<8x128xf32>
    %cst_123 = arith.constant 1.000000e+00 : f32
    %435 = vector.broadcast %cst_123 : f32 to vector<8x128xf32>
    %436 = arith.addf %435, %434 : vector<8x128xf32>
    %437 = arith.divf %435, %436 : vector<8x128xf32>
    %438 = arith.mulf %429, %373 : vector<8x128xf32>
    %439 = arith.mulf %423, %431 : vector<8x128xf32>
    %440 = arith.addf %438, %439 : vector<8x128xf32>
    %441 = math.tanh %440 : vector<8x128xf32>
    %442 = arith.mulf %437, %441 : vector<8x128xf32>
    %c0_124 = arith.constant 0 : index
    %c0_125 = arith.constant 0 : index
    %443 = vector.load %arg4[%c0_124, %c0_125] : memref<256x512xf32, #tpu.memory_space<vmem>>, vector<256x512xf32>
    %c0_126 = arith.constant 0 : index
    %c0_127 = arith.constant 0 : index
    %444 = vector.load %arg5[%c0_126, %c0_127] : memref<1x512xf32, #tpu.memory_space<vmem>>, vector<1x512xf32>
    %445 = tpu.concatenate %442, %406 in 1 : vector<8x128xf32>, vector<8x128xf32> -> vector<8x256xf32>
    %cst_128 = arith.constant dense<0.000000e+00> : vector<8x512xf32>
    %446 = tpu.matmul %445, %443, %cst_128 {dimension_numbers = #tpu.dot_dimension_numbers<[1], [0], [0], [1], [0, 0, 1, 1], [], []>} : vector<8x256xf32>, vector<256x512xf32>, vector<8x512xf32> -> vector<8x512xf32>
    %447 = vector.broadcast %444 : vector<1x512xf32> to vector<8x512xf32>
    %448 = arith.addf %446, %447 : vector<8x512xf32>
    %449 = vector.extract_strided_slice %448 {offsets = [0, 0], sizes = [8, 128], strides = [1, 1]} : vector<8x512xf32> to vector<8x128xf32>
    %450 = arith.negf %449 : vector<8x128xf32>
    %451 = math.exp %450 : vector<8x128xf32>
    %cst_129 = arith.constant 1.000000e+00 : f32
    %452 = vector.broadcast %cst_129 : f32 to vector<8x128xf32>
    %453 = arith.addf %452, %451 : vector<8x128xf32>
    %454 = arith.divf %452, %453 : vector<8x128xf32>
    %455 = vector.extract_strided_slice %448 {offsets = [0, 128], sizes = [8, 128], strides = [1, 1]} : vector<8x512xf32> to vector<8x128xf32>
    %456 = arith.negf %455 : vector<8x128xf32>
    %457 = math.exp %456 : vector<8x128xf32>
    %cst_130 = arith.constant 1.000000e+00 : f32
    %458 = vector.broadcast %cst_130 : f32 to vector<8x128xf32>
    %459 = arith.addf %458, %457 : vector<8x128xf32>
    %460 = arith.divf %458, %459 : vector<8x128xf32>
    %461 = vector.extract_strided_slice %448 {offsets = [0, 256], sizes = [8, 128], strides = [1, 1]} : vector<8x512xf32> to vector<8x128xf32>
    %462 = math.tanh %461 : vector<8x128xf32>
    %463 = vector.extract_strided_slice %448 {offsets = [0, 384], sizes = [8, 128], strides = [1, 1]} : vector<8x512xf32> to vector<8x128xf32>
    %464 = arith.negf %463 : vector<8x128xf32>
    %465 = math.exp %464 : vector<8x128xf32>
    %cst_131 = arith.constant 1.000000e+00 : f32
    %466 = vector.broadcast %cst_131 : f32 to vector<8x128xf32>
    %467 = arith.addf %466, %465 : vector<8x128xf32>
    %468 = arith.divf %466, %467 : vector<8x128xf32>
    %469 = arith.mulf %460, %404 : vector<8x128xf32>
    %470 = arith.mulf %454, %462 : vector<8x128xf32>
    %471 = arith.addf %469, %470 : vector<8x128xf32>
    %472 = math.tanh %471 : vector<8x128xf32>
    %473 = arith.mulf %468, %472 : vector<8x128xf32>
    %c7_i32 = arith.constant 7 : i32
    %474 = vector.broadcast %c7_i32 : i32 to vector<8x128xi32>
    %475 = arith.cmpi eq, %2, %474 : vector<8x128xi32>
    %476 = arith.select %475, %473, %409 : vector<8x128xi1>, vector<8x128xf32>
    %c7 = arith.constant 7 : index
    %c0_132 = arith.constant 0 : index
    %c0_133 = arith.constant 0 : index
    %477 = vector.load %arg1[%c7, %c0_132, %c0_133] : memref<8x8x128xf32, #tpu.memory_space<vmem>>, vector<1x8x128xf32>
    %478 = vector.shape_cast %477 : vector<1x8x128xf32> to vector<8x128xf32>
    %c0_134 = arith.constant 0 : index
    %c0_135 = arith.constant 0 : index
    %479 = vector.load %arg2[%c0_134, %c0_135] : memref<256x512xf32, #tpu.memory_space<vmem>>, vector<256x512xf32>
    %c0_136 = arith.constant 0 : index
    %c0_137 = arith.constant 0 : index
    %480 = vector.load %arg3[%c0_136, %c0_137] : memref<1x512xf32, #tpu.memory_space<vmem>>, vector<1x512xf32>
    %481 = tpu.concatenate %478, %442 in 1 : vector<8x128xf32>, vector<8x128xf32> -> vector<8x256xf32>
    %cst_138 = arith.constant dense<0.000000e+00> : vector<8x512xf32>
    %482 = tpu.matmul %481, %479, %cst_138 {dimension_numbers = #tpu.dot_dimension_numbers<[1], [0], [0], [1], [0, 0, 1, 1], [], []>} : vector<8x256xf32>, vector<256x512xf32>, vector<8x512xf32> -> vector<8x512xf32>
    %483 = vector.broadcast %480 : vector<1x512xf32> to vector<8x512xf32>
    %484 = arith.addf %482, %483 : vector<8x512xf32>
    %485 = vector.extract_strided_slice %484 {offsets = [0, 0], sizes = [8, 128], strides = [1, 1]} : vector<8x512xf32> to vector<8x128xf32>
    %486 = arith.negf %485 : vector<8x128xf32>
    %487 = math.exp %486 : vector<8x128xf32>
    %cst_139 = arith.constant 1.000000e+00 : f32
    %488 = vector.broadcast %cst_139 : f32 to vector<8x128xf32>
    %489 = arith.addf %488, %487 : vector<8x128xf32>
    %490 = arith.divf %488, %489 : vector<8x128xf32>
    %491 = vector.extract_strided_slice %484 {offsets = [0, 128], sizes = [8, 128], strides = [1, 1]} : vector<8x512xf32> to vector<8x128xf32>
    %492 = arith.negf %491 : vector<8x128xf32>
    %493 = math.exp %492 : vector<8x128xf32>
    %cst_140 = arith.constant 1.000000e+00 : f32
    %494 = vector.broadcast %cst_140 : f32 to vector<8x128xf32>
    %495 = arith.addf %494, %493 : vector<8x128xf32>
    %496 = arith.divf %494, %495 : vector<8x128xf32>
    %497 = vector.extract_strided_slice %484 {offsets = [0, 256], sizes = [8, 128], strides = [1, 1]} : vector<8x512xf32> to vector<8x128xf32>
    %498 = math.tanh %497 : vector<8x128xf32>
    %499 = vector.extract_strided_slice %484 {offsets = [0, 384], sizes = [8, 128], strides = [1, 1]} : vector<8x512xf32> to vector<8x128xf32>
    %500 = arith.negf %499 : vector<8x128xf32>
    %501 = math.exp %500 : vector<8x128xf32>
    %cst_141 = arith.constant 1.000000e+00 : f32
    %502 = vector.broadcast %cst_141 : f32 to vector<8x128xf32>
    %503 = arith.addf %502, %501 : vector<8x128xf32>
    %504 = arith.divf %502, %503 : vector<8x128xf32>
    %505 = arith.mulf %496, %440 : vector<8x128xf32>
    %506 = arith.mulf %490, %498 : vector<8x128xf32>
    %507 = arith.addf %505, %506 : vector<8x128xf32>
    %508 = math.tanh %507 : vector<8x128xf32>
    %509 = arith.mulf %504, %508 : vector<8x128xf32>
    %c0_142 = arith.constant 0 : index
    %c0_143 = arith.constant 0 : index
    %510 = vector.load %arg4[%c0_142, %c0_143] : memref<256x512xf32, #tpu.memory_space<vmem>>, vector<256x512xf32>
    %c0_144 = arith.constant 0 : index
    %c0_145 = arith.constant 0 : index
    %511 = vector.load %arg5[%c0_144, %c0_145] : memref<1x512xf32, #tpu.memory_space<vmem>>, vector<1x512xf32>
    %512 = tpu.concatenate %509, %473 in 1 : vector<8x128xf32>, vector<8x128xf32> -> vector<8x256xf32>
    %cst_146 = arith.constant dense<0.000000e+00> : vector<8x512xf32>
    %513 = tpu.matmul %512, %510, %cst_146 {dimension_numbers = #tpu.dot_dimension_numbers<[1], [0], [0], [1], [0, 0, 1, 1], [], []>} : vector<8x256xf32>, vector<256x512xf32>, vector<8x512xf32> -> vector<8x512xf32>
    %514 = vector.broadcast %511 : vector<1x512xf32> to vector<8x512xf32>
    %515 = arith.addf %513, %514 : vector<8x512xf32>
    %516 = vector.extract_strided_slice %515 {offsets = [0, 0], sizes = [8, 128], strides = [1, 1]} : vector<8x512xf32> to vector<8x128xf32>
    %517 = arith.negf %516 : vector<8x128xf32>
    %518 = math.exp %517 : vector<8x128xf32>
    %cst_147 = arith.constant 1.000000e+00 : f32
    %519 = vector.broadcast %cst_147 : f32 to vector<8x128xf32>
    %520 = arith.addf %519, %518 : vector<8x128xf32>
    %521 = arith.divf %519, %520 : vector<8x128xf32>
    %522 = vector.extract_strided_slice %515 {offsets = [0, 128], sizes = [8, 128], strides = [1, 1]} : vector<8x512xf32> to vector<8x128xf32>
    %523 = arith.negf %522 : vector<8x128xf32>
    %524 = math.exp %523 : vector<8x128xf32>
    %cst_148 = arith.constant 1.000000e+00 : f32
    %525 = vector.broadcast %cst_148 : f32 to vector<8x128xf32>
    %526 = arith.addf %525, %524 : vector<8x128xf32>
    %527 = arith.divf %525, %526 : vector<8x128xf32>
    %528 = vector.extract_strided_slice %515 {offsets = [0, 256], sizes = [8, 128], strides = [1, 1]} : vector<8x512xf32> to vector<8x128xf32>
    %529 = math.tanh %528 : vector<8x128xf32>
    %530 = vector.extract_strided_slice %515 {offsets = [0, 384], sizes = [8, 128], strides = [1, 1]} : vector<8x512xf32> to vector<8x128xf32>
    %531 = arith.negf %530 : vector<8x128xf32>
    %532 = math.exp %531 : vector<8x128xf32>
    %cst_149 = arith.constant 1.000000e+00 : f32
    %533 = vector.broadcast %cst_149 : f32 to vector<8x128xf32>
    %534 = arith.addf %533, %532 : vector<8x128xf32>
    %535 = arith.divf %533, %534 : vector<8x128xf32>
    %536 = arith.mulf %527, %471 : vector<8x128xf32>
    %537 = arith.mulf %521, %529 : vector<8x128xf32>
    %538 = arith.addf %536, %537 : vector<8x128xf32>
    %539 = math.tanh %538 : vector<8x128xf32>
    %540 = arith.mulf %535, %539 : vector<8x128xf32>
    %c8_i32 = arith.constant 8 : i32
    %541 = vector.broadcast %c8_i32 : i32 to vector<8x128xi32>
    %542 = arith.cmpi eq, %2, %541 : vector<8x128xi32>
    %543 = arith.select %542, %540, %476 : vector<8x128xi1>, vector<8x128xf32>
    %c0_150 = arith.constant 0 : index
    %c0_151 = arith.constant 0 : index
    %544 = vector.load %arg6[%c0_150, %c0_151] : memref<128x128xf32, #tpu.memory_space<vmem>>, vector<128x128xf32>
    %c0_152 = arith.constant 0 : index
    %c0_153 = arith.constant 0 : index
    %545 = vector.load %arg8[%c0_152, %c0_153] : memref<128x128xf32, #tpu.memory_space<vmem>>, vector<128x128xf32>
    %cst_154 = arith.constant dense<0.000000e+00> : vector<8x128xf32>
    %546 = tpu.matmul %543, %544, %cst_154 {dimension_numbers = #tpu.dot_dimension_numbers<[1], [0], [0], [1], [0, 0, 1, 1], [], []>} : vector<8x128xf32>, vector<128x128xf32>, vector<8x128xf32> -> vector<8x128xf32>
    %c0_155 = arith.constant 0 : index
    %c0_156 = arith.constant 0 : index
    %547 = vector.load %arg7[%c0_155, %c0_156] : memref<1x128xf32, #tpu.memory_space<vmem>>, vector<1x128xf32>
    %548 = vector.broadcast %547 : vector<1x128xf32> to vector<8x128xf32>
    %549 = arith.addf %546, %548 : vector<8x128xf32>
    %cst_157 = arith.constant 0.000000e+00 : f32
    %550 = vector.broadcast %cst_157 : f32 to vector<8x128xf32>
    %551 = arith.maximumf %549, %550 : vector<8x128xf32>
    %cst_158 = arith.constant dense<0.000000e+00> : vector<8x128xf32>
    %552 = tpu.matmul %551, %545, %cst_158 {dimension_numbers = #tpu.dot_dimension_numbers<[1], [0], [0], [1], [0, 0, 1, 1], [], []>} : vector<8x128xf32>, vector<128x128xf32>, vector<8x128xf32> -> vector<8x128xf32>
    %c0_159 = arith.constant 0 : index
    %c0_160 = arith.constant 0 : index
    %553 = vector.load %arg9[%c0_159, %c0_160] : memref<1x128xf32, #tpu.memory_space<vmem>>, vector<1x128xf32>
    %554 = vector.broadcast %553 : vector<1x128xf32> to vector<8x128xf32>
    %555 = arith.addf %552, %554 : vector<8x128xf32>
    %c0_161 = arith.constant 0 : index
    %c0_162 = arith.constant 0 : index
    %556 = vector.load %arg10[%c0_161, %c0_162] : memref<8x128xf32, #tpu.memory_space<vmem>>, vector<8x128xf32>
    tpu.vector_store %arg10[%c0_161, %c0_162], %555 {strides = array<i32>} : memref<8x128xf32, #tpu.memory_space<vmem>>, vector<8x128xf32>,
    return
  }
}

</mosaic_0001>

<llo_original>
// kernel: lstm_model_forward.1
$region0: #{lstm_model_forward.1}
  #allocation0 [shape = 'u32[]', space=smem, size = 0x4, offset = 0x4, fixed_abs, tag = 'smem constant byte address 0x4 - core index']
  #allocation1 [shape = 'u32[144,128]{1,0:T(1,128)}', space=vmem, size = 0x12000, scoped, tag = 'internal scratch']
  %s0 = inlined_call_operand.vmem [shape: s32[8,1], index: 0, kind: input, shape index: {}]
  %s1 = inlined_call_operand.vmem [shape: f32[8,8,128], index: 1, kind: input, shape index: {}]
  %s2 = inlined_call_operand.hbm [shape: f32[256,512], index: 2, kind: input, shape index: {}]
  %s3 = inlined_call_operand.vmem [shape: f32[1,512], index: 3, kind: input, shape index: {}]
  %s4 = inlined_call_operand.hbm [shape: f32[256,512], index: 4, kind: input, shape index: {}]
  %s5 = inlined_call_operand.vmem [shape: f32[1,512], index: 5, kind: input, shape index: {}]
  %s6 = inlined_call_operand.vmem [shape: f32[128,128], index: 6, kind: input, shape index: {}]
  %s7 = inlined_call_operand.vmem [shape: f32[1,128], index: 7, kind: input, shape index: {}]
  %s8 = inlined_call_operand.hbm [shape: f32[128,128], index: 8, kind: input, shape index: {}]
  %s9 = inlined_call_operand.vmem [shape: f32[1,128], index: 9, kind: input, shape index: {}]
  %s10 = inlined_call_operand.vmem [shape: f32[8,128], index: 10, kind: output, shape index: {}]
  %s11 = sld [smem:[#allocation0]]
  $region62: #{lstm_model_forward.1} parent=0
    _
  %s13 = ssub.s32 1, %s11
  %s14 = scalar_select 0, %s13, %s11
  $region1: #{lstm_model_forward.1} parent=0
    #allocation2 [shape = 'u8[524288]{0}', space=vmem, size = 0x80000, scoped, tag = 'input window, operand 2, single buffered']
    #allocation3 [shape = 's32[1]{0}', space=sflag, size = 0x4, scoped, tag = 'scoped memory for lstm_model_forward.1']
    #allocation4 [shape = 'u8[524288]{0}', space=vmem, size = 0x80000, scoped, tag = 'input window, operand 4, single buffered']
    #allocation5 [shape = 's32[1]{0}', space=sflag, size = 0x4, scoped, tag = 'scoped memory for lstm_model_forward.1']
    #allocation6 [shape = 'u8[65536]{0}', space=vmem, size = 0x10000, scoped, tag = 'input window, operand 8, single buffered']
    %15 = vsyncpa [#allocation3], 0
    %16 = vsyncpa [#allocation5], 0
    // Predicated region
    $region2: #{lstm_model_forward.1} parent=1 // pred_check
      _
    $region3: #{lstm_model_forward.1} parent=1 // pred_check_branch
      %18 = sbr.rel (0) target = $region5
    $region4: #{lstm_model_forward.1} parent=1 // pred_region
      _
    $region5: #{lstm_model_forward.1} parent=1 // pred_fallthru
      _
    // Predicated region
    $region6: #{lstm_model_forward.1} parent=1 // pred_check
      _
    $region7: #{lstm_model_forward.1} parent=1 // pred_check_branch
      %20 = sbr.rel (0) target = $region9
    $region8: #{lstm_model_forward.1} parent=1 // pred_region
      _
    $region9: #{lstm_model_forward.1} parent=1 // pred_fallthru
      _
    // Predicated region
    $region10: #{lstm_model_forward.1} parent=1 // pred_check
      _
    $region11: #{lstm_model_forward.1} parent=1 // pred_check_branch
      %22 = sbr.rel (0) target = $region13
    $region12: #{lstm_model_forward.1} parent=1 // pred_region
      %s24 = ssub.s32 16384, 16384
      %25 = vsyncadd [#allocation3], %s24
      %s26 = sshll.u32 [#allocation2], 4
      %s27 = int_to_ptr.vmem [resolvable:$true] %s26
      %32 = dma.hbm_to_vmem [thread:$0]  %s2, 16384, %s27, [#allocation3], 512, 512, 32
    $region13: #{lstm_model_forward.1} parent=1 // pred_fallthru
      _
    // Predicated region
    $region14: #{lstm_model_forward.1} parent=1 // pred_check
      _
    $region15: #{lstm_model_forward.1} parent=1 // pred_check_branch
      %34 = sbr.rel (0) target = $region17
    $region16: #{lstm_model_forward.1} parent=1 // pred_region
      _
    $region17: #{lstm_model_forward.1} parent=1 // pred_fallthru
      _
    // Predicated region
    $region18: #{lstm_model_forward.1} parent=1 // pred_check
      _
    $region19: #{lstm_model_forward.1} parent=1 // pred_check_branch
      %36 = sbr.rel (0) target = $region21
    $region20: #{lstm_model_forward.1} parent=1 // pred_region
      %s38 = ssub.s32 16384, 16384
      %39 = vsyncadd [#allocation5], %s38
      %s40 = sshll.u32 [#allocation4], 4
      %s41 = int_to_ptr.vmem [resolvable:$true] %s40
      %46 = dma.hbm_to_vmem [thread:$0]  %s4, 16384, %s41, [#allocation5], 512, 512, 32
    $region21: #{lstm_model_forward.1} parent=1 // pred_fallthru
      _
    // Predicated region
    $region22: #{lstm_model_forward.1} parent=1 // pred_check
      _
    $region23: #{lstm_model_forward.1} parent=1 // pred_check_branch
      %48 = sbr.rel (0) target = $region25
    $region24: #{lstm_model_forward.1} parent=1 // pred_region
      _
    $region25: #{lstm_model_forward.1} parent=1 // pred_fallthru
      _
    // Predicated region
    $region26: #{lstm_model_forward.1} parent=1 // pred_check
      _
    $region27: #{lstm_model_forward.1} parent=1 // pred_check_branch
      %50 = sbr.rel (0) target = $region29
    $region28: #{lstm_model_forward.1} parent=1 // pred_region
      _
    $region29: #{lstm_model_forward.1} parent=1 // pred_fallthru
      _
    // Predicated region
    $region30: #{lstm_model_forward.1} parent=1 // pred_check
      _
    $region31: #{lstm_model_forward.1} parent=1 // pred_check_branch
      %52 = sbr.rel (0) target = $region33
    $region32: #{lstm_model_forward.1} parent=1 // pred_region
      _
    $region33: #{lstm_model_forward.1} parent=1 // pred_fallthru
      _
    // Predicated region
    $region34: #{lstm_model_forward.1} parent=1 // pred_check
      _
    $region35: #{lstm_model_forward.1} parent=1 // pred_check_branch
      %54 = sbr.rel (0) target = $region37
    $region36: #{lstm_model_forward.1} parent=1 // pred_region
      %s56 = ssub.s32 2048, 2048
      %57 = vsyncadd [#allocation5], %s56
      %s58 = sshll.u32 [#allocation6], 4
      %s59 = int_to_ptr.vmem [resolvable:$true] %s58
      %64 = dma.hbm_to_vmem [thread:$0]  %s8, 2048, %s59, [#allocation5], 128, 128, 8
    $region37: #{lstm_model_forward.1} parent=1 // pred_fallthru
      _
    // Predicated region
    $region38: #{lstm_model_forward.1} parent=1 // pred_check
      _
    $region39: #{lstm_model_forward.1} parent=1 // pred_check_branch
      %66 = sbr.rel (0) target = $region41
    $region40: #{lstm_model_forward.1} parent=1 // pred_region
      _
    $region41: #{lstm_model_forward.1} parent=1 // pred_fallthru
      _
    // Predicated region
    $region42: #{lstm_model_forward.1} parent=1 // pred_check
      _
    $region43: #{lstm_model_forward.1} parent=1 // pred_check_branch
      %68 = sbr.rel (0) target = $region45
    $region44: #{lstm_model_forward.1} parent=1 // pred_region
      %69 = dma.done [#allocation3], 16384
    $region45: #{lstm_model_forward.1} parent=1 // pred_fallthru
      _
    // Predicated region
    $region46: #{lstm_model_forward.1} parent=1 // pred_check
      _
    $region47: #{lstm_model_forward.1} parent=1 // pred_check_branch
      %71 = sbr.rel (0) target = $region49
    $region48: #{lstm_model_forward.1} parent=1 // pred_region
      %72 = dma.done [#allocation5], 16384
    $region49: #{lstm_model_forward.1} parent=1 // pred_fallthru
      _
    // Predicated region
    $region50: #{lstm_model_forward.1} parent=1 // pred_check
      _
    $region51: #{lstm_model_forward.1} parent=1 // pred_check_branch
      %74 = sbr.rel (0) target = $region53
    $region52: #{lstm_model_forward.1} parent=1 // pred_region
      %75 = dma.done [#allocation5], 2048
    $region53: #{lstm_model_forward.1} parent=1 // pred_fallthru
      _
    %v76 = vld [vmem:[%s0] sm:$0xff]
    %77 = vset.pattern.permute.xlu0 0
    %78 = vperm.xlu0 %77, %v76
    %v79 = vpop.permute.xlu0 %78
    %v80 = vld [vmem:[%s1] sm:$0xff]
    %v81 = vld [vmem:[#allocation2] sm:$0xff]
    %v82 = vld [vmem:[#allocation2 + $0x8] sm:$0xff]
    %v83 = vld [vmem:[#allocation2 + $0x10] sm:$0xff]
    %v84 = vld [vmem:[#allocation2 + $0x18] sm:$0xff]
    %v85 = vld [vmem:[#allocation2 + $0x20] sm:$0xff]
    %v86 = vld [vmem:[#allocation2 + $0x28] sm:$0xff]
    %v87 = vld [vmem:[#allocation2 + $0x30] sm:$0xff]
    %v88 = vld [vmem:[#allocation2 + $0x38] sm:$0xff]
    %v89 = vld [vmem:[#allocation2 + $0x40] sm:$0xff]
    %v90 = vld [vmem:[#allocation2 + $0x48] sm:$0xff]
    %v91 = vld [vmem:[#allocation2 + $0x50] sm:$0xff]
    %v92 = vld [vmem:[#allocation2 + $0x58] sm:$0xff]
    %v93 = vld [vmem:[#allocation2 + $0x60] sm:$0xff]
    %v94 = vld [vmem:[#allocation2 + $0x68] sm:$0xff]
    %v95 = vld [vmem:[#allocation2 + $0x70] sm:$0xff]
    %v96 = vld [vmem:[#allocation2 + $0x78] sm:$0xff]
    %v97 = vld [vmem:[#allocation2 + $0x80] sm:$0xff]
    %v98 = vld [vmem:[#allocation2 + $0x88] sm:$0xff]
    %v99 = vld [vmem:[#allocation2 + $0x90] sm:$0xff]
    %v100 = vld [vmem:[#allocation2 + $0x98] sm:$0xff]
    %v101 = vld [vmem:[#allocation2 + $0xa0] sm:$0xff]
    %v102 = vld [vmem:[#allocation2 + $0xa8] sm:$0xff]
    %v103 = vld [vmem:[#allocation2 + $0xb0] sm:$0xff]
    %v104 = vld [vmem:[#allocation2 + $0xb8] sm:$0xff]
    %v105 = vld [vmem:[#allocation2 + $0xc0] sm:$0xff]
    %v106 = vld [vmem:[#allocation2 + $0xc8] sm:$0xff]
    %v107 = vld [vmem:[#allocation2 + $0xd0] sm:$0xff]
    %v108 = vld [vmem:[#allocation2 + $0xd8] sm:$0xff]
    %v109 = vld [vmem:[#allocation2 + $0xe0] sm:$0xff]
    %v110 = vld [vmem:[#allocation2 + $0xe8] sm:$0xff]
    %v111 = vld [vmem:[#allocation2 + $0xf0] sm:$0xff]
    %v112 = vld [vmem:[#allocation2 + $0xf8] sm:$0xff]
    %v113 = vld [vmem:[#allocation2 + $0x100] sm:$0xff]
    %v114 = vld [vmem:[#allocation2 + $0x108] sm:$0xff]
    %v115 = vld [vmem:[#allocation2 + $0x110] sm:$0xff]
    %v116 = vld [vmem:[#allocation2 + $0x118] sm:$0xff]
    %v117 = vld [vmem:[#allocation2 + $0x120] sm:$0xff]
    %v118 = vld [vmem:[#allocation2 + $0x128] sm:$0xff]
    %v119 = vld [vmem:[#allocation2 + $0x130] sm:$0xff]
    %v120 = vld [vmem:[#allocation2 + $0x138] sm:$0xff]
    %v121 = vld [vmem:[#allocation2 + $0x140] sm:$0xff]
    %v122 = vld [vmem:[#allocation2 + $0x148] sm:$0xff]
    %v123 = vld [vmem:[#allocation2 + $0x150] sm:$0xff]
    %v124 = vld [vmem:[#allocation2 + $0x158] sm:$0xff]
    %v125 = vld [vmem:[#allocation2 + $0x160] sm:$0xff]
    %v126 = vld [vmem:[#allocation2 + $0x168] sm:$0xff]
    %v127 = vld [vmem:[#allocation2 + $0x170] sm:$0xff]
    %v128 = vld [vmem:[#allocation2 + $0x178] sm:$0xff]
    %v129 = vld [vmem:[#allocation2 + $0x180] sm:$0xff]
    %v130 = vld [vmem:[#allocation2 + $0x188] sm:$0xff]
    %v131 = vld [vmem:[#allocation2 + $0x190] sm:$0xff]
    %v132 = vld [vmem:[#allocation2 + $0x198] sm:$0xff]
    %v133 = vld [vmem:[#allocation2 + $0x1a0] sm:$0xff]
    %v134 = vld [vmem:[#allocation2 + $0x1a8] sm:$0xff]
    %v135 = vld [vmem:[#allocation2 + $0x1b0] sm:$0xff]
    %v136 = vld [vmem:[#allocation2 + $0x1b8] sm:$0xff]
    %v137 = vld [vmem:[#allocation2 + $0x1c0] sm:$0xff]
    %v138 = vld [vmem:[#allocation2 + $0x1c8] sm:$0xff]
    %v139 = vld [vmem:[#allocation2 + $0x1d0] sm:$0xff]
    %v140 = vld [vmem:[#allocation2 + $0x1d8] sm:$0xff]
    %v141 = vld [vmem:[#allocation2 + $0x1e0] sm:$0xff]
    %v142 = vld [vmem:[#allocation2 + $0x1e8] sm:$0xff]
    %v143 = vld [vmem:[#allocation2 + $0x1f0] sm:$0xff]
    %v144 = vld [vmem:[#allocation2 + $0x1f8] sm:$0xff]
    %v145 = vld [vmem:[#allocation2 + $0x200] sm:$0xff]
    %v146 = vld [vmem:[#allocation2 + $0x208] sm:$0xff]
    %v147 = vld [vmem:[#allocation2 + $0x210] sm:$0xff]
    %v148 = vld [vmem:[#allocation2 + $0x218] sm:$0xff]
    %v149 = vld [vmem:[#allocation2 + $0x220] sm:$0xff]
    %v150 = vld [vmem:[#allocation2 + $0x228] sm:$0xff]
    %v151 = vld [vmem:[#allocation2 + $0x230] sm:$0xff]
    %v152 = vld [vmem:[#allocation2 + $0x238] sm:$0xff]
    %v153 = vld [vmem:[#allocation2 + $0x240] sm:$0xff]
    %v154 = vld [vmem:[#allocation2 + $0x248] sm:$0xff]
    %v155 = vld [vmem:[#allocation2 + $0x250] sm:$0xff]
    %v156 = vld [vmem:[#allocation2 + $0x258] sm:$0xff]
    %v157 = vld [vmem:[#allocation2 + $0x260] sm:$0xff]
    %v158 = vld [vmem:[#allocation2 + $0x268] sm:$0xff]
    %v159 = vld [vmem:[#allocation2 + $0x270] sm:$0xff]
    %v160 = vld [vmem:[#allocation2 + $0x278] sm:$0xff]
    %v161 = vld [vmem:[#allocation2 + $0x280] sm:$0xff]
    %v162 = vld [vmem:[#allocation2 + $0x288] sm:$0xff]
    %v163 = vld [vmem:[#allocation2 + $0x290] sm:$0xff]
    %v164 = vld [vmem:[#allocation2 + $0x298] sm:$0xff]
    %v165 = vld [vmem:[#allocation2 + $0x2a0] sm:$0xff]
    %v166 = vld [vmem:[#allocation2 + $0x2a8] sm:$0xff]
    %v167 = vld [vmem:[#allocation2 + $0x2b0] sm:$0xff]
    %v168 = vld [vmem:[#allocation2 + $0x2b8] sm:$0xff]
    %v169 = vld [vmem:[#allocation2 + $0x2c0] sm:$0xff]
    %v170 = vld [vmem:[#allocation2 + $0x2c8] sm:$0xff]
    %v171 = vld [vmem:[#allocation2 + $0x2d0] sm:$0xff]
    %v172 = vld [vmem:[#allocation2 + $0x2d8] sm:$0xff]
    %v173 = vld [vmem:[#allocation2 + $0x2e0] sm:$0xff]
    %v174 = vld [vmem:[#allocation2 + $0x2e8] sm:$0xff]
    %v175 = vld [vmem:[#allocation2 + $0x2f0] sm:$0xff]
    %v176 = vld [vmem:[#allocation2 + $0x2f8] sm:$0xff]
    %v177 = vld [vmem:[#allocation2 + $0x300] sm:$0xff]
    %v178 = vld [vmem:[#allocation2 + $0x308] sm:$0xff]
    %v179 = vld [vmem:[#allocation2 + $0x310] sm:$0xff]
    %v180 = vld [vmem:[#allocation2 + $0x318] sm:$0xff]
    %v181 = vld [vmem:[#allocation2 + $0x320] sm:$0xff]
    %v182 = vld [vmem:[#allocation2 + $0x328] sm:$0xff]
    %v183 = vld [vmem:[#allocation2 + $0x330] sm:$0xff]
    %v184 = vld [vmem:[#allocation2 + $0x338] sm:$0xff]
    %v185 = vld [vmem:[#allocation2 + $0x340] sm:$0xff]
    %v186 = vld [vmem:[#allocation2 + $0x348] sm:$0xff]
    %v187 = vld [vmem:[#allocation2 + $0x350] sm:$0xff]
    %v188 = vld [vmem:[#allocation2 + $0x358] sm:$0xff]
    %v189 = vld [vmem:[#allocation2 + $0x360] sm:$0xff]
    %v190 = vld [vmem:[#allocation2 + $0x368] sm:$0xff]
    %v191 = vld [vmem:[#allocation2 + $0x370] sm:$0xff]
    %v192 = vld [vmem:[#allocation2 + $0x378] sm:$0xff]
    %v193 = vld [vmem:[#allocation2 + $0x380] sm:$0xff]
    %v194 = vld [vmem:[#allocation2 + $0x388] sm:$0xff]
    %v195 = vld [vmem:[#allocation2 + $0x390] sm:$0xff]
    %v196 = vld [vmem:[#allocation2 + $0x398] sm:$0xff]
    %v197 = vld [vmem:[#allocation2 + $0x3a0] sm:$0xff]
    %v198 = vld [vmem:[#allocation2 + $0x3a8] sm:$0xff]
    %v199 = vld [vmem:[#allocation2 + $0x3b0] sm:$0xff]
    %v200 = vld [vmem:[#allocation2 + $0x3b8] sm:$0xff]
    %v201 = vld [vmem:[#allocation2 + $0x3c0] sm:$0xff]
    %v202 = vld [vmem:[#allocation2 + $0x3c8] sm:$0xff]
    %v203 = vld [vmem:[#allocation2 + $0x3d0] sm:$0xff]
    %v204 = vld [vmem:[#allocation2 + $0x3d8] sm:$0xff]
    %v205 = vld [vmem:[#allocation2 + $0x3e0] sm:$0xff]
    %v206 = vld [vmem:[#allocation2 + $0x3e8] sm:$0xff]
    %v207 = vld [vmem:[#allocation2 + $0x3f0] sm:$0xff]
    %v208 = vld [vmem:[#allocation2 + $0x3f8] sm:$0xff]
    %v209 = vld [vmem:[%s3] sm:$0xf]
    %v211 = vlaneseq
    %v212 = vshrl.u32 %v211, 7
    %v213 = vsub.s32 0, %v212
    %v214 = vrot.slane %v209, %v213
    %v215 = vlaneseq
    %v216 = vshrl.u32 %v215, 7
    %v217 = vsub.s32 1, %v216
    %v218 = vrot.slane %v209, %v217
    %v219 = vlaneseq
    %v220 = vshrl.u32 %v219, 7
    %v221 = vsub.s32 2, %v220
    %v222 = vrot.slane %v209, %v221
    %v223 = vlaneseq
    %v224 = vshrl.u32 %v223, 7
    %v225 = vsub.s32 3, %v224
    %v226 = vrot.slane %v209, %v225
    %231 = vmatprep.subr.mxu0 %v82
    %232 = vmatpush1.msra.mxu0 %v81
    %233 = vmatprep.subr.mxu0 %v86
    %234 = vmatpush1.msra.mxu0 %v85
    %235 = vmatprep.subr.mxu0 %v90
    %236 = vmatpush1.msra.mxu0 %v89
    %237 = vmatprep.subr.mxu0 %v94
    %238 = vmatpush1.msra.mxu0 %v93
    %239 = vmatprep.subr.mxu0 %v98
    %240 = vmatpush1.msra.mxu0 %v97
    %241 = vmatprep.subr.mxu0 %v102
    %242 = vmatpush1.msra.mxu0 %v101
    %243 = vmatprep.subr.mxu0 %v106
    %244 = vmatpush1.msra.mxu0 %v105
    %245 = vmatprep.subr.mxu0 %v110
    %246 = vmatpush1.msra.mxu0 %v109
    %247 = vmatprep.subr.mxu0 %v114
    %248 = vmatpush1.msra.mxu0 %v113
    %249 = vmatprep.subr.mxu0 %v118
    %250 = vmatpush1.msra.mxu0 %v117
    %251 = vmatprep.subr.mxu0 %v122
    %252 = vmatpush1.msra.mxu0 %v121
    %253 = vmatprep.subr.mxu0 %v126
    %254 = vmatpush1.msra.mxu0 %v125
    %255 = vmatprep.subr.mxu0 %v130
    %256 = vmatpush1.msra.mxu0 %v129
    %257 = vmatprep.subr.mxu0 %v134
    %258 = vmatpush1.msra.mxu0 %v133
    %259 = vmatprep.subr.mxu0 %v138
    %260 = vmatpush1.msra.mxu0 %v137
    %261 = vmatprep.subr.mxu0 %v142
    %262 = vmatpush1.msra.mxu0 %v141
    %263 = vmatprep.subr.mxu0 %v146
    %264 = vmatpush1.msra.mxu0 %v145
    %265 = vmatprep.subr.mxu0 %v150
    %266 = vmatpush1.msra.mxu0 %v149
    %267 = vmatprep.subr.mxu0 %v154
    %268 = vmatpush1.msra.mxu0 %v153
    %269 = vmatprep.subr.mxu0 %v158
    %270 = vmatpush1.msra.mxu0 %v157
    %271 = vmatprep.subr.mxu0 %v162
    %272 = vmatpush1.msra.mxu0 %v161
    %273 = vmatprep.subr.mxu0 %v166
    %274 = vmatpush1.msra.mxu0 %v165
    %275 = vmatprep.subr.mxu0 %v170
    %276 = vmatpush1.msra.mxu0 %v169
    %277 = vmatprep.subr.mxu0 %v174
    %278 = vmatpush1.msra.mxu0 %v173
    %279 = vmatprep.subr.mxu0 %v178
    %280 = vmatpush1.msra.mxu0 %v177
    %281 = vmatprep.subr.mxu0 %v182
    %282 = vmatpush1.msra.mxu0 %v181
    %283 = vmatprep.subr.mxu0 %v186
    %284 = vmatpush1.msra.mxu0 %v185
    %285 = vmatprep.subr.mxu0 %v190
    %286 = vmatpush1.msra.mxu0 %v189
    %287 = vmatprep.subr.mxu0 %v194
    %288 = vmatpush1.msra.mxu0 %v193
    %289 = vmatprep.subr.mxu0 %v198
    %290 = vmatpush1.msra.mxu0 %v197
    %291 = vmatprep.subr.mxu0 %v202
    %292 = vmatpush1.msra.mxu0 %v201
    %293 = vmatprep.subr.mxu0 %v206
    %294 = vmatpush1.msra.mxu0 %v205
    %295 = vmatprep.mubr.f32.mxu0 0.0
    %296 = vmatmul.mubr.f32.gmra.mrb[0].mxu0 %v80
    %v297 = vpop.f32.mrb[0].mxu0
    %v298 = vadd.f32 %v214, %v297
    %v299 = vpop.f32.mrb[0].mxu0
    %v300 = vadd.f32 %v218, %v299
    %301 = vdwg.mxu0
    %302 = vmatprep.subr.mxu0 %v84
    %303 = vmatpush1.msra.mxu0 %v83
    %304 = vmatprep.subr.mxu0 %v88
    %305 = vmatpush1.msra.mxu0 %v87
    %306 = vmatprep.subr.mxu0 %v92
    %307 = vmatpush1.msra.mxu0 %v91
    %308 = vmatprep.subr.mxu0 %v96
    %309 = vmatpush1.msra.mxu0 %v95
    %310 = vmatprep.subr.mxu0 %v100
    %311 = vmatpush1.msra.mxu0 %v99
    %312 = vmatprep.subr.mxu0 %v104
    %313 = vmatpush1.msra.mxu0 %v103
    %314 = vmatprep.subr.mxu0 %v108
    %315 = vmatpush1.msra.mxu0 %v107
    %316 = vmatprep.subr.mxu0 %v112
    %317 = vmatpush1.msra.mxu0 %v111
    %318 = vmatprep.subr.mxu0 %v116
    %319 = vmatpush1.msra.mxu0 %v115
    %320 = vmatprep.subr.mxu0 %v120
    %321 = vmatpush1.msra.mxu0 %v119
    %322 = vmatprep.subr.mxu0 %v124
    %323 = vmatpush1.msra.mxu0 %v123
    %324 = vmatprep.subr.mxu0 %v128
    %325 = vmatpush1.msra.mxu0 %v127
    %326 = vmatprep.subr.mxu0 %v132
    %327 = vmatpush1.msra.mxu0 %v131
    %328 = vmatprep.subr.mxu0 %v136
    %329 = vmatpush1.msra.mxu0 %v135
    %330 = vmatprep.subr.mxu0 %v140
    %331 = vmatpush1.msra.mxu0 %v139
    %332 = vmatprep.subr.mxu0 %v144
    %333 = vmatpush1.msra.mxu0 %v143
    %334 = vmatprep.subr.mxu0 %v148
    %335 = vmatpush1.msra.mxu0 %v147
    %336 = vmatprep.subr.mxu0 %v152
    %337 = vmatpush1.msra.mxu0 %v151
    %338 = vmatprep.subr.mxu0 %v156
    %339 = vmatpush1.msra.mxu0 %v155
    %340 = vmatprep.subr.mxu0 %v160
    %341 = vmatpush1.msra.mxu0 %v159
    %342 = vmatprep.subr.mxu0 %v164
    %343 = vmatpush1.msra.mxu0 %v163
    %344 = vmatprep.subr.mxu0 %v168
    %345 = vmatpush1.msra.mxu0 %v167
    %346 = vmatprep.subr.mxu0 %v172
    %347 = vmatpush1.msra.mxu0 %v171
    %348 = vmatprep.subr.mxu0 %v176
    %349 = vmatpush1.msra.mxu0 %v175
    %350 = vmatprep.subr.mxu0 %v180
    %351 = vmatpush1.msra.mxu0 %v179
    %352 = vmatprep.subr.mxu0 %v184
    %353 = vmatpush1.msra.mxu0 %v183
    %354 = vmatprep.subr.mxu0 %v188
    %355 = vmatpush1.msra.mxu0 %v187
    %356 = vmatprep.subr.mxu0 %v192
    %357 = vmatpush1.msra.mxu0 %v191
    %358 = vmatprep.subr.mxu0 %v196
    %359 = vmatpush1.msra.mxu0 %v195
    %360 = vmatprep.subr.mxu0 %v200
    %361 = vmatpush1.msra.mxu0 %v199
    %362 = vmatprep.subr.mxu0 %v204
    %363 = vmatpush1.msra.mxu0 %v203
    %364 = vmatprep.subr.mxu0 %v208
    %365 = vmatpush1.msra.mxu0 %v207
    %366 = vmatprep.mubr.f32.mxu0 0.0
    %367 = vmatmul.mubr.f32.gmra.mrb[0].mxu0 %v80
    %v368 = vpop.f32.mrb[0].mxu0
    %v369 = vadd.f32 %v222, %v368
    %v370 = vpop.f32.mrb[0].mxu0
    %v371 = vadd.f32 %v226, %v370
    %372 = vdwg.mxu0
    %v373 = vxor.u32 %v298, 2147483648
    %v374 = vmul.f32 %v373, 1.442695
    %v375 = vpow.pop %v374
    %v376 = vadd.f32 %v375, 1.0
    %v377 = vrcp.pop %v376
    %v378 = vmul.f32 1.0, %v377
    %v379 = vxor.u32 %v300, 2147483648
    %v380 = vmul.f32 %v379, 1.442695
    %v381 = vpow.pop %v380
    %v382 = vadd.f32 %v381, 1.0
    %v383 = vrcp.pop %v382
    %v384 = vmul.f32 1.0, %v383
    %v385 = vtanh.pop %v369
    %v386 = vxor.u32 %v371, 2147483648
    %v387 = vmul.f32 %v386, 1.442695
    %v388 = vpow.pop %v387
    %v389 = vadd.f32 %v388, 1.0
    %v390 = vrcp.pop %v389
    %v391 = vmul.f32 1.0, %v390
    %v392 = vmul.f32 %v384, 0.0
    %v393 = vmul.f32 %v378, %v385
    %v394 = vadd.f32 %v392, %v393
    %v395 = vtanh.pop %v394
    %v396 = vmul.f32 %v391, %v395
    %v397 = vld [vmem:[#allocation4] sm:$0xff]
    %v398 = vld [vmem:[#allocation4 + $0x8] sm:$0xff]
    %v399 = vld [vmem:[#allocation4 + $0x10] sm:$0xff]
    %v400 = vld [vmem:[#allocation4 + $0x18] sm:$0xff]
    %v401 = vld [vmem:[#allocation4 + $0x20] sm:$0xff]
    %v402 = vld [vmem:[#allocation4 + $0x28] sm:$0xff]
    %v403 = vld [vmem:[#allocation4 + $0x30] sm:$0xff]
    %v404 = vld [vmem:[#allocation4 + $0x38] sm:$0xff]
    %v405 = vld [vmem:[#allocation4 + $0x40] sm:$0xff]
    %v406 = vld [vmem:[#allocation4 + $0x48] sm:$0xff]
    %v407 = vld [vmem:[#allocation4 + $0x50] sm:$0xff]
    %v408 = vld [vmem:[#allocation4 + $0x58] sm:$0xff]
    %v409 = vld [vmem:[#allocation4 + $0x60] sm:$0xff]
    %v410 = vld [vmem:[#allocation4 + $0x68] sm:$0xff]
    %v411 = vld [vmem:[#allocation4 + $0x70] sm:$0xff]
    %v412 = vld [vmem:[#allocation4 + $0x78] sm:$0xff]
    %v413 = vld [vmem:[#allocation4 + $0x80] sm:$0xff]
    %v414 = vld [vmem:[#allocation4 + $0x88] sm:$0xff]
    %v415 = vld [vmem:[#allocation4 + $0x90] sm:$0xff]
    %v416 = vld [vmem:[#allocation4 + $0x98] sm:$0xff]
    %v417 = vld [vmem:[#allocation4 + $0xa0] sm:$0xff]
    %v418 = vld [vmem:[#allocation4 + $0xa8] sm:$0xff]
    %v419 = vld [vmem:[#allocation4 + $0xb0] sm:$0xff]
    %v420 = vld [vmem:[#allocation4 + $0xb8] sm:$0xff]
    %v421 = vld [vmem:[#allocation4 + $0xc0] sm:$0xff]
    %v422 = vld [vmem:[#allocation4 + $0xc8] sm:$0xff]
    %v423 = vld [vmem:[#allocation4 + $0xd0] sm:$0xff]
    %v424 = vld [vmem:[#allocation4 + $0xd8] sm:$0xff]
    %v425 = vld [vmem:[#allocation4 + $0xe0] sm:$0xff]
    %v426 = vld [vmem:[#allocation4 + $0xe8] sm:$0xff]
    %v427 = vld [vmem:[#allocation4 + $0xf0] sm:$0xff]
    %v428 = vld [vmem:[#allocation4 + $0xf8] sm:$0xff]
    %v429 = vld [vmem:[#allocation4 + $0x100] sm:$0xff]
    %v430 = vld [vmem:[#allocation4 + $0x108] sm:$0xff]
    %v431 = vld [vmem:[#allocation4 + $0x110] sm:$0xff]
    %v432 = vld [vmem:[#allocation4 + $0x118] sm:$0xff]
    %v433 = vld [vmem:[#allocation4 + $0x120] sm:$0xff]
    %v434 = vld [vmem:[#allocation4 + $0x128] sm:$0xff]
    %v435 = vld [vmem:[#allocation4 + $0x130] sm:$0xff]
    %v436 = vld [vmem:[#allocation4 + $0x138] sm:$0xff]
    %v437 = vld [vmem:[#allocation4 + $0x140] sm:$0xff]
    %v438 = vld [vmem:[#allocation4 + $0x148] sm:$0xff]
    %v439 = vld [vmem:[#allocation4 + $0x150] sm:$0xff]
    %v440 = vld [vmem:[#allocation4 + $0x158] sm:$0xff]
    %v441 = vld [vmem:[#allocation4 + $0x160] sm:$0xff]
    %v442 = vld [vmem:[#allocation4 + $0x168] sm:$0xff]
    %v443 = vld [vmem:[#allocation4 + $0x170] sm:$0xff]
    %v444 = vld [vmem:[#allocation4 + $0x178] sm:$0xff]
    %v445 = vld [vmem:[#allocation4 + $0x180] sm:$0xff]
    %v446 = vld [vmem:[#allocation4 + $0x188] sm:$0xff]
    %v447 = vld [vmem:[#allocation4 + $0x190] sm:$0xff]
    %v448 = vld [vmem:[#allocation4 + $0x198] sm:$0xff]
    %v449 = vld [vmem:[#allocation4 + $0x1a0] sm:$0xff]
    %v450 = vld [vmem:[#allocation4 + $0x1a8] sm:$0xff]
    %v451 = vld [vmem:[#allocation4 + $0x1b0] sm:$0xff]
    %v452 = vld [vmem:[#allocation4 + $0x1b8] sm:$0xff]
    %v453 = vld [vmem:[#allocation4 + $0x1c0] sm:$0xff]
    %v454 = vld [vmem:[#allocation4 + $0x1c8] sm:$0xff]
    %v455 = vld [vmem:[#allocation4 + $0x1d0] sm:$0xff]
    %v456 = vld [vmem:[#allocation4 + $0x1d8] sm:$0xff]
    %v457 = vld [vmem:[#allocation4 + $0x1e0] sm:$0xff]
    %v458 = vld [vmem:[#allocation4 + $0x1e8] sm:$0xff]
    %v459 = vld [vmem:[#allocation4 + $0x1f0] sm:$0xff]
    %v460 = vld [vmem:[#allocation4 + $0x1f8] sm:$0xff]
    %v461 = vld [vmem:[#allocation4 + $0x200] sm:$0xff]
    %v462 = vld [vmem:[#allocation4 + $0x208] sm:$0xff]
    %v463 = vld [vmem:[#allocation4 + $0x210] sm:$0xff]
    %v464 = vld [vmem:[#allocation4 + $0x218] sm:$0xff]
    %v465 = vld [vmem:[#allocation4 + $0x220] sm:$0xff]
    %v466 = vld [vmem:[#allocation4 + $0x228] sm:$0xff]
    %v467 = vld [vmem:[#allocation4 + $0x230] sm:$0xff]
    %v468 = vld [vmem:[#allocation4 + $0x238] sm:$0xff]
    %v469 = vld [vmem:[#allocation4 + $0x240] sm:$0xff]
    %v470 = vld [vmem:[#allocation4 + $0x248] sm:$0xff]
    %v471 = vld [vmem:[#allocation4 + $0x250] sm:$0xff]
    %v472 = vld [vmem:[#allocation4 + $0x258] sm:$0xff]
    %v473 = vld [vmem:[#allocation4 + $0x260] sm:$0xff]
    %v474 = vld [vmem:[#allocation4 + $0x268] sm:$0xff]
    %v475 = vld [vmem:[#allocation4 + $0x270] sm:$0xff]
    %v476 = vld [vmem:[#allocation4 + $0x278] sm:$0xff]
    %v477 = vld [vmem:[#allocation4 + $0x280] sm:$0xff]
    %v478 = vld [vmem:[#allocation4 + $0x288] sm:$0xff]
    %v479 = vld [vmem:[#allocation4 + $0x290] sm:$0xff]
    %v480 = vld [vmem:[#allocation4 + $0x298] sm:$0xff]
    %v481 = vld [vmem:[#allocation4 + $0x2a0] sm:$0xff]
    %v482 = vld [vmem:[#allocation4 + $0x2a8] sm:$0xff]
    %v483 = vld [vmem:[#allocation4 + $0x2b0] sm:$0xff]
    %v484 = vld [vmem:[#allocation4 + $0x2b8] sm:$0xff]
    %v485 = vld [vmem:[#allocation4 + $0x2c0] sm:$0xff]
    %v486 = vld [vmem:[#allocation4 + $0x2c8] sm:$0xff]
    %v487 = vld [vmem:[#allocation4 + $0x2d0] sm:$0xff]
    %v488 = vld [vmem:[#allocation4 + $0x2d8] sm:$0xff]
    %v489 = vld [vmem:[#allocation4 + $0x2e0] sm:$0xff]
    %v490 = vld [vmem:[#allocation4 + $0x2e8] sm:$0xff]
    %v491 = vld [vmem:[#allocation4 + $0x2f0] sm:$0xff]
    %v492 = vld [vmem:[#allocation4 + $0x2f8] sm:$0xff]
    %v493 = vld [vmem:[#allocation4 + $0x300] sm:$0xff]
    %v494 = vld [vmem:[#allocation4 + $0x308] sm:$0xff]
    %v495 = vld [vmem:[#allocation4 + $0x310] sm:$0xff]
    %v496 = vld [vmem:[#allocation4 + $0x318] sm:$0xff]
    %v497 = vld [vmem:[#allocation4 + $0x320] sm:$0xff]
    %v498 = vld [vmem:[#allocation4 + $0x328] sm:$0xff]
    %v499 = vld [vmem:[#allocation4 + $0x330] sm:$0xff]
    %v500 = vld [vmem:[#allocation4 + $0x338] sm:$0xff]
    %v501 = vld [vmem:[#allocation4 + $0x340] sm:$0xff]
    %v502 = vld [vmem:[#allocation4 + $0x348] sm:$0xff]
    %v503 = vld [vmem:[#allocation4 + $0x350] sm:$0xff]
    %v504 = vld [vmem:[#allocation4 + $0x358] sm:$0xff]
    %v505 = vld [vmem:[#allocation4 + $0x360] sm:$0xff]
    %v506 = vld [vmem:[#allocation4 + $0x368] sm:$0xff]
    %v507 = vld [vmem:[#allocation4 + $0x370] sm:$0xff]
    %v508 = vld [vmem:[#allocation4 + $0x378] sm:$0xff]
    %v509 = vld [vmem:[#allocation4 + $0x380] sm:$0xff]
    %v510 = vld [vmem:[#allocation4 + $0x388] sm:$0xff]
    %v511 = vld [vmem:[#allocation4 + $0x390] sm:$0xff]
    %v512 = vld [vmem:[#allocation4 + $0x398] sm:$0xff]
    %v513 = vld [vmem:[#allocation4 + $0x3a0] sm:$0xff]
    %v514 = vld [vmem:[#allocation4 + $0x3a8] sm:$0xff]
    %v515 = vld [vmem:[#allocation4 + $0x3b0] sm:$0xff]
    %v516 = vld [vmem:[#allocation4 + $0x3b8] sm:$0xff]
    %v517 = vld [vmem:[#allocation4 + $0x3c0] sm:$0xff]
    %v518 = vld [vmem:[#allocation4 + $0x3c8] sm:$0xff]
    %v519 = vld [vmem:[#allocation4 + $0x3d0] sm:$0xff]
    %v520 = vld [vmem:[#allocation4 + $0x3d8] sm:$0xff]
    %v521 = vld [vmem:[#allocation4 + $0x3e0] sm:$0xff]
    %v522 = vld [vmem:[#allocation4 + $0x3e8] sm:$0xff]
    %v523 = vld [vmem:[#allocation4 + $0x3f0] sm:$0xff]
    %v524 = vld [vmem:[#allocation4 + $0x3f8] sm:$0xff]
    %v525 = vld [vmem:[%s5] sm:$0xf]
    %v527 = vlaneseq
    %v528 = vshrl.u32 %v527, 7
    %v529 = vsub.s32 0, %v528
    %v530 = vrot.slane %v525, %v529
    %v531 = vlaneseq
    %v532 = vshrl.u32 %v531, 7
    %v533 = vsub.s32 1, %v532
    %v534 = vrot.slane %v525, %v533
    %v535 = vlaneseq
    %v536 = vshrl.u32 %v535, 7
    %v537 = vsub.s32 2, %v536
    %v538 = vrot.slane %v525, %v537
    %v539 = vlaneseq
    %v540 = vshrl.u32 %v539, 7
    %v541 = vsub.s32 3, %v540
    %v542 = vrot.slane %v525, %v541
    %547 = vmatprep.subr.mxu0 %v398
    %548 = vmatpush1.msra.mxu0 %v397
    %549 = vmatprep.subr.mxu0 %v402
    %550 = vmatpush1.msra.mxu0 %v401
    %551 = vmatprep.subr.mxu0 %v406
    %552 = vmatpush1.msra.mxu0 %v405
    %553 = vmatprep.subr.mxu0 %v410
    %554 = vmatpush1.msra.mxu0 %v409
    %555 = vmatprep.subr.mxu0 %v414
    %556 = vmatpush1.msra.mxu0 %v413
    %557 = vmatprep.subr.mxu0 %v418
    %558 = vmatpush1.msra.mxu0 %v417
    %559 = vmatprep.subr.mxu0 %v422
    %560 = vmatpush1.msra.mxu0 %v421
    %561 = vmatprep.subr.mxu0 %v426
    %562 = vmatpush1.msra.mxu0 %v425
    %563 = vmatprep.subr.mxu0 %v430
    %564 = vmatpush1.msra.mxu0 %v429
    %565 = vmatprep.subr.mxu0 %v434
    %566 = vmatpush1.msra.mxu0 %v433
    %567 = vmatprep.subr.mxu0 %v438
    %568 = vmatpush1.msra.mxu0 %v437
    %569 = vmatprep.subr.mxu0 %v442
    %570 = vmatpush1.msra.mxu0 %v441
    %571 = vmatprep.subr.mxu0 %v446
    %572 = vmatpush1.msra.mxu0 %v445
    %573 = vmatprep.subr.mxu0 %v450
    %574 = vmatpush1.msra.mxu0 %v449
    %575 = vmatprep.subr.mxu0 %v454
    %576 = vmatpush1.msra.mxu0 %v453
    %577 = vmatprep.subr.mxu0 %v458
    %578 = vmatpush1.msra.mxu0 %v457
    %579 = vmatprep.subr.mxu0 %v462
    %580 = vmatpush1.msra.mxu0 %v461
    %581 = vmatprep.subr.mxu0 %v466
    %582 = vmatpush1.msra.mxu0 %v465
    %583 = vmatprep.subr.mxu0 %v470
    %584 = vmatpush1.msra.mxu0 %v469
    %585 = vmatprep.subr.mxu0 %v474
    %586 = vmatpush1.msra.mxu0 %v473
    %587 = vmatprep.subr.mxu0 %v478
    %588 = vmatpush1.msra.mxu0 %v477
    %589 = vmatprep.subr.mxu0 %v482
    %590 = vmatpush1.msra.mxu0 %v481
    %591 = vmatprep.subr.mxu0 %v486
    %592 = vmatpush1.msra.mxu0 %v485
    %593 = vmatprep.subr.mxu0 %v490
    %594 = vmatpush1.msra.mxu0 %v489
    %595 = vmatprep.subr.mxu0 %v494
    %596 = vmatpush1.msra.mxu0 %v493
    %597 = vmatprep.subr.mxu0 %v498
    %598 = vmatpush1.msra.mxu0 %v497
    %599 = vmatprep.subr.mxu0 %v502
    %600 = vmatpush1.msra.mxu0 %v501
    %601 = vmatprep.subr.mxu0 %v506
    %602 = vmatpush1.msra.mxu0 %v505
    %603 = vmatprep.subr.mxu0 %v510
    %604 = vmatpush1.msra.mxu0 %v509
    %605 = vmatprep.subr.mxu0 %v514
    %606 = vmatpush1.msra.mxu0 %v513
    %607 = vmatprep.subr.mxu0 %v518
    %608 = vmatpush1.msra.mxu0 %v517
    %609 = vmatprep.subr.mxu0 %v522
    %610 = vmatpush1.msra.mxu0 %v521
    %611 = vmatprep.mubr.f32.mxu0 0.0
    %612 = vmatmul.mubr.f32.gmra.mrb[0].mxu0 %v396
    %v613 = vpop.f32.mrb[0].mxu0
    %v614 = vadd.f32 %v530, %v613
    %v615 = vpop.f32.mrb[0].mxu0
    %v616 = vadd.f32 %v534, %v615
    %617 = vdwg.mxu0
    %618 = vmatprep.subr.mxu0 %v400
    %619 = vmatpush1.msra.mxu0 %v399
    %620 = vmatprep.subr.mxu0 %v404
    %621 = vmatpush1.msra.mxu0 %v403
    %622 = vmatprep.subr.mxu0 %v408
    %623 = vmatpush1.msra.mxu0 %v407
    %624 = vmatprep.subr.mxu0 %v412
    %625 = vmatpush1.msra.mxu0 %v411
    %626 = vmatprep.subr.mxu0 %v416
    %627 = vmatpush1.msra.mxu0 %v415
    %628 = vmatprep.subr.mxu0 %v420
    %629 = vmatpush1.msra.mxu0 %v419
    %630 = vmatprep.subr.mxu0 %v424
    %631 = vmatpush1.msra.mxu0 %v423
    %632 = vmatprep.subr.mxu0 %v428
    %633 = vmatpush1.msra.mxu0 %v427
    %634 = vmatprep.subr.mxu0 %v432
    %635 = vmatpush1.msra.mxu0 %v431
    %636 = vmatprep.subr.mxu0 %v436
    %637 = vmatpush1.msra.mxu0 %v435
    %638 = vmatprep.subr.mxu0 %v440
    %639 = vmatpush1.msra.mxu0 %v439
    %640 = vmatprep.subr.mxu0 %v444
    %641 = vmatpush1.msra.mxu0 %v443
    %642 = vmatprep.subr.mxu0 %v448
    %643 = vmatpush1.msra.mxu0 %v447
    %644 = vmatprep.subr.mxu0 %v452
    %645 = vmatpush1.msra.mxu0 %v451
    %646 = vmatprep.subr.mxu0 %v456
    %647 = vmatpush1.msra.mxu0 %v455
    %648 = vmatprep.subr.mxu0 %v460
    %649 = vmatpush1.msra.mxu0 %v459
    %650 = vmatprep.subr.mxu0 %v464
    %651 = vmatpush1.msra.mxu0 %v463
    %652 = vmatprep.subr.mxu0 %v468
    %653 = vmatpush1.msra.mxu0 %v467
    %654 = vmatprep.subr.mxu0 %v472
    %655 = vmatpush1.msra.mxu0 %v471
    %656 = vmatprep.subr.mxu0 %v476
    %657 = vmatpush1.msra.mxu0 %v475
    %658 = vmatprep.subr.mxu0 %v480
    %659 = vmatpush1.msra.mxu0 %v479
    %660 = vmatprep.subr.mxu0 %v484
    %661 = vmatpush1.msra.mxu0 %v483
    %662 = vmatprep.subr.mxu0 %v488
    %663 = vmatpush1.msra.mxu0 %v487
    %664 = vmatprep.subr.mxu0 %v492
    %665 = vmatpush1.msra.mxu0 %v491
    %666 = vmatprep.subr.mxu0 %v496
    %667 = vmatpush1.msra.mxu0 %v495
    %668 = vmatprep.subr.mxu0 %v500
    %669 = vmatpush1.msra.mxu0 %v499
    %670 = vmatprep.subr.mxu0 %v504
    %671 = vmatpush1.msra.mxu0 %v503
    %672 = vmatprep.subr.mxu0 %v508
    %673 = vmatpush1.msra.mxu0 %v507
    %674 = vmatprep.subr.mxu0 %v512
    %675 = vmatpush1.msra.mxu0 %v511
    %676 = vmatprep.subr.mxu0 %v516
    %677 = vmatpush1.msra.mxu0 %v515
    %678 = vmatprep.subr.mxu0 %v520
    %679 = vmatpush1.msra.mxu0 %v519
    %680 = vmatprep.subr.mxu0 %v524
    %681 = vmatpush1.msra.mxu0 %v523
    %682 = vmatprep.mubr.f32.mxu0 0.0
    %683 = vmatmul.mubr.f32.gmra.mrb[0].mxu0 %v396
    %v684 = vpop.f32.mrb[0].mxu0
    %v685 = vadd.f32 %v538, %v684
    %v686 = vpop.f32.mrb[0].mxu0
    %v687 = vadd.f32 %v542, %v686
    %688 = vdwg.mxu0
    %v689 = vxor.u32 %v614, 2147483648
    %v690 = vmul.f32 %v689, 1.442695
    %v691 = vpow.pop %v690
    %v692 = vadd.f32 %v691, 1.0
    %v693 = vrcp.pop %v692
    %v694 = vmul.f32 1.0, %v693
    %v695 = vxor.u32 %v616, 2147483648
    %v696 = vmul.f32 %v695, 1.442695
    %v697 = vpow.pop %v696
    %v698 = vadd.f32 %v697, 1.0
    %v699 = vrcp.pop %v698
    %v700 = vmul.f32 1.0, %v699
    %v701 = vtanh.pop %v685
    %v702 = vxor.u32 %v687, 2147483648
    %v703 = vmul.f32 %v702, 1.442695
    %v704 = vpow.pop %v703
    %v705 = vadd.f32 %v704, 1.0
    %v706 = vrcp.pop %v705
    %v707 = vmul.f32 1.0, %v706
    %v708 = vmul.f32 %v700, 0.0
    %v709 = vmul.f32 %v694, %v701
    %v710 = vadd.f32 %v708, %v709
    %v711 = vtanh.pop %v710
    %v712 = vmul.f32 %v707, %v711
    %vm713 = vcmp.eq.s32.totalorder %v79, 1
    %v714 = vsel %vm713, %v712, 0.0
    %s715 = scalar_lea.vmem %s1, 8
    %v716 = vld [vmem:[%s715] sm:$0xff]
    %717 = vmatprep.subr.mxu0 %v82
    %718 = vmatpush1.msra.mxu0 %v81
    %719 = vmatprep.subr.mxu0 %v86
    %720 = vmatpush1.msra.mxu0 %v85
    %721 = vmatprep.subr.mxu0 %v90
    %722 = vmatpush1.msra.mxu0 %v89
    %723 = vmatprep.subr.mxu0 %v94
    %724 = vmatpush1.msra.mxu0 %v93
    %725 = vmatprep.subr.mxu0 %v98
    %726 = vmatpush1.msra.mxu0 %v97
    %727 = vmatprep.subr.mxu0 %v102
    %728 = vmatpush1.msra.mxu0 %v101
    %729 = vmatprep.subr.mxu0 %v106
    %730 = vmatpush1.msra.mxu0 %v105
    %731 = vmatprep.subr.mxu0 %v110
    %732 = vmatpush1.msra.mxu0 %v109
    %733 = vmatprep.subr.mxu0 %v114
    %734 = vmatpush1.msra.mxu0 %v113
    %735 = vmatprep.subr.mxu0 %v118
    %736 = vmatpush1.msra.mxu0 %v117
    %737 = vmatprep.subr.mxu0 %v122
    %738 = vmatpush1.msra.mxu0 %v121
    %739 = vmatprep.subr.mxu0 %v126
    %740 = vmatpush1.msra.mxu0 %v125
    %741 = vmatprep.subr.mxu0 %v130
    %742 = vmatpush1.msra.mxu0 %v129
    %743 = vmatprep.subr.mxu0 %v134
    %744 = vmatpush1.msra.mxu0 %v133
    %745 = vmatprep.subr.mxu0 %v138
    %746 = vmatpush1.msra.mxu0 %v137
    %747 = vmatprep.subr.mxu0 %v142
    %748 = vmatpush1.msra.mxu0 %v141
    %749 = vmatprep.subr.mxu0 %v146
    %750 = vmatpush1.msra.mxu0 %v145
    %751 = vmatprep.subr.mxu0 %v150
    %752 = vmatpush1.msra.mxu0 %v149
    %753 = vmatprep.subr.mxu0 %v154
    %754 = vmatpush1.msra.mxu0 %v153
    %755 = vmatprep.subr.mxu0 %v158
    %756 = vmatpush1.msra.mxu0 %v157
    %757 = vmatprep.subr.mxu0 %v162
    %758 = vmatpush1.msra.mxu0 %v161
    %759 = vmatprep.subr.mxu0 %v166
    %760 = vmatpush1.msra.mxu0 %v165
    %761 = vmatprep.subr.mxu0 %v170
    %762 = vmatpush1.msra.mxu0 %v169
    %763 = vmatprep.subr.mxu0 %v174
    %764 = vmatpush1.msra.mxu0 %v173
    %765 = vmatprep.subr.mxu0 %v178
    %766 = vmatpush1.msra.mxu0 %v177
    %767 = vmatprep.subr.mxu0 %v182
    %768 = vmatpush1.msra.mxu0 %v181
    %769 = vmatprep.subr.mxu0 %v186
    %770 = vmatpush1.msra.mxu0 %v185
    %771 = vmatprep.subr.mxu0 %v190
    %772 = vmatpush1.msra.mxu0 %v189
    %773 = vmatprep.subr.mxu0 %v194
    %774 = vmatpush1.msra.mxu0 %v193
    %775 = vmatprep.subr.mxu0 %v198
    %776 = vmatpush1.msra.mxu0 %v197
    %777 = vmatprep.subr.mxu0 %v202
    %778 = vmatpush1.msra.mxu0 %v201
    %779 = vmatprep.subr.mxu0 %v206
    %780 = vmatpush1.msra.mxu0 %v205
    %781 = vmatprep.mubr.f32.mxu0 %v396
    %782 = vmatmul.mubr.f32.gmra.mrb[0].mxu0 %v716
    %v783 = vpop.f32.mrb[0].mxu0
    %v784 = vadd.f32 %v214, %v783
    %v785 = vpop.f32.mrb[0].mxu0
    %v786 = vadd.f32 %v218, %v785
    %787 = vdwg.mxu0
    %788 = vmatprep.subr.mxu0 %v84
    %789 = vmatpush1.msra.mxu0 %v83
    %790 = vmatprep.subr.mxu0 %v88
    %791 = vmatpush1.msra.mxu0 %v87
    %792 = vmatprep.subr.mxu0 %v92
    %793 = vmatpush1.msra.mxu0 %v91
    %794 = vmatprep.subr.mxu0 %v96
    %795 = vmatpush1.msra.mxu0 %v95
    %796 = vmatprep.subr.mxu0 %v100
    %797 = vmatpush1.msra.mxu0 %v99
    %798 = vmatprep.subr.mxu0 %v104
    %799 = vmatpush1.msra.mxu0 %v103
    %800 = vmatprep.subr.mxu0 %v108
    %801 = vmatpush1.msra.mxu0 %v107
    %802 = vmatprep.subr.mxu0 %v112
    %803 = vmatpush1.msra.mxu0 %v111
    %804 = vmatprep.subr.mxu0 %v116
    %805 = vmatpush1.msra.mxu0 %v115
    %806 = vmatprep.subr.mxu0 %v120
    %807 = vmatpush1.msra.mxu0 %v119
    %808 = vmatprep.subr.mxu0 %v124
    %809 = vmatpush1.msra.mxu0 %v123
    %810 = vmatprep.subr.mxu0 %v128
    %811 = vmatpush1.msra.mxu0 %v127
    %812 = vmatprep.subr.mxu0 %v132
    %813 = vmatpush1.msra.mxu0 %v131
    %814 = vmatprep.subr.mxu0 %v136
    %815 = vmatpush1.msra.mxu0 %v135
    %816 = vmatprep.subr.mxu0 %v140
    %817 = vmatpush1.msra.mxu0 %v139
    %818 = vmatprep.subr.mxu0 %v144
    %819 = vmatpush1.msra.mxu0 %v143
    %820 = vmatprep.subr.mxu0 %v148
    %821 = vmatpush1.msra.mxu0 %v147
    %822 = vmatprep.subr.mxu0 %v152
    %823 = vmatpush1.msra.mxu0 %v151
    %824 = vmatprep.subr.mxu0 %v156
    %825 = vmatpush1.msra.mxu0 %v155
    %826 = vmatprep.subr.mxu0 %v160
    %827 = vmatpush1.msra.mxu0 %v159
    %828 = vmatprep.subr.mxu0 %v164
    %829 = vmatpush1.msra.mxu0 %v163
    %830 = vmatprep.subr.mxu0 %v168
    %831 = vmatpush1.msra.mxu0 %v167
    %832 = vmatprep.subr.mxu0 %v172
    %833 = vmatpush1.msra.mxu0 %v171
    %834 = vmatprep.subr.mxu0 %v176
    %835 = vmatpush1.msra.mxu0 %v175
    %836 = vmatprep.subr.mxu0 %v180
    %837 = vmatpush1.msra.mxu0 %v179
    %838 = vmatprep.subr.mxu0 %v184
    %839 = vmatpush1.msra.mxu0 %v183
    %840 = vmatprep.subr.mxu0 %v188
    %841 = vmatpush1.msra.mxu0 %v187
    %842 = vmatprep.subr.mxu0 %v192
    %843 = vmatpush1.msra.mxu0 %v191
    %844 = vmatprep.subr.mxu0 %v196
    %845 = vmatpush1.msra.mxu0 %v195
    %846 = vmatprep.subr.mxu0 %v200
    %847 = vmatpush1.msra.mxu0 %v199
    %848 = vmatprep.subr.mxu0 %v204
    %849 = vmatpush1.msra.mxu0 %v203
    %850 = vmatprep.subr.mxu0 %v208
    %851 = vmatpush1.msra.mxu0 %v207
    %852 = vmatprep.mubr.f32.mxu0 %v396
    %853 = vmatmul.mubr.f32.gmra.mrb[0].mxu0 %v716
    %v854 = vpop.f32.mrb[0].mxu0
    %v855 = vadd.f32 %v222, %v854
    %v856 = vpop.f32.mrb[0].mxu0
    %v857 = vadd.f32 %v226, %v856
    %858 = vdwg.mxu0
    %v859 = vxor.u32 %v784, 2147483648
    %v860 = vmul.f32 %v859, 1.442695
    %v861 = vpow.pop %v860
    %v862 = vadd.f32 %v861, 1.0
    %v863 = vrcp.pop %v862
    %v864 = vmul.f32 1.0, %v863
    %v865 = vxor.u32 %v786, 2147483648
    %v866 = vmul.f32 %v865, 1.442695
    %v867 = vpow.pop %v866
    %v868 = vadd.f32 %v867, 1.0
    %v869 = vrcp.pop %v868
    %v870 = vmul.f32 1.0, %v869
    %v871 = vtanh.pop %v855
    %v872 = vxor.u32 %v857, 2147483648
    %v873 = vmul.f32 %v872, 1.442695
    %v874 = vpow.pop %v873
    %v875 = vadd.f32 %v874, 1.0
    %v876 = vrcp.pop %v875
    %v877 = vmul.f32 1.0, %v876
    %v878 = vmul.f32 %v870, %v394
    %v879 = vmul.f32 %v864, %v871
    %v880 = vadd.f32 %v878, %v879
    %v881 = vtanh.pop %v880
    %v882 = vmul.f32 %v877, %v881
    %883 = vmatprep.subr.mxu0 %v398
    %884 = vmatpush1.msra.mxu0 %v397
    %885 = vmatprep.subr.mxu0 %v402
    %886 = vmatpush1.msra.mxu0 %v401
    %887 = vmatprep.subr.mxu0 %v406
    %888 = vmatpush1.msra.mxu0 %v405
    %889 = vmatprep.subr.mxu0 %v410
    %890 = vmatpush1.msra.mxu0 %v409
    %891 = vmatprep.subr.mxu0 %v414
    %892 = vmatpush1.msra.mxu0 %v413
    %893 = vmatprep.subr.mxu0 %v418
    %894 = vmatpush1.msra.mxu0 %v417
    %895 = vmatprep.subr.mxu0 %v422
    %896 = vmatpush1.msra.mxu0 %v421
    %897 = vmatprep.subr.mxu0 %v426
    %898 = vmatpush1.msra.mxu0 %v425
    %899 = vmatprep.subr.mxu0 %v430
    %900 = vmatpush1.msra.mxu0 %v429
    %901 = vmatprep.subr.mxu0 %v434
    %902 = vmatpush1.msra.mxu0 %v433
    %903 = vmatprep.subr.mxu0 %v438
    %904 = vmatpush1.msra.mxu0 %v437
    %905 = vmatprep.subr.mxu0 %v442
    %906 = vmatpush1.msra.mxu0 %v441
    %907 = vmatprep.subr.mxu0 %v446
    %908 = vmatpush1.msra.mxu0 %v445
    %909 = vmatprep.subr.mxu0 %v450
    %910 = vmatpush1.msra.mxu0 %v449
    %911 = vmatprep.subr.mxu0 %v454
    %912 = vmatpush1.msra.mxu0 %v453
    %913 = vmatprep.subr.mxu0 %v458
    %914 = vmatpush1.msra.mxu0 %v457
    %915 = vmatprep.subr.mxu0 %v462
    %916 = vmatpush1.msra.mxu0 %v461
    %917 = vmatprep.subr.mxu0 %v466
    %918 = vmatpush1.msra.mxu0 %v465
    %919 = vmatprep.subr.mxu0 %v470
    %920 = vmatpush1.msra.mxu0 %v469
    %921 = vmatprep.subr.mxu0 %v474
    %922 = vmatpush1.msra.mxu0 %v473
    %923 = vmatprep.subr.mxu0 %v478
    %924 = vmatpush1.msra.mxu0 %v477
    %925 = vmatprep.subr.mxu0 %v482
    %926 = vmatpush1.msra.mxu0 %v481
    %927 = vmatprep.subr.mxu0 %v486
    %928 = vmatpush1.msra.mxu0 %v485
    %929 = vmatprep.subr.mxu0 %v490
    %930 = vmatpush1.msra.mxu0 %v489
    %931 = vmatprep.subr.mxu0 %v494
    %932 = vmatpush1.msra.mxu0 %v493
    %933 = vmatprep.subr.mxu0 %v498
    %934 = vmatpush1.msra.mxu0 %v497
    %935 = vmatprep.subr.mxu0 %v502
    %936 = vmatpush1.msra.mxu0 %v501
    %937 = vmatprep.subr.mxu0 %v506
    %938 = vmatpush1.msra.mxu0 %v505
    %939 = vmatprep.subr.mxu0 %v510
    %940 = vmatpush1.msra.mxu0 %v509
    %941 = vmatprep.subr.mxu0 %v514
    %942 = vmatpush1.msra.mxu0 %v513
    %943 = vmatprep.subr.mxu0 %v518
    %944 = vmatpush1.msra.mxu0 %v517
    %945 = vmatprep.subr.mxu0 %v522
    %946 = vmatpush1.msra.mxu0 %v521
    %947 = vmatprep.mubr.f32.mxu0 %v712
    %948 = vmatmul.mubr.f32.gmra.mrb[0].mxu0 %v882
    %v949 = vpop.f32.mrb[0].mxu0
    %v950 = vadd.f32 %v530, %v949
    %v951 = vpop.f32.mrb[0].mxu0
    %v952 = vadd.f32 %v534, %v951
    %953 = vdwg.mxu0
    %954 = vmatprep.subr.mxu0 %v400
    %955 = vmatpush1.msra.mxu0 %v399
    %956 = vmatprep.subr.mxu0 %v404
    %957 = vmatpush1.msra.mxu0 %v403
    %958 = vmatprep.subr.mxu0 %v408
    %959 = vmatpush1.msra.mxu0 %v407
    %960 = vmatprep.subr.mxu0 %v412
    %961 = vmatpush1.msra.mxu0 %v411
    %962 = vmatprep.subr.mxu0 %v416
    %963 = vmatpush1.msra.mxu0 %v415
    %964 = vmatprep.subr.mxu0 %v420
    %965 = vmatpush1.msra.mxu0 %v419
    %966 = vmatprep.subr.mxu0 %v424
    %967 = vmatpush1.msra.mxu0 %v423
    %968 = vmatprep.subr.mxu0 %v428
    %969 = vmatpush1.msra.mxu0 %v427
    %970 = vmatprep.subr.mxu0 %v432
    %971 = vmatpush1.msra.mxu0 %v431
    %972 = vmatprep.subr.mxu0 %v436
    %973 = vmatpush1.msra.mxu0 %v435
    %974 = vmatprep.subr.mxu0 %v440
    %975 = vmatpush1.msra.mxu0 %v439
    %976 = vmatprep.subr.mxu0 %v444
    %977 = vmatpush1.msra.mxu0 %v443
    %978 = vmatprep.subr.mxu0 %v448
    %979 = vmatpush1.msra.mxu0 %v447
    %980 = vmatprep.subr.mxu0 %v452
    %981 = vmatpush1.msra.mxu0 %v451
    %982 = vmatprep.subr.mxu0 %v456
    %983 = vmatpush1.msra.mxu0 %v455
    %984 = vmatprep.subr.mxu0 %v460
    %985 = vmatpush1.msra.mxu0 %v459
    %986 = vmatprep.subr.mxu0 %v464
    %987 = vmatpush1.msra.mxu0 %v463
    %988 = vmatprep.subr.mxu0 %v468
    %989 = vmatpush1.msra.mxu0 %v467
    %990 = vmatprep.subr.mxu0 %v472
    %991 = vmatpush1.msra.mxu0 %v471
    %992 = vmatprep.subr.mxu0 %v476
    %993 = vmatpush1.msra.mxu0 %v475
    %994 = vmatprep.subr.mxu0 %v480
    %995 = vmatpush1.msra.mxu0 %v479
    %996 = vmatprep.subr.mxu0 %v484
    %997 = vmatpush1.msra.mxu0 %v483
    %998 = vmatprep.subr.mxu0 %v488
    %999 = vmatpush1.msra.mxu0 %v487
    %1000 = vmatprep.subr.mxu0 %v492
    %1001 = vmatpush1.msra.mxu0 %v491
    %1002 = vmatprep.subr.mxu0 %v496
    %1003 = vmatpush1.msra.mxu0 %v495
    %1004 = vmatprep.subr.mxu0 %v500
    %1005 = vmatpush1.msra.mxu0 %v499
    %1006 = vmatprep.subr.mxu0 %v504
    %1007 = vmatpush1.msra.mxu0 %v503
    %1008 = vmatprep.subr.mxu0 %v508
    %1009 = vmatpush1.msra.mxu0 %v507
    %1010 = vmatprep.subr.mxu0 %v512
    %1011 = vmatpush1.msra.mxu0 %v511
    %1012 = vmatprep.subr.mxu0 %v516
    %1013 = vmatpush1.msra.mxu0 %v515
    %1014 = vmatprep.subr.mxu0 %v520
    %1015 = vmatpush1.msra.mxu0 %v519
    %1016 = vmatprep.subr.mxu0 %v524
    %1017 = vmatpush1.msra.mxu0 %v523
    %1018 = vmatprep.mubr.f32.mxu0 %v712
    %1019 = vmatmul.mubr.f32.gmra.mrb[0].mxu0 %v882
    %v1020 = vpop.f32.mrb[0].mxu0
    %v1021 = vadd.f32 %v538, %v1020
    %v1022 = vpop.f32.mrb[0].mxu0
    %v1023 = vadd.f32 %v542, %v1022
    %1024 = vdwg.mxu0
    %v1025 = vxor.u32 %v950, 2147483648
    %v1026 = vmul.f32 %v1025, 1.442695
    %v1027 = vpow.pop %v1026
    %v1028 = vadd.f32 %v1027, 1.0
    %v1029 = vrcp.pop %v1028
    %v1030 = vmul.f32 1.0, %v1029
    %v1031 = vxor.u32 %v952, 2147483648
    %v1032 = vmul.f32 %v1031, 1.442695
    %v1033 = vpow.pop %v1032
    %v1034 = vadd.f32 %v1033, 1.0
    %v1035 = vrcp.pop %v1034
    %v1036 = vmul.f32 1.0, %v1035
    %v1037 = vtanh.pop %v1021
    %v1038 = vxor.u32 %v1023, 2147483648
    %v1039 = vmul.f32 %v1038, 1.442695
    %v1040 = vpow.pop %v1039
    %v1041 = vadd.f32 %v1040, 1.0
    %v1042 = vrcp.pop %v1041
    %v1043 = vmul.f32 1.0, %v1042
    %v1044 = vmul.f32 %v1036, %v710
    %v1045 = vmul.f32 %v1030, %v1037
    %v1046 = vadd.f32 %v1044, %v1045
    %v1047 = vtanh.pop %v1046
    %v1048 = vmul.f32 %v1043, %v1047
    %vm1049 = vcmp.eq.s32.totalorder %v79, 2
    %v1050 = vsel %vm1049, %v1048, %v714
    %s1051 = scalar_lea.vmem %s1, 16
    %v1052 = vld [vmem:[%s1051] sm:$0xff]
    %1053 = vmatprep.subr.mxu0 %v82
    %1054 = vmatpush1.msra.mxu0 %v81
    %1055 = vmatprep.subr.mxu0 %v86
    %1056 = vmatpush1.msra.mxu0 %v85
    %1057 = vmatprep.subr.mxu0 %v90
    %1058 = vmatpush1.msra.mxu0 %v89
    %1059 = vmatprep.subr.mxu0 %v94
    %1060 = vmatpush1.msra.mxu0 %v93
    %1061 = vmatprep.subr.mxu0 %v98
    %1062 = vmatpush1.msra.mxu0 %v97
    %1063 = vmatprep.subr.mxu0 %v102
    %1064 = vmatpush1.msra.mxu0 %v101
    %1065 = vmatprep.subr.mxu0 %v106
    %1066 = vmatpush1.msra.mxu0 %v105
    %1067 = vmatprep.subr.mxu0 %v110
    %1068 = vmatpush1.msra.mxu0 %v109
    %1069 = vmatprep.subr.mxu0 %v114
    %1070 = vmatpush1.msra.mxu0 %v113
    %1071 = vmatprep.subr.mxu0 %v118
    %1072 = vmatpush1.msra.mxu0 %v117
    %1073 = vmatprep.subr.mxu0 %v122
    %1074 = vmatpush1.msra.mxu0 %v121
    %1075 = vmatprep.subr.mxu0 %v126
    %1076 = vmatpush1.msra.mxu0 %v125
    %1077 = vmatprep.subr.mxu0 %v130
    %1078 = vmatpush1.msra.mxu0 %v129
    %1079 = vmatprep.subr.mxu0 %v134
    %1080 = vmatpush1.msra.mxu0 %v133
    %1081 = vmatprep.subr.mxu0 %v138
    %1082 = vmatpush1.msra.mxu0 %v137
    %1083 = vmatprep.subr.mxu0 %v142
    %1084 = vmatpush1.msra.mxu0 %v141
    %1085 = vmatprep.subr.mxu0 %v146
    %1086 = vmatpush1.msra.mxu0 %v145
    %1087 = vmatprep.subr.mxu0 %v150
    %1088 = vmatpush1.msra.mxu0 %v149
    %1089 = vmatprep.subr.mxu0 %v154
    %1090 = vmatpush1.msra.mxu0 %v153
    %1091 = vmatprep.subr.mxu0 %v158
    %1092 = vmatpush1.msra.mxu0 %v157
    %1093 = vmatprep.subr.mxu0 %v162
    %1094 = vmatpush1.msra.mxu0 %v161
    %1095 = vmatprep.subr.mxu0 %v166
    %1096 = vmatpush1.msra.mxu0 %v165
    %1097 = vmatprep.subr.mxu0 %v170
    %1098 = vmatpush1.msra.mxu0 %v169
    %1099 = vmatprep.subr.mxu0 %v174
    %1100 = vmatpush1.msra.mxu0 %v173
    %1101 = vmatprep.subr.mxu0 %v178
    %1102 = vmatpush1.msra.mxu0 %v177
    %1103 = vmatprep.subr.mxu0 %v182
    %1104 = vmatpush1.msra.mxu0 %v181
    %1105 = vmatprep.subr.mxu0 %v186
    %1106 = vmatpush1.msra.mxu0 %v185
    %1107 = vmatprep.subr.mxu0 %v190
    %1108 = vmatpush1.msra.mxu0 %v189
    %1109 = vmatprep.subr.mxu0 %v194
    %1110 = vmatpush1.msra.mxu0 %v193
    %1111 = vmatprep.subr.mxu0 %v198
    %1112 = vmatpush1.msra.mxu0 %v197
    %1113 = vmatprep.subr.mxu0 %v202
    %1114 = vmatpush1.msra.mxu0 %v201
    %1115 = vmatprep.subr.mxu0 %v206
    %1116 = vmatpush1.msra.mxu0 %v205
    %1117 = vmatprep.mubr.f32.mxu0 %v882
    %1118 = vmatmul.mubr.f32.gmra.mrb[0].mxu0 %v1052
    %v1119 = vpop.f32.mrb[0].mxu0
    %v1120 = vadd.f32 %v214, %v1119
    %v1121 = vpop.f32.mrb[0].mxu0
    %v1122 = vadd.f32 %v218, %v1121
    %1123 = vdwg.mxu0
    %1124 = vmatprep.subr.mxu0 %v84
    %1125 = vmatpush1.msra.mxu0 %v83
    %1126 = vmatprep.subr.mxu0 %v88
    %1127 = vmatpush1.msra.mxu0 %v87
    %1128 = vmatprep.subr.mxu0 %v92
    %1129 = vmatpush1.msra.mxu0 %v91
    %1130 = vmatprep.subr.mxu0 %v96
    %1131 = vmatpush1.msra.mxu0 %v95
    %1132 = vmatprep.subr.mxu0 %v100
    %1133 = vmatpush1.msra.mxu0 %v99
    %1134 = vmatprep.subr.mxu0 %v104
    %1135 = vmatpush1.msra.mxu0 %v103
    %1136 = vmatprep.subr.mxu0 %v108
    %1137 = vmatpush1.msra.mxu0 %v107
    %1138 = vmatprep.subr.mxu0 %v112
    %1139 = vmatpush1.msra.mxu0 %v111
    %1140 = vmatprep.subr.mxu0 %v116
    %1141 = vmatpush1.msra.mxu0 %v115
    %1142 = vmatprep.subr.mxu0 %v120
    %1143 = vmatpush1.msra.mxu0 %v119
    %1144 = vmatprep.subr.mxu0 %v124
    %1145 = vmatpush1.msra.mxu0 %v123
    %1146 = vmatprep.subr.mxu0 %v128
    %1147 = vmatpush1.msra.mxu0 %v127
    %1148 = vmatprep.subr.mxu0 %v132
    %1149 = vmatpush1.msra.mxu0 %v131
    %1150 = vmatprep.subr.mxu0 %v136
    %1151 = vmatpush1.msra.mxu0 %v135
    %1152 = vmatprep.subr.mxu0 %v140
    %1153 = vmatpush1.msra.mxu0 %v139
    %1154 = vmatprep.subr.mxu0 %v144
    %1155 = vmatpush1.msra.mxu0 %v143
    %1156 = vmatprep.subr.mxu0 %v148
    %1157 = vmatpush1.msra.mxu0 %v147
    %1158 = vmatprep.subr.mxu0 %v152
    %1159 = vmatpush1.msra.mxu0 %v151
    %1160 = vmatprep.subr.mxu0 %v156
    %1161 = vmatpush1.msra.mxu0 %v155
    %1162 = vmatprep.subr.mxu0 %v160
    %1163 = vmatpush1.msra.mxu0 %v159
    %1164 = vmatprep.subr.mxu0 %v164
    %1165 = vmatpush1.msra.mxu0 %v163
    %1166 = vmatprep.subr.mxu0 %v168
    %1167 = vmatpush1.msra.mxu0 %v167
    %1168 = vmatprep.subr.mxu0 %v172
    %1169 = vmatpush1.msra.mxu0 %v171
    %1170 = vmatprep.subr.mxu0 %v176
    %1171 = vmatpush1.msra.mxu0 %v175
    %1172 = vmatprep.subr.mxu0 %v180
    %1173 = vmatpush1.msra.mxu0 %v179
    %1174 = vmatprep.subr.mxu0 %v184
    %1175 = vmatpush1.msra.mxu0 %v183
    %1176 = vmatprep.subr.mxu0 %v188
    %1177 = vmatpush1.msra.mxu0 %v187
    %1178 = vmatprep.subr.mxu0 %v192
    %1179 = vmatpush1.msra.mxu0 %v191
    %1180 = vmatprep.subr.mxu0 %v196
    %1181 = vmatpush1.msra.mxu0 %v195
    %1182 = vmatprep.subr.mxu0 %v200
    %1183 = vmatpush1.msra.mxu0 %v199
    %1184 = vmatprep.subr.mxu0 %v204
    %1185 = vmatpush1.msra.mxu0 %v203
    %1186 = vmatprep.subr.mxu0 %v208
    %1187 = vmatpush1.msra.mxu0 %v207
    %1188 = vmatprep.mubr.f32.mxu0 %v882
    %1189 = vmatmul.mubr.f32.gmra.mrb[0].mxu0 %v1052
    %v1190 = vpop.f32.mrb[0].mxu0
    %v1191 = vadd.f32 %v222, %v1190
    %v1192 = vpop.f32.mrb[0].mxu0
    %v1193 = vadd.f32 %v226, %v1192
    %1194 = vdwg.mxu0
    %v1195 = vxor.u32 %v1120, 2147483648
    %v1196 = vmul.f32 %v1195, 1.442695
    %v1197 = vpow.pop %v1196
    %v1198 = vadd.f32 %v1197, 1.0
    %v1199 = vrcp.pop %v1198
    %v1200 = vmul.f32 1.0, %v1199
    %v1201 = vxor.u32 %v1122, 2147483648
    %v1202 = vmul.f32 %v1201, 1.442695
    %v1203 = vpow.pop %v1202
    %v1204 = vadd.f32 %v1203, 1.0
    %v1205 = vrcp.pop %v1204
    %v1206 = vmul.f32 1.0, %v1205
    %v1207 = vtanh.pop %v1191
    %v1208 = vxor.u32 %v1193, 2147483648
    %v1209 = vmul.f32 %v1208, 1.442695
    %v1210 = vpow.pop %v1209
    %v1211 = vadd.f32 %v1210, 1.0
    %v1212 = vrcp.pop %v1211
    %v1213 = vmul.f32 1.0, %v1212
    %v1214 = vmul.f32 %v1206, %v880
    %v1215 = vmul.f32 %v1200, %v1207
    %v1216 = vadd.f32 %v1214, %v1215
    %v1217 = vtanh.pop %v1216
    %v1218 = vmul.f32 %v1213, %v1217
    %1219 = vmatprep.subr.mxu0 %v398
    %1220 = vmatpush1.msra.mxu0 %v397
    %1221 = vmatprep.subr.mxu0 %v402
    %1222 = vmatpush1.msra.mxu0 %v401
    %1223 = vmatprep.subr.mxu0 %v406
    %1224 = vmatpush1.msra.mxu0 %v405
    %1225 = vmatprep.subr.mxu0 %v410
    %1226 = vmatpush1.msra.mxu0 %v409
    %1227 = vmatprep.subr.mxu0 %v414
    %1228 = vmatpush1.msra.mxu0 %v413
    %1229 = vmatprep.subr.mxu0 %v418
    %1230 = vmatpush1.msra.mxu0 %v417
    %1231 = vmatprep.subr.mxu0 %v422
    %1232 = vmatpush1.msra.mxu0 %v421
    %1233 = vmatprep.subr.mxu0 %v426
    %1234 = vmatpush1.msra.mxu0 %v425
    %1235 = vmatprep.subr.mxu0 %v430
    %1236 = vmatpush1.msra.mxu0 %v429
    %1237 = vmatprep.subr.mxu0 %v434
    %1238 = vmatpush1.msra.mxu0 %v433
    %1239 = vmatprep.subr.mxu0 %v438
    %1240 = vmatpush1.msra.mxu0 %v437
    %1241 = vmatprep.subr.mxu0 %v442
    %1242 = vmatpush1.msra.mxu0 %v441
    %1243 = vmatprep.subr.mxu0 %v446
    %1244 = vmatpush1.msra.mxu0 %v445
    %1245 = vmatprep.subr.mxu0 %v450
    %1246 = vmatpush1.msra.mxu0 %v449
    %1247 = vmatprep.subr.mxu0 %v454
    %1248 = vmatpush1.msra.mxu0 %v453
    %1249 = vmatprep.subr.mxu0 %v458
    %1250 = vmatpush1.msra.mxu0 %v457
    %1251 = vmatprep.subr.mxu0 %v462
    %1252 = vmatpush1.msra.mxu0 %v461
    %1253 = vmatprep.subr.mxu0 %v466
    %1254 = vmatpush1.msra.mxu0 %v465
    %1255 = vmatprep.subr.mxu0 %v470
    %1256 = vmatpush1.msra.mxu0 %v469
    %1257 = vmatprep.subr.mxu0 %v474
    %1258 = vmatpush1.msra.mxu0 %v473
    %1259 = vmatprep.subr.mxu0 %v478
    %1260 = vmatpush1.msra.mxu0 %v477
    %1261 = vmatprep.subr.mxu0 %v482
    %1262 = vmatpush1.msra.mxu0 %v481
    %1263 = vmatprep.subr.mxu0 %v486
    %1264 = vmatpush1.msra.mxu0 %v485
    %1265 = vmatprep.subr.mxu0 %v490
    %1266 = vmatpush1.msra.mxu0 %v489
    %1267 = vmatprep.subr.mxu0 %v494
    %1268 = vmatpush1.msra.mxu0 %v493
    %1269 = vmatprep.subr.mxu0 %v498
    %1270 = vmatpush1.msra.mxu0 %v497
    %1271 = vmatprep.subr.mxu0 %v502
    %1272 = vmatpush1.msra.mxu0 %v501
    %1273 = vmatprep.subr.mxu0 %v506
    %1274 = vmatpush1.msra.mxu0 %v505
    %1275 = vmatprep.subr.mxu0 %v510
    %1276 = vmatpush1.msra.mxu0 %v509
    %1277 = vmatprep.subr.mxu0 %v514
    %1278 = vmatpush1.msra.mxu0 %v513
    %1279 = vmatprep.subr.mxu0 %v518
    %1280 = vmatpush1.msra.mxu0 %v517
    %1281 = vmatprep.subr.mxu0 %v522
    %1282 = vmatpush1.msra.mxu0 %v521
    %1283 = vmatprep.mubr.f32.mxu0 %v1048
    %1284 = vmatmul.mubr.f32.gmra.mrb[0].mxu0 %v1218
    %v1285 = vpop.f32.mrb[0].mxu0
    %v1286 = vadd.f32 %v530, %v1285
    %v1287 = vpop.f32.mrb[0].mxu0
    %v1288 = vadd.f32 %v534, %v1287
    %1289 = vdwg.mxu0
    %1290 = vmatprep.subr.mxu0 %v400
    %1291 = vmatpush1.msra.mxu0 %v399
    %1292 = vmatprep.subr.mxu0 %v404
    %1293 = vmatpush1.msra.mxu0 %v403
    %1294 = vmatprep.subr.mxu0 %v408
    %1295 = vmatpush1.msra.mxu0 %v407
    %1296 = vmatprep.subr.mxu0 %v412
    %1297 = vmatpush1.msra.mxu0 %v411
    %1298 = vmatprep.subr.mxu0 %v416
    %1299 = vmatpush1.msra.mxu0 %v415
    %1300 = vmatprep.subr.mxu0 %v420
    %1301 = vmatpush1.msra.mxu0 %v419
    %1302 = vmatprep.subr.mxu0 %v424
    %1303 = vmatpush1.msra.mxu0 %v423
    %1304 = vmatprep.subr.mxu0 %v428
    %1305 = vmatpush1.msra.mxu0 %v427
    %1306 = vmatprep.subr.mxu0 %v432
    %1307 = vmatpush1.msra.mxu0 %v431
    %1308 = vmatprep.subr.mxu0 %v436
    %1309 = vmatpush1.msra.mxu0 %v435
    %1310 = vmatprep.subr.mxu0 %v440
    %1311 = vmatpush1.msra.mxu0 %v439
    %1312 = vmatprep.subr.mxu0 %v444
    %1313 = vmatpush1.msra.mxu0 %v443
    %1314 = vmatprep.subr.mxu0 %v448
    %1315 = vmatpush1.msra.mxu0 %v447
    %1316 = vmatprep.subr.mxu0 %v452
    %1317 = vmatpush1.msra.mxu0 %v451
    %1318 = vmatprep.subr.mxu0 %v456
    %1319 = vmatpush1.msra.mxu0 %v455
    %1320 = vmatprep.subr.mxu0 %v460
    %1321 = vmatpush1.msra.mxu0 %v459
    %1322 = vmatprep.subr.mxu0 %v464
    %1323 = vmatpush1.msra.mxu0 %v463
    %1324 = vmatprep.subr.mxu0 %v468
    %1325 = vmatpush1.msra.mxu0 %v467
    %1326 = vmatprep.subr.mxu0 %v472
    %1327 = vmatpush1.msra.mxu0 %v471
    %1328 = vmatprep.subr.mxu0 %v476
    %1329 = vmatpush1.msra.mxu0 %v475
    %1330 = vmatprep.subr.mxu0 %v480
    %1331 = vmatpush1.msra.mxu0 %v479
    %1332 = vmatprep.subr.mxu0 %v484
    %1333 = vmatpush1.msra.mxu0 %v483
    %1334 = vmatprep.subr.mxu0 %v488
    %1335 = vmatpush1.msra.mxu0 %v487
    %1336 = vmatprep.subr.mxu0 %v492
    %1337 = vmatpush1.msra.mxu0 %v491
    %1338 = vmatprep.subr.mxu0 %v496
    %1339 = vmatpush1.msra.mxu0 %v495
    %1340 = vmatprep.subr.mxu0 %v500
    %1341 = vmatpush1.msra.mxu0 %v499
    %1342 = vmatprep.subr.mxu0 %v504
    %1343 = vmatpush1.msra.mxu0 %v503
    %1344 = vmatprep.subr.mxu0 %v508
    %1345 = vmatpush1.msra.mxu0 %v507
    %1346 = vmatprep.subr.mxu0 %v512
    %1347 = vmatpush1.msra.mxu0 %v511
    %1348 = vmatprep.subr.mxu0 %v516
    %1349 = vmatpush1.msra.mxu0 %v515
    %1350 = vmatprep.subr.mxu0 %v520
    %1351 = vmatpush1.msra.mxu0 %v519
    %1352 = vmatprep.subr.mxu0 %v524
    %1353 = vmatpush1.msra.mxu0 %v523
    %1354 = vmatprep.mubr.f32.mxu0 %v1048
    %1355 = vmatmul.mubr.f32.gmra.mrb[0].mxu0 %v1218
    %v1356 = vpop.f32.mrb[0].mxu0
    %v1357 = vadd.f32 %v538, %v1356
    %v1358 = vpop.f32.mrb[0].mxu0
    %v1359 = vadd.f32 %v542, %v1358
    %1360 = vdwg.mxu0
    %v1361 = vxor.u32 %v1286, 2147483648
    %v1362 = vmul.f32 %v1361, 1.442695
    %v1363 = vpow.pop %v1362
    %v1364 = vadd.f32 %v1363, 1.0
    %v1365 = vrcp.pop %v1364
    %v1366 = vmul.f32 1.0, %v1365
    %v1367 = vxor.u32 %v1288, 2147483648
    %v1368 = vmul.f32 %v1367, 1.442695
    %v1369 = vpow.pop %v1368
    %v1370 = vadd.f32 %v1369, 1.0
    %v1371 = vrcp.pop %v1370
    %v1372 = vmul.f32 1.0, %v1371
    %v1373 = vtanh.pop %v1357
    %v1374 = vxor.u32 %v1359, 2147483648
    %v1375 = vmul.f32 %v1374, 1.442695
    %v1376 = vpow.pop %v1375
    %v1377 = vadd.f32 %v1376, 1.0
    %v1378 = vrcp.pop %v1377
    %v1379 = vmul.f32 1.0, %v1378
    %v1380 = vmul.f32 %v1372, %v1046
    %v1381 = vmul.f32 %v1366, %v1373
    %v1382 = vadd.f32 %v1380, %v1381
    %v1383 = vtanh.pop %v1382
    %v1384 = vmul.f32 %v1379, %v1383
    %vm1385 = vcmp.eq.s32.totalorder %v79, 3
    %v1386 = vsel %vm1385, %v1384, %v1050
    %s1387 = scalar_lea.vmem %s1, 24
    %v1388 = vld [vmem:[%s1387] sm:$0xff]
    %1389 = vmatprep.subr.mxu0 %v82
    %1390 = vmatpush1.msra.mxu0 %v81
    %1391 = vmatprep.subr.mxu0 %v86
    %1392 = vmatpush1.msra.mxu0 %v85
    %1393 = vmatprep.subr.mxu0 %v90
    %1394 = vmatpush1.msra.mxu0 %v89
    %1395 = vmatprep.subr.mxu0 %v94
    %1396 = vmatpush1.msra.mxu0 %v93
    %1397 = vmatprep.subr.mxu0 %v98
    %1398 = vmatpush1.msra.mxu0 %v97
    %1399 = vmatprep.subr.mxu0 %v102
    %1400 = vmatpush1.msra.mxu0 %v101
    %1401 = vmatprep.subr.mxu0 %v106
    %1402 = vmatpush1.msra.mxu0 %v105
    %1403 = vmatprep.subr.mxu0 %v110
    %1404 = vmatpush1.msra.mxu0 %v109
    %1405 = vmatprep.subr.mxu0 %v114
    %1406 = vmatpush1.msra.mxu0 %v113
    %1407 = vmatprep.subr.mxu0 %v118
    %1408 = vmatpush1.msra.mxu0 %v117
    %1409 = vmatprep.subr.mxu0 %v122
    %1410 = vmatpush1.msra.mxu0 %v121
    %1411 = vmatprep.subr.mxu0 %v126
    %1412 = vmatpush1.msra.mxu0 %v125
    %1413 = vmatprep.subr.mxu0 %v130
    %1414 = vmatpush1.msra.mxu0 %v129
    %1415 = vmatprep.subr.mxu0 %v134
    %1416 = vmatpush1.msra.mxu0 %v133
    %1417 = vmatprep.subr.mxu0 %v138
    %1418 = vmatpush1.msra.mxu0 %v137
    %1419 = vmatprep.subr.mxu0 %v142
    %1420 = vmatpush1.msra.mxu0 %v141
    %1421 = vmatprep.subr.mxu0 %v146
    %1422 = vmatpush1.msra.mxu0 %v145
    %1423 = vmatprep.subr.mxu0 %v150
    %1424 = vmatpush1.msra.mxu0 %v149
    %1425 = vmatprep.subr.mxu0 %v154
    %1426 = vmatpush1.msra.mxu0 %v153
    %1427 = vmatprep.subr.mxu0 %v158
    %1428 = vmatpush1.msra.mxu0 %v157
    %1429 = vmatprep.subr.mxu0 %v162
    %1430 = vmatpush1.msra.mxu0 %v161
    %1431 = vmatprep.subr.mxu0 %v166
    %1432 = vmatpush1.msra.mxu0 %v165
    %1433 = vmatprep.subr.mxu0 %v170
    %1434 = vmatpush1.msra.mxu0 %v169
    %1435 = vmatprep.subr.mxu0 %v174
    %1436 = vmatpush1.msra.mxu0 %v173
    %1437 = vmatprep.subr.mxu0 %v178
    %1438 = vmatpush1.msra.mxu0 %v177
    %1439 = vmatprep.subr.mxu0 %v182
    %1440 = vmatpush1.msra.mxu0 %v181
    %1441 = vmatprep.subr.mxu0 %v186
    %1442 = vmatpush1.msra.mxu0 %v185
    %1443 = vmatprep.subr.mxu0 %v190
    %1444 = vmatpush1.msra.mxu0 %v189
    %1445 = vmatprep.subr.mxu0 %v194
    %1446 = vmatpush1.msra.mxu0 %v193
    %1447 = vmatprep.subr.mxu0 %v198
    %1448 = vmatpush1.msra.mxu0 %v197
    %1449 = vmatprep.subr.mxu0 %v202
    %1450 = vmatpush1.msra.mxu0 %v201
    %1451 = vmatprep.subr.mxu0 %v206
    %1452 = vmatpush1.msra.mxu0 %v205
    %1453 = vmatprep.mubr.f32.mxu0 %v1218
    %1454 = vmatmul.mubr.f32.gmra.mrb[0].mxu0 %v1388
    %v1455 = vpop.f32.mrb[0].mxu0
    %v1456 = vadd.f32 %v214, %v1455
    %v1457 = vpop.f32.mrb[0].mxu0
    %v1458 = vadd.f32 %v218, %v1457
    %1459 = vdwg.mxu0
    %1460 = vmatprep.subr.mxu0 %v84
    %1461 = vmatpush1.msra.mxu0 %v83
    %1462 = vmatprep.subr.mxu0 %v88
    %1463 = vmatpush1.msra.mxu0 %v87
    %1464 = vmatprep.subr.mxu0 %v92
    %1465 = vmatpush1.msra.mxu0 %v91
    %1466 = vmatprep.subr.mxu0 %v96
    %1467 = vmatpush1.msra.mxu0 %v95
    %1468 = vmatprep.subr.mxu0 %v100
    %1469 = vmatpush1.msra.mxu0 %v99
    %1470 = vmatprep.subr.mxu0 %v104
    %1471 = vmatpush1.msra.mxu0 %v103
    %1472 = vmatprep.subr.mxu0 %v108
    %1473 = vmatpush1.msra.mxu0 %v107
    %1474 = vmatprep.subr.mxu0 %v112
    %1475 = vmatpush1.msra.mxu0 %v111
    %1476 = vmatprep.subr.mxu0 %v116
    %1477 = vmatpush1.msra.mxu0 %v115
    %1478 = vmatprep.subr.mxu0 %v120
    %1479 = vmatpush1.msra.mxu0 %v119
    %1480 = vmatprep.subr.mxu0 %v124
    %1481 = vmatpush1.msra.mxu0 %v123
    %1482 = vmatprep.subr.mxu0 %v128
    %1483 = vmatpush1.msra.mxu0 %v127
    %1484 = vmatprep.subr.mxu0 %v132
    %1485 = vmatpush1.msra.mxu0 %v131
    %1486 = vmatprep.subr.mxu0 %v136
    %1487 = vmatpush1.msra.mxu0 %v135
    %1488 = vmatprep.subr.mxu0 %v140
    %1489 = vmatpush1.msra.mxu0 %v139
    %1490 = vmatprep.subr.mxu0 %v144
    %1491 = vmatpush1.msra.mxu0 %v143
    %1492 = vmatprep.subr.mxu0 %v148
    %1493 = vmatpush1.msra.mxu0 %v147
    %1494 = vmatprep.subr.mxu0 %v152
    %1495 = vmatpush1.msra.mxu0 %v151
    %1496 = vmatprep.subr.mxu0 %v156
    %1497 = vmatpush1.msra.mxu0 %v155
    %1498 = vmatprep.subr.mxu0 %v160
    %1499 = vmatpush1.msra.mxu0 %v159
    %1500 = vmatprep.subr.mxu0 %v164
    %1501 = vmatpush1.msra.mxu0 %v163
    %1502 = vmatprep.subr.mxu0 %v168
    %1503 = vmatpush1.msra.mxu0 %v167
    %1504 = vmatprep.subr.mxu0 %v172
    %1505 = vmatpush1.msra.mxu0 %v171
    %1506 = vmatprep.subr.mxu0 %v176
    %1507 = vmatpush1.msra.mxu0 %v175
    %1508 = vmatprep.subr.mxu0 %v180
    %1509 = vmatpush1.msra.mxu0 %v179
    %1510 = vmatprep.subr.mxu0 %v184
    %1511 = vmatpush1.msra.mxu0 %v183
    %1512 = vmatprep.subr.mxu0 %v188
    %1513 = vmatpush1.msra.mxu0 %v187
    %1514 = vmatprep.subr.mxu0 %v192
    %1515 = vmatpush1.msra.mxu0 %v191
    %1516 = vmatprep.subr.mxu0 %v196
    %1517 = vmatpush1.msra.mxu0 %v195
    %1518 = vmatprep.subr.mxu0 %v200
    %1519 = vmatpush1.msra.mxu0 %v199
    %1520 = vmatprep.subr.mxu0 %v204
    %1521 = vmatpush1.msra.mxu0 %v203
    %1522 = vmatprep.subr.mxu0 %v208
    %1523 = vmatpush1.msra.mxu0 %v207
    %1524 = vmatprep.mubr.f32.mxu0 %v1218
    %1525 = vmatmul.mubr.f32.gmra.mrb[0].mxu0 %v1388
    %v1526 = vpop.f32.mrb[0].mxu0
    %v1527 = vadd.f32 %v222, %v1526
    %v1528 = vpop.f32.mrb[0].mxu0
    %v1529 = vadd.f32 %v226, %v1528
    %1530 = vdwg.mxu0
    %v1531 = vxor.u32 %v1456, 2147483648
    %v1532 = vmul.f32 %v1531, 1.442695
    %v1533 = vpow.pop %v1532
    %v1534 = vadd.f32 %v1533, 1.0
    %v1535 = vrcp.pop %v1534
    %v1536 = vmul.f32 1.0, %v1535
    %v1537 = vxor.u32 %v1458, 2147483648
    %v1538 = vmul.f32 %v1537, 1.442695
    %v1539 = vpow.pop %v1538
    %v1540 = vadd.f32 %v1539, 1.0
    %v1541 = vrcp.pop %v1540
    %v1542 = vmul.f32 1.0, %v1541
    %v1543 = vtanh.pop %v1527
    %v1544 = vxor.u32 %v1529, 2147483648
    %v1545 = vmul.f32 %v1544, 1.442695
    %v1546 = vpow.pop %v1545
    %v1547 = vadd.f32 %v1546, 1.0
    %v1548 = vrcp.pop %v1547
    %v1549 = vmul.f32 1.0, %v1548
    %v1550 = vmul.f32 %v1542, %v1216
    %v1551 = vmul.f32 %v1536, %v1543
    %v1552 = vadd.f32 %v1550, %v1551
    %v1553 = vtanh.pop %v1552
    %v1554 = vmul.f32 %v1549, %v1553
    %1555 = vmatprep.subr.mxu0 %v398
    %1556 = vmatpush1.msra.mxu0 %v397
    %1557 = vmatprep.subr.mxu0 %v402
    %1558 = vmatpush1.msra.mxu0 %v401
    %1559 = vmatprep.subr.mxu0 %v406
    %1560 = vmatpush1.msra.mxu0 %v405
    %1561 = vmatprep.subr.mxu0 %v410
    %1562 = vmatpush1.msra.mxu0 %v409
    %1563 = vmatprep.subr.mxu0 %v414
    %1564 = vmatpush1.msra.mxu0 %v413
    %1565 = vmatprep.subr.mxu0 %v418
    %1566 = vmatpush1.msra.mxu0 %v417
    %1567 = vmatprep.subr.mxu0 %v422
    %1568 = vmatpush1.msra.mxu0 %v421
    %1569 = vmatprep.subr.mxu0 %v426
    %1570 = vmatpush1.msra.mxu0 %v425
    %1571 = vmatprep.subr.mxu0 %v430
    %1572 = vmatpush1.msra.mxu0 %v429
    %1573 = vmatprep.subr.mxu0 %v434
    %1574 = vmatpush1.msra.mxu0 %v433
    %1575 = vmatprep.subr.mxu0 %v438
    %1576 = vmatpush1.msra.mxu0 %v437
    %1577 = vmatprep.subr.mxu0 %v442
    %1578 = vmatpush1.msra.mxu0 %v441
    %1579 = vmatprep.subr.mxu0 %v446
    %1580 = vmatpush1.msra.mxu0 %v445
    %1581 = vmatprep.subr.mxu0 %v450
    %1582 = vmatpush1.msra.mxu0 %v449
    %1583 = vmatprep.subr.mxu0 %v454
    %1584 = vmatpush1.msra.mxu0 %v453
    %1585 = vmatprep.subr.mxu0 %v458
    %1586 = vmatpush1.msra.mxu0 %v457
    %1587 = vmatprep.subr.mxu0 %v462
    %1588 = vmatpush1.msra.mxu0 %v461
    %1589 = vmatprep.subr.mxu0 %v466
    %1590 = vmatpush1.msra.mxu0 %v465
    %1591 = vmatprep.subr.mxu0 %v470
    %1592 = vmatpush1.msra.mxu0 %v469
    %1593 = vmatprep.subr.mxu0 %v474
    %1594 = vmatpush1.msra.mxu0 %v473
    %1595 = vmatprep.subr.mxu0 %v478
    %1596 = vmatpush1.msra.mxu0 %v477
    %1597 = vmatprep.subr.mxu0 %v482
    %1598 = vmatpush1.msra.mxu0 %v481
    %1599 = vmatprep.subr.mxu0 %v486
    %1600 = vmatpush1.msra.mxu0 %v485
    %1601 = vmatprep.subr.mxu0 %v490
    %1602 = vmatpush1.msra.mxu0 %v489
    %1603 = vmatprep.subr.mxu0 %v494
    %1604 = vmatpush1.msra.mxu0 %v493
    %1605 = vmatprep.subr.mxu0 %v498
    %1606 = vmatpush1.msra.mxu0 %v497
    %1607 = vmatprep.subr.mxu0 %v502
    %1608 = vmatpush1.msra.mxu0 %v501
    %1609 = vmatprep.subr.mxu0 %v506
    %1610 = vmatpush1.msra.mxu0 %v505
    %1611 = vmatprep.subr.mxu0 %v510
    %1612 = vmatpush1.msra.mxu0 %v509
    %1613 = vmatprep.subr.mxu0 %v514
    %1614 = vmatpush1.msra.mxu0 %v513
    %1615 = vmatprep.subr.mxu0 %v518
    %1616 = vmatpush1.msra.mxu0 %v517
    %1617 = vmatprep.subr.mxu0 %v522
    %1618 = vmatpush1.msra.mxu0 %v521
    %1619 = vmatprep.mubr.f32.mxu0 %v1384
    %1620 = vmatmul.mubr.f32.gmra.mrb[0].mxu0 %v1554
    %v1621 = vpop.f32.mrb[0].mxu0
    %v1622 = vadd.f32 %v530, %v1621
    %v1623 = vpop.f32.mrb[0].mxu0
    %v1624 = vadd.f32 %v534, %v1623
    %1625 = vdwg.mxu0
    %1626 = vmatprep.subr.mxu0 %v400
    %1627 = vmatpush1.msra.mxu0 %v399
    %1628 = vmatprep.subr.mxu0 %v404
    %1629 = vmatpush1.msra.mxu0 %v403
    %1630 = vmatprep.subr.mxu0 %v408
    %1631 = vmatpush1.msra.mxu0 %v407
    %1632 = vmatprep.subr.mxu0 %v412
    %1633 = vmatpush1.msra.mxu0 %v411
    %1634 = vmatprep.subr.mxu0 %v416
    %1635 = vmatpush1.msra.mxu0 %v415
    %1636 = vmatprep.subr.mxu0 %v420
    %1637 = vmatpush1.msra.mxu0 %v419
    %1638 = vmatprep.subr.mxu0 %v424
    %1639 = vmatpush1.msra.mxu0 %v423
    %1640 = vmatprep.subr.mxu0 %v428
    %1641 = vmatpush1.msra.mxu0 %v427
    %1642 = vmatprep.subr.mxu0 %v432
    %1643 = vmatpush1.msra.mxu0 %v431
    %1644 = vmatprep.subr.mxu0 %v436
    %1645 = vmatpush1.msra.mxu0 %v435
    %1646 = vmatprep.subr.mxu0 %v440
    %1647 = vmatpush1.msra.mxu0 %v439
    %1648 = vmatprep.subr.mxu0 %v444
    %1649 = vmatpush1.msra.mxu0 %v443
    %1650 = vmatprep.subr.mxu0 %v448
    %1651 = vmatpush1.msra.mxu0 %v447
    %1652 = vmatprep.subr.mxu0 %v452
    %1653 = vmatpush1.msra.mxu0 %v451
    %1654 = vmatprep.subr.mxu0 %v456
    %1655 = vmatpush1.msra.mxu0 %v455
    %1656 = vmatprep.subr.mxu0 %v460
    %1657 = vmatpush1.msra.mxu0 %v459
    %1658 = vmatprep.subr.mxu0 %v464
    %1659 = vmatpush1.msra.mxu0 %v463
    %1660 = vmatprep.subr.mxu0 %v468
    %1661 = vmatpush1.msra.mxu0 %v467
    %1662 = vmatprep.subr.mxu0 %v472
    %1663 = vmatpush1.msra.mxu0 %v471
    %1664 = vmatprep.subr.mxu0 %v476
    %1665 = vmatpush1.msra.mxu0 %v475
    %1666 = vmatprep.subr.mxu0 %v480
    %1667 = vmatpush1.msra.mxu0 %v479
    %1668 = vmatprep.subr.mxu0 %v484
    %1669 = vmatpush1.msra.mxu0 %v483
    %1670 = vmatprep.subr.mxu0 %v488
    %1671 = vmatpush1.msra.mxu0 %v487
    %1672 = vmatprep.subr.mxu0 %v492
    %1673 = vmatpush1.msra.mxu0 %v491
    %1674 = vmatprep.subr.mxu0 %v496
    %1675 = vmatpush1.msra.mxu0 %v495
    %1676 = vmatprep.subr.mxu0 %v500
    %1677 = vmatpush1.msra.mxu0 %v499
    %1678 = vmatprep.subr.mxu0 %v504
    %1679 = vmatpush1.msra.mxu0 %v503
    %1680 = vmatprep.subr.mxu0 %v508
    %1681 = vmatpush1.msra.mxu0 %v507
    %1682 = vmatprep.subr.mxu0 %v512
    %1683 = vmatpush1.msra.mxu0 %v511
    %1684 = vmatprep.subr.mxu0 %v516
    %1685 = vmatpush1.msra.mxu0 %v515
    %1686 = vmatprep.subr.mxu0 %v520
    %1687 = vmatpush1.msra.mxu0 %v519
    %1688 = vmatprep.subr.mxu0 %v524
    %1689 = vmatpush1.msra.mxu0 %v523
    %1690 = vmatprep.mubr.f32.mxu0 %v1384
    %1691 = vmatmul.mubr.f32.gmra.mrb[0].mxu0 %v1554
    %v1692 = vpop.f32.mrb[0].mxu0
    %v1693 = vadd.f32 %v538, %v1692
    %v1694 = vpop.f32.mrb[0].mxu0
    %v1695 = vadd.f32 %v542, %v1694
    %1696 = vdwg.mxu0
    %v1697 = vxor.u32 %v1622, 2147483648
    %v1698 = vmul.f32 %v1697, 1.442695
    %v1699 = vpow.pop %v1698
    %v1700 = vadd.f32 %v1699, 1.0
    %v1701 = vrcp.pop %v1700
    %v1702 = vmul.f32 1.0, %v1701
    %v1703 = vxor.u32 %v1624, 2147483648
    %v1704 = vmul.f32 %v1703, 1.442695
    %v1705 = vpow.pop %v1704
    %v1706 = vadd.f32 %v1705, 1.0
    %v1707 = vrcp.pop %v1706
    %v1708 = vmul.f32 1.0, %v1707
    %v1709 = vtanh.pop %v1693
    %v1710 = vxor.u32 %v1695, 2147483648
    %v1711 = vmul.f32 %v1710, 1.442695
    %v1712 = vpow.pop %v1711
    %v1713 = vadd.f32 %v1712, 1.0
    %v1714 = vrcp.pop %v1713
    %v1715 = vmul.f32 1.0, %v1714
    %v1716 = vmul.f32 %v1708, %v1382
    %v1717 = vmul.f32 %v1702, %v1709
    %v1718 = vadd.f32 %v1716, %v1717
    %v1719 = vtanh.pop %v1718
    %v1720 = vmul.f32 %v1715, %v1719
    %vm1721 = vcmp.eq.s32.totalorder %v79, 4
    %v1722 = vsel %vm1721, %v1720, %v1386
    %s1723 = scalar_lea.vmem %s1, 32
    %v1724 = vld [vmem:[%s1723] sm:$0xff]
    %1725 = vmatprep.subr.mxu0 %v82
    %1726 = vmatpush1.msra.mxu0 %v81
    %1727 = vmatprep.subr.mxu0 %v86
    %1728 = vmatpush1.msra.mxu0 %v85
    %1729 = vmatprep.subr.mxu0 %v90
    %1730 = vmatpush1.msra.mxu0 %v89
    %1731 = vmatprep.subr.mxu0 %v94
    %1732 = vmatpush1.msra.mxu0 %v93
    %1733 = vmatprep.subr.mxu0 %v98
    %1734 = vmatpush1.msra.mxu0 %v97
    %1735 = vmatprep.subr.mxu0 %v102
    %1736 = vmatpush1.msra.mxu0 %v101
    %1737 = vmatprep.subr.mxu0 %v106
    %1738 = vmatpush1.msra.mxu0 %v105
    %1739 = vmatprep.subr.mxu0 %v110
    %1740 = vmatpush1.msra.mxu0 %v109
    %1741 = vmatprep.subr.mxu0 %v114
    %1742 = vmatpush1.msra.mxu0 %v113
    %1743 = vmatprep.subr.mxu0 %v118
    %1744 = vmatpush1.msra.mxu0 %v117
    %1745 = vmatprep.subr.mxu0 %v122
    %1746 = vmatpush1.msra.mxu0 %v121
    %1747 = vmatprep.subr.mxu0 %v126
    %1748 = vmatpush1.msra.mxu0 %v125
    %1749 = vmatprep.subr.mxu0 %v130
    %1750 = vmatpush1.msra.mxu0 %v129
    %1751 = vmatprep.subr.mxu0 %v134
    %1752 = vmatpush1.msra.mxu0 %v133
    %1753 = vmatprep.subr.mxu0 %v138
    %1754 = vmatpush1.msra.mxu0 %v137
    %1755 = vmatprep.subr.mxu0 %v142
    %1756 = vmatpush1.msra.mxu0 %v141
    %1757 = vmatprep.subr.mxu0 %v146
    %1758 = vmatpush1.msra.mxu0 %v145
    %1759 = vmatprep.subr.mxu0 %v150
    %1760 = vmatpush1.msra.mxu0 %v149
    %1761 = vmatprep.subr.mxu0 %v154
    %1762 = vmatpush1.msra.mxu0 %v153
    %1763 = vmatprep.subr.mxu0 %v158
    %1764 = vmatpush1.msra.mxu0 %v157
    %1765 = vmatprep.subr.mxu0 %v162
    %1766 = vmatpush1.msra.mxu0 %v161
    %1767 = vmatprep.subr.mxu0 %v166
    %1768 = vmatpush1.msra.mxu0 %v165
    %1769 = vmatprep.subr.mxu0 %v170
    %1770 = vmatpush1.msra.mxu0 %v169
    %1771 = vmatprep.subr.mxu0 %v174
    %1772 = vmatpush1.msra.mxu0 %v173
    %1773 = vmatprep.subr.mxu0 %v178
    %1774 = vmatpush1.msra.mxu0 %v177
    %1775 = vmatprep.subr.mxu0 %v182
    %1776 = vmatpush1.msra.mxu0 %v181
    %1777 = vmatprep.subr.mxu0 %v186
    %1778 = vmatpush1.msra.mxu0 %v185
    %1779 = vmatprep.subr.mxu0 %v190
    %1780 = vmatpush1.msra.mxu0 %v189
    %1781 = vmatprep.subr.mxu0 %v194
    %1782 = vmatpush1.msra.mxu0 %v193
    %1783 = vmatprep.subr.mxu0 %v198
    %1784 = vmatpush1.msra.mxu0 %v197
    %1785 = vmatprep.subr.mxu0 %v202
    %1786 = vmatpush1.msra.mxu0 %v201
    %1787 = vmatprep.subr.mxu0 %v206
    %1788 = vmatpush1.msra.mxu0 %v205
    %1789 = vmatprep.mubr.f32.mxu0 %v1554
    %1790 = vmatmul.mubr.f32.gmra.mrb[0].mxu0 %v1724
    %v1791 = vpop.f32.mrb[0].mxu0
    %v1792 = vadd.f32 %v214, %v1791
    %v1793 = vpop.f32.mrb[0].mxu0
    %v1794 = vadd.f32 %v218, %v1793
    %1795 = vdwg.mxu0
    %1796 = vmatprep.subr.mxu0 %v84
    %1797 = vmatpush1.msra.mxu0 %v83
    %1798 = vmatprep.subr.mxu0 %v88
    %1799 = vmatpush1.msra.mxu0 %v87
    %1800 = vmatprep.subr.mxu0 %v92
    %1801 = vmatpush1.msra.mxu0 %v91
    %1802 = vmatprep.subr.mxu0 %v96
    %1803 = vmatpush1.msra.mxu0 %v95
    %1804 = vmatprep.subr.mxu0 %v100
    %1805 = vmatpush1.msra.mxu0 %v99
    %1806 = vmatprep.subr.mxu0 %v104
    %1807 = vmatpush1.msra.mxu0 %v103
    %1808 = vmatprep.subr.mxu0 %v108
    %1809 = vmatpush1.msra.mxu0 %v107
    %1810 = vmatprep.subr.mxu0 %v112
    %1811 = vmatpush1.msra.mxu0 %v111
    %1812 = vmatprep.subr.mxu0 %v116
    %1813 = vmatpush1.msra.mxu0 %v115
    %1814 = vmatprep.subr.mxu0 %v120
    %1815 = vmatpush1.msra.mxu0 %v119
    %1816 = vmatprep.subr.mxu0 %v124
    %1817 = vmatpush1.msra.mxu0 %v123
    %1818 = vmatprep.subr.mxu0 %v128
    %1819 = vmatpush1.msra.mxu0 %v127
    %1820 = vmatprep.subr.mxu0 %v132
    %1821 = vmatpush1.msra.mxu0 %v131
    %1822 = vmatprep.subr.mxu0 %v136
    %1823 = vmatpush1.msra.mxu0 %v135
    %1824 = vmatprep.subr.mxu0 %v140
    %1825 = vmatpush1.msra.mxu0 %v139
    %1826 = vmatprep.subr.mxu0 %v144
    %1827 = vmatpush1.msra.mxu0 %v143
    %1828 = vmatprep.subr.mxu0 %v148
    %1829 = vmatpush1.msra.mxu0 %v147
    %1830 = vmatprep.subr.mxu0 %v152
    %1831 = vmatpush1.msra.mxu0 %v151
    %1832 = vmatprep.subr.mxu0 %v156
    %1833 = vmatpush1.msra.mxu0 %v155
    %1834 = vmatprep.subr.mxu0 %v160
    %1835 = vmatpush1.msra.mxu0 %v159
    %1836 = vmatprep.subr.mxu0 %v164
    %1837 = vmatpush1.msra.mxu0 %v163
    %1838 = vmatprep.subr.mxu0 %v168
    %1839 = vmatpush1.msra.mxu0 %v167
    %1840 = vmatprep.subr.mxu0 %v172
    %1841 = vmatpush1.msra.mxu0 %v171
    %1842 = vmatprep.subr.mxu0 %v176
    %1843 = vmatpush1.msra.mxu0 %v175
    %1844 = vmatprep.subr.mxu0 %v180
    %1845 = vmatpush1.msra.mxu0 %v179
    %1846 = vmatprep.subr.mxu0 %v184
    %1847 = vmatpush1.msra.mxu0 %v183
    %1848 = vmatprep.subr.mxu0 %v188
    %1849 = vmatpush1.msra.mxu0 %v187
    %1850 = vmatprep.subr.mxu0 %v192
    %1851 = vmatpush1.msra.mxu0 %v191
    %1852 = vmatprep.subr.mxu0 %v196
    %1853 = vmatpush1.msra.mxu0 %v195
    %1854 = vmatprep.subr.mxu0 %v200
    %1855 = vmatpush1.msra.mxu0 %v199
    %1856 = vmatprep.subr.mxu0 %v204
    %1857 = vmatpush1.msra.mxu0 %v203
    %1858 = vmatprep.subr.mxu0 %v208
    %1859 = vmatpush1.msra.mxu0 %v207
    %1860 = vmatprep.mubr.f32.mxu0 %v1554
    %1861 = vmatmul.mubr.f32.gmra.mrb[0].mxu0 %v1724
    %v1862 = vpop.f32.mrb[0].mxu0
    %v1863 = vadd.f32 %v222, %v1862
    %v1864 = vpop.f32.mrb[0].mxu0
    %v1865 = vadd.f32 %v226, %v1864
    %1866 = vdwg.mxu0
    %v1867 = vxor.u32 %v1792, 2147483648
    %v1868 = vmul.f32 %v1867, 1.442695
    %v1869 = vpow.pop %v1868
    %v1870 = vadd.f32 %v1869, 1.0
    %v1871 = vrcp.pop %v1870
    %v1872 = vmul.f32 1.0, %v1871
    %v1873 = vxor.u32 %v1794, 2147483648
    %v1874 = vmul.f32 %v1873, 1.442695
    %v1875 = vpow.pop %v1874
    %v1876 = vadd.f32 %v1875, 1.0
    %v1877 = vrcp.pop %v1876
    %v1878 = vmul.f32 1.0, %v1877
    %v1879 = vtanh.pop %v1863
    %v1880 = vxor.u32 %v1865, 2147483648
    %v1881 = vmul.f32 %v1880, 1.442695
    %v1882 = vpow.pop %v1881
    %v1883 = vadd.f32 %v1882, 1.0
    %v1884 = vrcp.pop %v1883
    %v1885 = vmul.f32 1.0, %v1884
    %v1886 = vmul.f32 %v1878, %v1552
    %v1887 = vmul.f32 %v1872, %v1879
    %v1888 = vadd.f32 %v1886, %v1887
    %v1889 = vtanh.pop %v1888
    %v1890 = vmul.f32 %v1885, %v1889
    %1891 = vmatprep.subr.mxu0 %v398
    %1892 = vmatpush1.msra.mxu0 %v397
    %1893 = vmatprep.subr.mxu0 %v402
    %1894 = vmatpush1.msra.mxu0 %v401
    %1895 = vmatprep.subr.mxu0 %v406
    %1896 = vmatpush1.msra.mxu0 %v405
    %1897 = vmatprep.subr.mxu0 %v410
    %1898 = vmatpush1.msra.mxu0 %v409
    %1899 = vmatprep.subr.mxu0 %v414
    %1900 = vmatpush1.msra.mxu0 %v413
    %1901 = vmatprep.subr.mxu0 %v418
    %1902 = vmatpush1.msra.mxu0 %v417
    %1903 = vmatprep.subr.mxu0 %v422
    %1904 = vmatpush1.msra.mxu0 %v421
    %1905 = vmatprep.subr.mxu0 %v426
    %1906 = vmatpush1.msra.mxu0 %v425
    %1907 = vmatprep.subr.mxu0 %v430
    %1908 = vmatpush1.msra.mxu0 %v429
    %1909 = vmatprep.subr.mxu0 %v434
    %1910 = vmatpush1.msra.mxu0 %v433
    %1911 = vmatprep.subr.mxu0 %v438
    %1912 = vmatpush1.msra.mxu0 %v437
    %1913 = vmatprep.subr.mxu0 %v442
    %1914 = vmatpush1.msra.mxu0 %v441
    %1915 = vmatprep.subr.mxu0 %v446
    %1916 = vmatpush1.msra.mxu0 %v445
    %1917 = vmatprep.subr.mxu0 %v450
    %1918 = vmatpush1.msra.mxu0 %v449
    %1919 = vmatprep.subr.mxu0 %v454
    %1920 = vmatpush1.msra.mxu0 %v453
    %1921 = vmatprep.subr.mxu0 %v458
    %1922 = vmatpush1.msra.mxu0 %v457
    %1923 = vmatprep.subr.mxu0 %v462
    %1924 = vmatpush1.msra.mxu0 %v461
    %1925 = vmatprep.subr.mxu0 %v466
    %1926 = vmatpush1.msra.mxu0 %v465
    %1927 = vmatprep.subr.mxu0 %v470
    %1928 = vmatpush1.msra.mxu0 %v469
    %1929 = vmatprep.subr.mxu0 %v474
    %1930 = vmatpush1.msra.mxu0 %v473
    %1931 = vmatprep.subr.mxu0 %v478
    %1932 = vmatpush1.msra.mxu0 %v477
    %1933 = vmatprep.subr.mxu0 %v482
    %1934 = vmatpush1.msra.mxu0 %v481
    %1935 = vmatprep.subr.mxu0 %v486
    %1936 = vmatpush1.msra.mxu0 %v485
    %1937 = vmatprep.subr.mxu0 %v490
    %1938 = vmatpush1.msra.mxu0 %v489
    %1939 = vmatprep.subr.mxu0 %v494
    %1940 = vmatpush1.msra.mxu0 %v493
    %1941 = vmatprep.subr.mxu0 %v498
    %1942 = vmatpush1.msra.mxu0 %v497
    %1943 = vmatprep.subr.mxu0 %v502
    %1944 = vmatpush1.msra.mxu0 %v501
    %1945 = vmatprep.subr.mxu0 %v506
    %1946 = vmatpush1.msra.mxu0 %v505
    %1947 = vmatprep.subr.mxu0 %v510
    %1948 = vmatpush1.msra.mxu0 %v509
    %1949 = vmatprep.subr.mxu0 %v514
    %1950 = vmatpush1.msra.mxu0 %v513
    %1951 = vmatprep.subr.mxu0 %v518
    %1952 = vmatpush1.msra.mxu0 %v517
    %1953 = vmatprep.subr.mxu0 %v522
    %1954 = vmatpush1.msra.mxu0 %v521
    %1955 = vmatprep.mubr.f32.mxu0 %v1720
    %1956 = vmatmul.mubr.f32.gmra.mrb[0].mxu0 %v1890
    %v1957 = vpop.f32.mrb[0].mxu0
    %v1958 = vadd.f32 %v530, %v1957
    %v1959 = vpop.f32.mrb[0].mxu0
    %v1960 = vadd.f32 %v534, %v1959
    %1961 = vdwg.mxu0
    %1962 = vmatprep.subr.mxu0 %v400
    %1963 = vmatpush1.msra.mxu0 %v399
    %1964 = vmatprep.subr.mxu0 %v404
    %1965 = vmatpush1.msra.mxu0 %v403
    %1966 = vmatprep.subr.mxu0 %v408
    %1967 = vmatpush1.msra.mxu0 %v407
    %1968 = vmatprep.subr.mxu0 %v412
    %1969 = vmatpush1.msra.mxu0 %v411
    %1970 = vmatprep.subr.mxu0 %v416
    %1971 = vmatpush1.msra.mxu0 %v415
    %1972 = vmatprep.subr.mxu0 %v420
    %1973 = vmatpush1.msra.mxu0 %v419
    %1974 = vmatprep.subr.mxu0 %v424
    %1975 = vmatpush1.msra.mxu0 %v423
    %1976 = vmatprep.subr.mxu0 %v428
    %1977 = vmatpush1.msra.mxu0 %v427
    %1978 = vmatprep.subr.mxu0 %v432
    %1979 = vmatpush1.msra.mxu0 %v431
    %1980 = vmatprep.subr.mxu0 %v436
    %1981 = vmatpush1.msra.mxu0 %v435
    %1982 = vmatprep.subr.mxu0 %v440
    %1983 = vmatpush1.msra.mxu0 %v439
    %1984 = vmatprep.subr.mxu0 %v444
    %1985 = vmatpush1.msra.mxu0 %v443
    %1986 = vmatprep.subr.mxu0 %v448
    %1987 = vmatpush1.msra.mxu0 %v447
    %1988 = vmatprep.subr.mxu0 %v452
    %1989 = vmatpush1.msra.mxu0 %v451
    %1990 = vmatprep.subr.mxu0 %v456
    %1991 = vmatpush1.msra.mxu0 %v455
    %1992 = vmatprep.subr.mxu0 %v460
    %1993 = vmatpush1.msra.mxu0 %v459
    %1994 = vmatprep.subr.mxu0 %v464
    %1995 = vmatpush1.msra.mxu0 %v463
    %1996 = vmatprep.subr.mxu0 %v468
    %1997 = vmatpush1.msra.mxu0 %v467
    %1998 = vmatprep.subr.mxu0 %v472
    %1999 = vmatpush1.msra.mxu0 %v471
    %2000 = vmatprep.subr.mxu0 %v476
    %2001 = vmatpush1.msra.mxu0 %v475
    %2002 = vmatprep.subr.mxu0 %v480
    %2003 = vmatpush1.msra.mxu0 %v479
    %2004 = vmatprep.subr.mxu0 %v484
    %2005 = vmatpush1.msra.mxu0 %v483
    %2006 = vmatprep.subr.mxu0 %v488
    %2007 = vmatpush1.msra.mxu0 %v487
    %2008 = vmatprep.subr.mxu0 %v492
    %2009 = vmatpush1.msra.mxu0 %v491
    %2010 = vmatprep.subr.mxu0 %v496
    %2011 = vmatpush1.msra.mxu0 %v495
    %2012 = vmatprep.subr.mxu0 %v500
    %2013 = vmatpush1.msra.mxu0 %v499
    %2014 = vmatprep.subr.mxu0 %v504
    %2015 = vmatpush1.msra.mxu0 %v503
    %2016 = vmatprep.subr.mxu0 %v508
    %2017 = vmatpush1.msra.mxu0 %v507
    %2018 = vmatprep.subr.mxu0 %v512
    %2019 = vmatpush1.msra.mxu0 %v511
    %2020 = vmatprep.subr.mxu0 %v516
    %2021 = vmatpush1.msra.mxu0 %v515
    %2022 = vmatprep.subr.mxu0 %v520
    %2023 = vmatpush1.msra.mxu0 %v519
    %2024 = vmatprep.subr.mxu0 %v524
    %2025 = vmatpush1.msra.mxu0 %v523
    %2026 = vmatprep.mubr.f32.mxu0 %v1720
    %2027 = vmatmul.mubr.f32.gmra.mrb[0].mxu0 %v1890
    %v2028 = vpop.f32.mrb[0].mxu0
    %v2029 = vadd.f32 %v538, %v2028
    %v2030 = vpop.f32.mrb[0].mxu0
    %v2031 = vadd.f32 %v542, %v2030
    %2032 = vdwg.mxu0
    %v2033 = vxor.u32 %v1958, 2147483648
    %v2034 = vmul.f32 %v2033, 1.442695
    %v2035 = vpow.pop %v2034
    %v2036 = vadd.f32 %v2035, 1.0
    %v2037 = vrcp.pop %v2036
    %v2038 = vmul.f32 1.0, %v2037
    %v2039 = vxor.u32 %v1960, 2147483648
    %v2040 = vmul.f32 %v2039, 1.442695
    %v2041 = vpow.pop %v2040
    %v2042 = vadd.f32 %v2041, 1.0
    %v2043 = vrcp.pop %v2042
    %v2044 = vmul.f32 1.0, %v2043
    %v2045 = vtanh.pop %v2029
    %v2046 = vxor.u32 %v2031, 2147483648
    %v2047 = vmul.f32 %v2046, 1.442695
    %v2048 = vpow.pop %v2047
    %v2049 = vadd.f32 %v2048, 1.0
    %v2050 = vrcp.pop %v2049
    %v2051 = vmul.f32 1.0, %v2050
    %v2052 = vmul.f32 %v2044, %v1718
    %v2053 = vmul.f32 %v2038, %v2045
    %v2054 = vadd.f32 %v2052, %v2053
    %v2055 = vtanh.pop %v2054
    %v2056 = vmul.f32 %v2051, %v2055
    %vm2057 = vcmp.eq.s32.totalorder %v79, 5
    %v2058 = vsel %vm2057, %v2056, %v1722
    %s2059 = scalar_lea.vmem %s1, 40
    %v2060 = vld [vmem:[%s2059] sm:$0xff]
    %2061 = vmatprep.subr.mxu0 %v82
    %2062 = vmatpush1.msra.mxu0 %v81
    %2063 = vmatprep.subr.mxu0 %v86
    %2064 = vmatpush1.msra.mxu0 %v85
    %2065 = vmatprep.subr.mxu0 %v90
    %2066 = vmatpush1.msra.mxu0 %v89
    %2067 = vmatprep.subr.mxu0 %v94
    %2068 = vmatpush1.msra.mxu0 %v93
    %2069 = vmatprep.subr.mxu0 %v98
    %2070 = vmatpush1.msra.mxu0 %v97
    %2071 = vmatprep.subr.mxu0 %v102
    %2072 = vmatpush1.msra.mxu0 %v101
    %2073 = vmatprep.subr.mxu0 %v106
    %2074 = vmatpush1.msra.mxu0 %v105
    %2075 = vmatprep.subr.mxu0 %v110
    %2076 = vmatpush1.msra.mxu0 %v109
    %2077 = vmatprep.subr.mxu0 %v114
    %2078 = vmatpush1.msra.mxu0 %v113
    %2079 = vmatprep.subr.mxu0 %v118
    %2080 = vmatpush1.msra.mxu0 %v117
    %2081 = vmatprep.subr.mxu0 %v122
    %2082 = vmatpush1.msra.mxu0 %v121
    %2083 = vmatprep.subr.mxu0 %v126
    %2084 = vmatpush1.msra.mxu0 %v125
    %2085 = vmatprep.subr.mxu0 %v130
    %2086 = vmatpush1.msra.mxu0 %v129
    %2087 = vmatprep.subr.mxu0 %v134
    %2088 = vmatpush1.msra.mxu0 %v133
    %2089 = vmatprep.subr.mxu0 %v138
    %2090 = vmatpush1.msra.mxu0 %v137
    %2091 = vmatprep.subr.mxu0 %v142
    %2092 = vmatpush1.msra.mxu0 %v141
    %2093 = vmatprep.subr.mxu0 %v146
    %2094 = vmatpush1.msra.mxu0 %v145
    %2095 = vmatprep.subr.mxu0 %v150
    %2096 = vmatpush1.msra.mxu0 %v149
    %2097 = vmatprep.subr.mxu0 %v154
    %2098 = vmatpush1.msra.mxu0 %v153
    %2099 = vmatprep.subr.mxu0 %v158
    %2100 = vmatpush1.msra.mxu0 %v157
    %2101 = vmatprep.subr.mxu0 %v162
    %2102 = vmatpush1.msra.mxu0 %v161
    %2103 = vmatprep.subr.mxu0 %v166
    %2104 = vmatpush1.msra.mxu0 %v165
    %2105 = vmatprep.subr.mxu0 %v170
    %2106 = vmatpush1.msra.mxu0 %v169
    %2107 = vmatprep.subr.mxu0 %v174
    %2108 = vmatpush1.msra.mxu0 %v173
    %2109 = vmatprep.subr.mxu0 %v178
    %2110 = vmatpush1.msra.mxu0 %v177
    %2111 = vmatprep.subr.mxu0 %v182
    %2112 = vmatpush1.msra.mxu0 %v181
    %2113 = vmatprep.subr.mxu0 %v186
    %2114 = vmatpush1.msra.mxu0 %v185
    %2115 = vmatprep.subr.mxu0 %v190
    %2116 = vmatpush1.msra.mxu0 %v189
    %2117 = vmatprep.subr.mxu0 %v194
    %2118 = vmatpush1.msra.mxu0 %v193
    %2119 = vmatprep.subr.mxu0 %v198
    %2120 = vmatpush1.msra.mxu0 %v197
    %2121 = vmatprep.subr.mxu0 %v202
    %2122 = vmatpush1.msra.mxu0 %v201
    %2123 = vmatprep.subr.mxu0 %v206
    %2124 = vmatpush1.msra.mxu0 %v205
    %2125 = vmatprep.mubr.f32.mxu0 %v1890
    %2126 = vmatmul.mubr.f32.gmra.mrb[0].mxu0 %v2060
    %v2127 = vpop.f32.mrb[0].mxu0
    %v2128 = vadd.f32 %v214, %v2127
    %v2129 = vpop.f32.mrb[0].mxu0
    %v2130 = vadd.f32 %v218, %v2129
    %2131 = vdwg.mxu0
    %2132 = vmatprep.subr.mxu0 %v84
    %2133 = vmatpush1.msra.mxu0 %v83
    %2134 = vmatprep.subr.mxu0 %v88
    %2135 = vmatpush1.msra.mxu0 %v87
    %2136 = vmatprep.subr.mxu0 %v92
    %2137 = vmatpush1.msra.mxu0 %v91
    %2138 = vmatprep.subr.mxu0 %v96
    %2139 = vmatpush1.msra.mxu0 %v95
    %2140 = vmatprep.subr.mxu0 %v100
    %2141 = vmatpush1.msra.mxu0 %v99
    %2142 = vmatprep.subr.mxu0 %v104
    %2143 = vmatpush1.msra.mxu0 %v103
    %2144 = vmatprep.subr.mxu0 %v108
    %2145 = vmatpush1.msra.mxu0 %v107
    %2146 = vmatprep.subr.mxu0 %v112
    %2147 = vmatpush1.msra.mxu0 %v111
    %2148 = vmatprep.subr.mxu0 %v116
    %2149 = vmatpush1.msra.mxu0 %v115
    %2150 = vmatprep.subr.mxu0 %v120
    %2151 = vmatpush1.msra.mxu0 %v119
    %2152 = vmatprep.subr.mxu0 %v124
    %2153 = vmatpush1.msra.mxu0 %v123
    %2154 = vmatprep.subr.mxu0 %v128
    %2155 = vmatpush1.msra.mxu0 %v127
    %2156 = vmatprep.subr.mxu0 %v132
    %2157 = vmatpush1.msra.mxu0 %v131
    %2158 = vmatprep.subr.mxu0 %v136
    %2159 = vmatpush1.msra.mxu0 %v135
    %2160 = vmatprep.subr.mxu0 %v140
    %2161 = vmatpush1.msra.mxu0 %v139
    %2162 = vmatprep.subr.mxu0 %v144
    %2163 = vmatpush1.msra.mxu0 %v143
    %2164 = vmatprep.subr.mxu0 %v148
    %2165 = vmatpush1.msra.mxu0 %v147
    %2166 = vmatprep.subr.mxu0 %v152
    %2167 = vmatpush1.msra.mxu0 %v151
    %2168 = vmatprep.subr.mxu0 %v156
    %2169 = vmatpush1.msra.mxu0 %v155
    %2170 = vmatprep.subr.mxu0 %v160
    %2171 = vmatpush1.msra.mxu0 %v159
    %2172 = vmatprep.subr.mxu0 %v164
    %2173 = vmatpush1.msra.mxu0 %v163
    %2174 = vmatprep.subr.mxu0 %v168
    %2175 = vmatpush1.msra.mxu0 %v167
    %2176 = vmatprep.subr.mxu0 %v172
    %2177 = vmatpush1.msra.mxu0 %v171
    %2178 = vmatprep.subr.mxu0 %v176
    %2179 = vmatpush1.msra.mxu0 %v175
    %2180 = vmatprep.subr.mxu0 %v180
    %2181 = vmatpush1.msra.mxu0 %v179
    %2182 = vmatprep.subr.mxu0 %v184
    %2183 = vmatpush1.msra.mxu0 %v183
    %2184 = vmatprep.subr.mxu0 %v188
    %2185 = vmatpush1.msra.mxu0 %v187
    %2186 = vmatprep.subr.mxu0 %v192
    %2187 = vmatpush1.msra.mxu0 %v191
    %2188 = vmatprep.subr.mxu0 %v196
    %2189 = vmatpush1.msra.mxu0 %v195
    %2190 = vmatprep.subr.mxu0 %v200
    %2191 = vmatpush1.msra.mxu0 %v199
    %2192 = vmatprep.subr.mxu0 %v204
    %2193 = vmatpush1.msra.mxu0 %v203
    %2194 = vmatprep.subr.mxu0 %v208
    %2195 = vmatpush1.msra.mxu0 %v207
    %2196 = vmatprep.mubr.f32.mxu0 %v1890
    %2197 = vmatmul.mubr.f32.gmra.mrb[0].mxu0 %v2060
    %v2198 = vpop.f32.mrb[0].mxu0
    %v2199 = vadd.f32 %v222, %v2198
    %v2200 = vpop.f32.mrb[0].mxu0
    %v2201 = vadd.f32 %v226, %v2200
    %2202 = vdwg.mxu0
    %v2203 = vxor.u32 %v2128, 2147483648
    %v2204 = vmul.f32 %v2203, 1.442695
    %v2205 = vpow.pop %v2204
    %v2206 = vadd.f32 %v2205, 1.0
    %v2207 = vrcp.pop %v2206
    %v2208 = vmul.f32 1.0, %v2207
    %v2209 = vxor.u32 %v2130, 2147483648
    %v2210 = vmul.f32 %v2209, 1.442695
    %v2211 = vpow.pop %v2210
    %v2212 = vadd.f32 %v2211, 1.0
    %v2213 = vrcp.pop %v2212
    %v2214 = vmul.f32 1.0, %v2213
    %v2215 = vtanh.pop %v2199
    %v2216 = vxor.u32 %v2201, 2147483648
    %v2217 = vmul.f32 %v2216, 1.442695
    %v2218 = vpow.pop %v2217
    %v2219 = vadd.f32 %v2218, 1.0
    %v2220 = vrcp.pop %v2219
    %v2221 = vmul.f32 1.0, %v2220
    %v2222 = vmul.f32 %v2214, %v1888
    %v2223 = vmul.f32 %v2208, %v2215
    %v2224 = vadd.f32 %v2222, %v2223
    %v2225 = vtanh.pop %v2224
    %v2226 = vmul.f32 %v2221, %v2225
    %2227 = vmatprep.subr.mxu0 %v398
    %2228 = vmatpush1.msra.mxu0 %v397
    %2229 = vmatprep.subr.mxu0 %v402
    %2230 = vmatpush1.msra.mxu0 %v401
    %2231 = vmatprep.subr.mxu0 %v406
    %2232 = vmatpush1.msra.mxu0 %v405
    %2233 = vmatprep.subr.mxu0 %v410
    %2234 = vmatpush1.msra.mxu0 %v409
    %2235 = vmatprep.subr.mxu0 %v414
    %2236 = vmatpush1.msra.mxu0 %v413
    %2237 = vmatprep.subr.mxu0 %v418
    %2238 = vmatpush1.msra.mxu0 %v417
    %2239 = vmatprep.subr.mxu0 %v422
    %2240 = vmatpush1.msra.mxu0 %v421
    %2241 = vmatprep.subr.mxu0 %v426
    %2242 = vmatpush1.msra.mxu0 %v425
    %2243 = vmatprep.subr.mxu0 %v430
    %2244 = vmatpush1.msra.mxu0 %v429
    %2245 = vmatprep.subr.mxu0 %v434
    %2246 = vmatpush1.msra.mxu0 %v433
    %2247 = vmatprep.subr.mxu0 %v438
    %2248 = vmatpush1.msra.mxu0 %v437
    %2249 = vmatprep.subr.mxu0 %v442
    %2250 = vmatpush1.msra.mxu0 %v441
    %2251 = vmatprep.subr.mxu0 %v446
    %2252 = vmatpush1.msra.mxu0 %v445
    %2253 = vmatprep.subr.mxu0 %v450
    %2254 = vmatpush1.msra.mxu0 %v449
    %2255 = vmatprep.subr.mxu0 %v454
    %2256 = vmatpush1.msra.mxu0 %v453
    %2257 = vmatprep.subr.mxu0 %v458
    %2258 = vmatpush1.msra.mxu0 %v457
    %2259 = vmatprep.subr.mxu0 %v462
    %2260 = vmatpush1.msra.mxu0 %v461
    %2261 = vmatprep.subr.mxu0 %v466
    %2262 = vmatpush1.msra.mxu0 %v465
    %2263 = vmatprep.subr.mxu0 %v470
    %2264 = vmatpush1.msra.mxu0 %v469
    %2265 = vmatprep.subr.mxu0 %v474
    %2266 = vmatpush1.msra.mxu0 %v473
    %2267 = vmatprep.subr.mxu0 %v478
    %2268 = vmatpush1.msra.mxu0 %v477
    %2269 = vmatprep.subr.mxu0 %v482
    %2270 = vmatpush1.msra.mxu0 %v481
    %2271 = vmatprep.subr.mxu0 %v486
    %2272 = vmatpush1.msra.mxu0 %v485
    %2273 = vmatprep.subr.mxu0 %v490
    %2274 = vmatpush1.msra.mxu0 %v489
    %2275 = vmatprep.subr.mxu0 %v494
    %2276 = vmatpush1.msra.mxu0 %v493
    %2277 = vmatprep.subr.mxu0 %v498
    %2278 = vmatpush1.msra.mxu0 %v497
    %2279 = vmatprep.subr.mxu0 %v502
    %2280 = vmatpush1.msra.mxu0 %v501
    %2281 = vmatprep.subr.mxu0 %v506
    %2282 = vmatpush1.msra.mxu0 %v505
    %2283 = vmatprep.subr.mxu0 %v510
    %2284 = vmatpush1.msra.mxu0 %v509
    %2285 = vmatprep.subr.mxu0 %v514
    %2286 = vmatpush1.msra.mxu0 %v513
    %2287 = vmatprep.subr.mxu0 %v518
    %2288 = vmatpush1.msra.mxu0 %v517
    %2289 = vmatprep.subr.mxu0 %v522
    %2290 = vmatpush1.msra.mxu0 %v521
    %2291 = vmatprep.mubr.f32.mxu0 %v2056
    %2292 = vmatmul.mubr.f32.gmra.mrb[0].mxu0 %v2226
    %v2293 = vpop.f32.mrb[0].mxu0
    %v2294 = vadd.f32 %v530, %v2293
    %v2295 = vpop.f32.mrb[0].mxu0
    %v2296 = vadd.f32 %v534, %v2295
    %2297 = vdwg.mxu0
    %2298 = vmatprep.subr.mxu0 %v400
    %2299 = vmatpush1.msra.mxu0 %v399
    %2300 = vmatprep.subr.mxu0 %v404
    %2301 = vmatpush1.msra.mxu0 %v403
    %2302 = vmatprep.subr.mxu0 %v408
    %2303 = vmatpush1.msra.mxu0 %v407
    %2304 = vmatprep.subr.mxu0 %v412
    %2305 = vmatpush1.msra.mxu0 %v411
    %2306 = vmatprep.subr.mxu0 %v416
    %2307 = vmatpush1.msra.mxu0 %v415
    %2308 = vmatprep.subr.mxu0 %v420
    %2309 = vmatpush1.msra.mxu0 %v419
    %2310 = vmatprep.subr.mxu0 %v424
    %2311 = vmatpush1.msra.mxu0 %v423
    %2312 = vmatprep.subr.mxu0 %v428
    %2313 = vmatpush1.msra.mxu0 %v427
    %2314 = vmatprep.subr.mxu0 %v432
    %2315 = vmatpush1.msra.mxu0 %v431
    %2316 = vmatprep.subr.mxu0 %v436
    %2317 = vmatpush1.msra.mxu0 %v435
    %2318 = vmatprep.subr.mxu0 %v440
    %2319 = vmatpush1.msra.mxu0 %v439
    %2320 = vmatprep.subr.mxu0 %v444
    %2321 = vmatpush1.msra.mxu0 %v443
    %2322 = vmatprep.subr.mxu0 %v448
    %2323 = vmatpush1.msra.mxu0 %v447
    %2324 = vmatprep.subr.mxu0 %v452
    %2325 = vmatpush1.msra.mxu0 %v451
    %2326 = vmatprep.subr.mxu0 %v456
    %2327 = vmatpush1.msra.mxu0 %v455
    %2328 = vmatprep.subr.mxu0 %v460
    %2329 = vmatpush1.msra.mxu0 %v459
    %2330 = vmatprep.subr.mxu0 %v464
    %2331 = vmatpush1.msra.mxu0 %v463
    %2332 = vmatprep.subr.mxu0 %v468
    %2333 = vmatpush1.msra.mxu0 %v467
    %2334 = vmatprep.subr.mxu0 %v472
    %2335 = vmatpush1.msra.mxu0 %v471
    %2336 = vmatprep.subr.mxu0 %v476
    %2337 = vmatpush1.msra.mxu0 %v475
    %2338 = vmatprep.subr.mxu0 %v480
    %2339 = vmatpush1.msra.mxu0 %v479
    %2340 = vmatprep.subr.mxu0 %v484
    %2341 = vmatpush1.msra.mxu0 %v483
    %2342 = vmatprep.subr.mxu0 %v488
    %2343 = vmatpush1.msra.mxu0 %v487
    %2344 = vmatprep.subr.mxu0 %v492
    %2345 = vmatpush1.msra.mxu0 %v491
    %2346 = vmatprep.subr.mxu0 %v496
    %2347 = vmatpush1.msra.mxu0 %v495
    %2348 = vmatprep.subr.mxu0 %v500
    %2349 = vmatpush1.msra.mxu0 %v499
    %2350 = vmatprep.subr.mxu0 %v504
    %2351 = vmatpush1.msra.mxu0 %v503
    %2352 = vmatprep.subr.mxu0 %v508
    %2353 = vmatpush1.msra.mxu0 %v507
    %2354 = vmatprep.subr.mxu0 %v512
    %2355 = vmatpush1.msra.mxu0 %v511
    %2356 = vmatprep.subr.mxu0 %v516
    %2357 = vmatpush1.msra.mxu0 %v515
    %2358 = vmatprep.subr.mxu0 %v520
    %2359 = vmatpush1.msra.mxu0 %v519
    %2360 = vmatprep.subr.mxu0 %v524
    %2361 = vmatpush1.msra.mxu0 %v523
    %2362 = vmatprep.mubr.f32.mxu0 %v2056
    %2363 = vmatmul.mubr.f32.gmra.mrb[0].mxu0 %v2226
    %v2364 = vpop.f32.mrb[0].mxu0
    %v2365 = vadd.f32 %v538, %v2364
    %v2366 = vpop.f32.mrb[0].mxu0
    %v2367 = vadd.f32 %v542, %v2366
    %2368 = vdwg.mxu0
    %v2369 = vxor.u32 %v2294, 2147483648
    %v2370 = vmul.f32 %v2369, 1.442695
    %v2371 = vpow.pop %v2370
    %v2372 = vadd.f32 %v2371, 1.0
    %v2373 = vrcp.pop %v2372
    %v2374 = vmul.f32 1.0, %v2373
    %v2375 = vxor.u32 %v2296, 2147483648
    %v2376 = vmul.f32 %v2375, 1.442695
    %v2377 = vpow.pop %v2376
    %v2378 = vadd.f32 %v2377, 1.0
    %v2379 = vrcp.pop %v2378
    %v2380 = vmul.f32 1.0, %v2379
    %v2381 = vtanh.pop %v2365
    %v2382 = vxor.u32 %v2367, 2147483648
    %v2383 = vmul.f32 %v2382, 1.442695
    %v2384 = vpow.pop %v2383
    %v2385 = vadd.f32 %v2384, 1.0
    %v2386 = vrcp.pop %v2385
    %v2387 = vmul.f32 1.0, %v2386
    %v2388 = vmul.f32 %v2380, %v2054
    %v2389 = vmul.f32 %v2374, %v2381
    %v2390 = vadd.f32 %v2388, %v2389
    %v2391 = vtanh.pop %v2390
    %v2392 = vmul.f32 %v2387, %v2391
    %vm2393 = vcmp.eq.s32.totalorder %v79, 6
    %v2394 = vsel %vm2393, %v2392, %v2058
    %s2395 = scalar_lea.vmem %s1, 48
    %v2396 = vld [vmem:[%s2395] sm:$0xff]
    %2397 = vmatprep.subr.mxu0 %v82
    %2398 = vmatpush1.msra.mxu0 %v81
    %2399 = vmatprep.subr.mxu0 %v86
    %2400 = vmatpush1.msra.mxu0 %v85
    %2401 = vmatprep.subr.mxu0 %v90
    %2402 = vmatpush1.msra.mxu0 %v89
    %2403 = vmatprep.subr.mxu0 %v94
    %2404 = vmatpush1.msra.mxu0 %v93
    %2405 = vmatprep.subr.mxu0 %v98
    %2406 = vmatpush1.msra.mxu0 %v97
    %2407 = vmatprep.subr.mxu0 %v102
    %2408 = vmatpush1.msra.mxu0 %v101
    %2409 = vmatprep.subr.mxu0 %v106
    %2410 = vmatpush1.msra.mxu0 %v105
    %2411 = vmatprep.subr.mxu0 %v110
    %2412 = vmatpush1.msra.mxu0 %v109
    %2413 = vmatprep.subr.mxu0 %v114
    %2414 = vmatpush1.msra.mxu0 %v113
    %2415 = vmatprep.subr.mxu0 %v118
    %2416 = vmatpush1.msra.mxu0 %v117
    %2417 = vmatprep.subr.mxu0 %v122
    %2418 = vmatpush1.msra.mxu0 %v121
    %2419 = vmatprep.subr.mxu0 %v126
    %2420 = vmatpush1.msra.mxu0 %v125
    %2421 = vmatprep.subr.mxu0 %v130
    %2422 = vmatpush1.msra.mxu0 %v129
    %2423 = vmatprep.subr.mxu0 %v134
    %2424 = vmatpush1.msra.mxu0 %v133
    %2425 = vmatprep.subr.mxu0 %v138
    %2426 = vmatpush1.msra.mxu0 %v137
    %2427 = vmatprep.subr.mxu0 %v142
    %2428 = vmatpush1.msra.mxu0 %v141
    %2429 = vmatprep.subr.mxu0 %v146
    %2430 = vmatpush1.msra.mxu0 %v145
    %2431 = vmatprep.subr.mxu0 %v150
    %2432 = vmatpush1.msra.mxu0 %v149
    %2433 = vmatprep.subr.mxu0 %v154
    %2434 = vmatpush1.msra.mxu0 %v153
    %2435 = vmatprep.subr.mxu0 %v158
    %2436 = vmatpush1.msra.mxu0 %v157
    %2437 = vmatprep.subr.mxu0 %v162
    %2438 = vmatpush1.msra.mxu0 %v161
    %2439 = vmatprep.subr.mxu0 %v166
    %2440 = vmatpush1.msra.mxu0 %v165
    %2441 = vmatprep.subr.mxu0 %v170
    %2442 = vmatpush1.msra.mxu0 %v169
    %2443 = vmatprep.subr.mxu0 %v174
    %2444 = vmatpush1.msra.mxu0 %v173
    %2445 = vmatprep.subr.mxu0 %v178
    %2446 = vmatpush1.msra.mxu0 %v177
    %2447 = vmatprep.subr.mxu0 %v182
    %2448 = vmatpush1.msra.mxu0 %v181
    %2449 = vmatprep.subr.mxu0 %v186
    %2450 = vmatpush1.msra.mxu0 %v185
    %2451 = vmatprep.subr.mxu0 %v190
    %2452 = vmatpush1.msra.mxu0 %v189
    %2453 = vmatprep.subr.mxu0 %v194
    %2454 = vmatpush1.msra.mxu0 %v193
    %2455 = vmatprep.subr.mxu0 %v198
    %2456 = vmatpush1.msra.mxu0 %v197
    %2457 = vmatprep.subr.mxu0 %v202
    %2458 = vmatpush1.msra.mxu0 %v201
    %2459 = vmatprep.subr.mxu0 %v206
    %2460 = vmatpush1.msra.mxu0 %v205
    %2461 = vmatprep.mubr.f32.mxu0 %v2226
    %2462 = vmatmul.mubr.f32.gmra.mrb[0].mxu0 %v2396
    %v2463 = vpop.f32.mrb[0].mxu0
    %v2464 = vadd.f32 %v214, %v2463
    %v2465 = vpop.f32.mrb[0].mxu0
    %v2466 = vadd.f32 %v218, %v2465
    %2467 = vdwg.mxu0
    %2468 = vmatprep.subr.mxu0 %v84
    %2469 = vmatpush1.msra.mxu0 %v83
    %2470 = vmatprep.subr.mxu0 %v88
    %2471 = vmatpush1.msra.mxu0 %v87
    %2472 = vmatprep.subr.mxu0 %v92
    %2473 = vmatpush1.msra.mxu0 %v91
    %2474 = vmatprep.subr.mxu0 %v96
    %2475 = vmatpush1.msra.mxu0 %v95
    %2476 = vmatprep.subr.mxu0 %v100
    %2477 = vmatpush1.msra.mxu0 %v99
    %2478 = vmatprep.subr.mxu0 %v104
    %2479 = vmatpush1.msra.mxu0 %v103
    %2480 = vmatprep.subr.mxu0 %v108
    %2481 = vmatpush1.msra.mxu0 %v107
    %2482 = vmatprep.subr.mxu0 %v112
    %2483 = vmatpush1.msra.mxu0 %v111
    %2484 = vmatprep.subr.mxu0 %v116
    %2485 = vmatpush1.msra.mxu0 %v115
    %2486 = vmatprep.subr.mxu0 %v120
    %2487 = vmatpush1.msra.mxu0 %v119
    %2488 = vmatprep.subr.mxu0 %v124
    %2489 = vmatpush1.msra.mxu0 %v123
    %2490 = vmatprep.subr.mxu0 %v128
    %2491 = vmatpush1.msra.mxu0 %v127
    %2492 = vmatprep.subr.mxu0 %v132
    %2493 = vmatpush1.msra.mxu0 %v131
    %2494 = vmatprep.subr.mxu0 %v136
    %2495 = vmatpush1.msra.mxu0 %v135
    %2496 = vmatprep.subr.mxu0 %v140
    %2497 = vmatpush1.msra.mxu0 %v139
    %2498 = vmatprep.subr.mxu0 %v144
    %2499 = vmatpush1.msra.mxu0 %v143
    %2500 = vmatprep.subr.mxu0 %v148
    %2501 = vmatpush1.msra.mxu0 %v147
    %2502 = vmatprep.subr.mxu0 %v152
    %2503 = vmatpush1.msra.mxu0 %v151
    %2504 = vmatprep.subr.mxu0 %v156
    %2505 = vmatpush1.msra.mxu0 %v155
    %2506 = vmatprep.subr.mxu0 %v160
    %2507 = vmatpush1.msra.mxu0 %v159
    %2508 = vmatprep.subr.mxu0 %v164
    %2509 = vmatpush1.msra.mxu0 %v163
    %2510 = vmatprep.subr.mxu0 %v168
    %2511 = vmatpush1.msra.mxu0 %v167
    %2512 = vmatprep.subr.mxu0 %v172
    %2513 = vmatpush1.msra.mxu0 %v171
    %2514 = vmatprep.subr.mxu0 %v176
    %2515 = vmatpush1.msra.mxu0 %v175
    %2516 = vmatprep.subr.mxu0 %v180
    %2517 = vmatpush1.msra.mxu0 %v179
    %2518 = vmatprep.subr.mxu0 %v184
    %2519 = vmatpush1.msra.mxu0 %v183
    %2520 = vmatprep.subr.mxu0 %v188
    %2521 = vmatpush1.msra.mxu0 %v187
    %2522 = vmatprep.subr.mxu0 %v192
    %2523 = vmatpush1.msra.mxu0 %v191
    %2524 = vmatprep.subr.mxu0 %v196
    %2525 = vmatpush1.msra.mxu0 %v195
    %2526 = vmatprep.subr.mxu0 %v200
    %2527 = vmatpush1.msra.mxu0 %v199
    %2528 = vmatprep.subr.mxu0 %v204
    %2529 = vmatpush1.msra.mxu0 %v203
    %2530 = vmatprep.subr.mxu0 %v208
    %2531 = vmatpush1.msra.mxu0 %v207
    %2532 = vmatprep.mubr.f32.mxu0 %v2226
    %2533 = vmatmul.mubr.f32.gmra.mrb[0].mxu0 %v2396
    %v2534 = vpop.f32.mrb[0].mxu0
    %v2535 = vadd.f32 %v222, %v2534
    %v2536 = vpop.f32.mrb[0].mxu0
    %v2537 = vadd.f32 %v226, %v2536
    %2538 = vdwg.mxu0
    %v2539 = vxor.u32 %v2464, 2147483648
    %v2540 = vmul.f32 %v2539, 1.442695
    %v2541 = vpow.pop %v2540
    %v2542 = vadd.f32 %v2541, 1.0
    %v2543 = vrcp.pop %v2542
    %v2544 = vmul.f32 1.0, %v2543
    %v2545 = vxor.u32 %v2466, 2147483648
    %v2546 = vmul.f32 %v2545, 1.442695
    %v2547 = vpow.pop %v2546
    %v2548 = vadd.f32 %v2547, 1.0
    %v2549 = vrcp.pop %v2548
    %v2550 = vmul.f32 1.0, %v2549
    %v2551 = vtanh.pop %v2535
    %v2552 = vxor.u32 %v2537, 2147483648
    %v2553 = vmul.f32 %v2552, 1.442695
    %v2554 = vpow.pop %v2553
    %v2555 = vadd.f32 %v2554, 1.0
    %v2556 = vrcp.pop %v2555
    %v2557 = vmul.f32 1.0, %v2556
    %v2558 = vmul.f32 %v2550, %v2224
    %v2559 = vmul.f32 %v2544, %v2551
    %v2560 = vadd.f32 %v2558, %v2559
    %v2561 = vtanh.pop %v2560
    %v2562 = vmul.f32 %v2557, %v2561
    %2563 = vmatprep.subr.mxu0 %v398
    %2564 = vmatpush1.msra.mxu0 %v397
    %2565 = vmatprep.subr.mxu0 %v402
    %2566 = vmatpush1.msra.mxu0 %v401
    %2567 = vmatprep.subr.mxu0 %v406
    %2568 = vmatpush1.msra.mxu0 %v405
    %2569 = vmatprep.subr.mxu0 %v410
    %2570 = vmatpush1.msra.mxu0 %v409
    %2571 = vmatprep.subr.mxu0 %v414
    %2572 = vmatpush1.msra.mxu0 %v413
    %2573 = vmatprep.subr.mxu0 %v418
    %2574 = vmatpush1.msra.mxu0 %v417
    %2575 = vmatprep.subr.mxu0 %v422
    %2576 = vmatpush1.msra.mxu0 %v421
    %2577 = vmatprep.subr.mxu0 %v426
    %2578 = vmatpush1.msra.mxu0 %v425
    %2579 = vmatprep.subr.mxu0 %v430
    %2580 = vmatpush1.msra.mxu0 %v429
    %2581 = vmatprep.subr.mxu0 %v434
    %2582 = vmatpush1.msra.mxu0 %v433
    %2583 = vmatprep.subr.mxu0 %v438
    %2584 = vmatpush1.msra.mxu0 %v437
    %2585 = vmatprep.subr.mxu0 %v442
    %2586 = vmatpush1.msra.mxu0 %v441
    %2587 = vmatprep.subr.mxu0 %v446
    %2588 = vmatpush1.msra.mxu0 %v445
    %2589 = vmatprep.subr.mxu0 %v450
    %2590 = vmatpush1.msra.mxu0 %v449
    %2591 = vmatprep.subr.mxu0 %v454
    %2592 = vmatpush1.msra.mxu0 %v453
    %2593 = vmatprep.subr.mxu0 %v458
    %2594 = vmatpush1.msra.mxu0 %v457
    %2595 = vmatprep.subr.mxu0 %v462
    %2596 = vmatpush1.msra.mxu0 %v461
    %2597 = vmatprep.subr.mxu0 %v466
    %2598 = vmatpush1.msra.mxu0 %v465
    %2599 = vmatprep.subr.mxu0 %v470
    %2600 = vmatpush1.msra.mxu0 %v469
    %2601 = vmatprep.subr.mxu0 %v474
    %2602 = vmatpush1.msra.mxu0 %v473
    %2603 = vmatprep.subr.mxu0 %v478
    %2604 = vmatpush1.msra.mxu0 %v477
    %2605 = vmatprep.subr.mxu0 %v482
    %2606 = vmatpush1.msra.mxu0 %v481
    %2607 = vmatprep.subr.mxu0 %v486
    %2608 = vmatpush1.msra.mxu0 %v485
    %2609 = vmatprep.subr.mxu0 %v490
    %2610 = vmatpush1.msra.mxu0 %v489
    %2611 = vmatprep.subr.mxu0 %v494
    %2612 = vmatpush1.msra.mxu0 %v493
    %2613 = vmatprep.subr.mxu0 %v498
    %2614 = vmatpush1.msra.mxu0 %v497
    %2615 = vmatprep.subr.mxu0 %v502
    %2616 = vmatpush1.msra.mxu0 %v501
    %2617 = vmatprep.subr.mxu0 %v506
    %2618 = vmatpush1.msra.mxu0 %v505
    %2619 = vmatprep.subr.mxu0 %v510
    %2620 = vmatpush1.msra.mxu0 %v509
    %2621 = vmatprep.subr.mxu0 %v514
    %2622 = vmatpush1.msra.mxu0 %v513
    %2623 = vmatprep.subr.mxu0 %v518
    %2624 = vmatpush1.msra.mxu0 %v517
    %2625 = vmatprep.subr.mxu0 %v522
    %2626 = vmatpush1.msra.mxu0 %v521
    %2627 = vmatprep.mubr.f32.mxu0 %v2392
    %2628 = vmatmul.mubr.f32.gmra.mrb[0].mxu0 %v2562
    %v2629 = vpop.f32.mrb[0].mxu0
    %v2630 = vadd.f32 %v530, %v2629
    %v2631 = vpop.f32.mrb[0].mxu0
    %v2632 = vadd.f32 %v534, %v2631
    %2633 = vdwg.mxu0
    %2634 = vmatprep.subr.mxu0 %v400
    %2635 = vmatpush1.msra.mxu0 %v399
    %2636 = vmatprep.subr.mxu0 %v404
    %2637 = vmatpush1.msra.mxu0 %v403
    %2638 = vmatprep.subr.mxu0 %v408
    %2639 = vmatpush1.msra.mxu0 %v407
    %2640 = vmatprep.subr.mxu0 %v412
    %2641 = vmatpush1.msra.mxu0 %v411
    %2642 = vmatprep.subr.mxu0 %v416
    %2643 = vmatpush1.msra.mxu0 %v415
    %2644 = vmatprep.subr.mxu0 %v420
    %2645 = vmatpush1.msra.mxu0 %v419
    %2646 = vmatprep.subr.mxu0 %v424
    %2647 = vmatpush1.msra.mxu0 %v423
    %2648 = vmatprep.subr.mxu0 %v428
    %2649 = vmatpush1.msra.mxu0 %v427
    %2650 = vmatprep.subr.mxu0 %v432
    %2651 = vmatpush1.msra.mxu0 %v431
    %2652 = vmatprep.subr.mxu0 %v436
    %2653 = vmatpush1.msra.mxu0 %v435
    %2654 = vmatprep.subr.mxu0 %v440
    %2655 = vmatpush1.msra.mxu0 %v439
    %2656 = vmatprep.subr.mxu0 %v444
    %2657 = vmatpush1.msra.mxu0 %v443
    %2658 = vmatprep.subr.mxu0 %v448
    %2659 = vmatpush1.msra.mxu0 %v447
    %2660 = vmatprep.subr.mxu0 %v452
    %2661 = vmatpush1.msra.mxu0 %v451
    %2662 = vmatprep.subr.mxu0 %v456
    %2663 = vmatpush1.msra.mxu0 %v455
    %2664 = vmatprep.subr.mxu0 %v460
    %2665 = vmatpush1.msra.mxu0 %v459
    %2666 = vmatprep.subr.mxu0 %v464
    %2667 = vmatpush1.msra.mxu0 %v463
    %2668 = vmatprep.subr.mxu0 %v468
    %2669 = vmatpush1.msra.mxu0 %v467
    %2670 = vmatprep.subr.mxu0 %v472
    %2671 = vmatpush1.msra.mxu0 %v471
    %2672 = vmatprep.subr.mxu0 %v476
    %2673 = vmatpush1.msra.mxu0 %v475
    %2674 = vmatprep.subr.mxu0 %v480
    %2675 = vmatpush1.msra.mxu0 %v479
    %2676 = vmatprep.subr.mxu0 %v484
    %2677 = vmatpush1.msra.mxu0 %v483
    %2678 = vmatprep.subr.mxu0 %v488
    %2679 = vmatpush1.msra.mxu0 %v487
    %2680 = vmatprep.subr.mxu0 %v492
    %2681 = vmatpush1.msra.mxu0 %v491
    %2682 = vmatprep.subr.mxu0 %v496
    %2683 = vmatpush1.msra.mxu0 %v495
    %2684 = vmatprep.subr.mxu0 %v500
    %2685 = vmatpush1.msra.mxu0 %v499
    %2686 = vmatprep.subr.mxu0 %v504
    %2687 = vmatpush1.msra.mxu0 %v503
    %2688 = vmatprep.subr.mxu0 %v508
    %2689 = vmatpush1.msra.mxu0 %v507
    %2690 = vmatprep.subr.mxu0 %v512
    %2691 = vmatpush1.msra.mxu0 %v511
    %2692 = vmatprep.subr.mxu0 %v516
    %2693 = vmatpush1.msra.mxu0 %v515
    %2694 = vmatprep.subr.mxu0 %v520
    %2695 = vmatpush1.msra.mxu0 %v519
    %2696 = vmatprep.subr.mxu0 %v524
    %2697 = vmatpush1.msra.mxu0 %v523
    %2698 = vmatprep.mubr.f32.mxu0 %v2392
    %2699 = vmatmul.mubr.f32.gmra.mrb[0].mxu0 %v2562
    %v2700 = vpop.f32.mrb[0].mxu0
    %v2701 = vadd.f32 %v538, %v2700
    %v2702 = vpop.f32.mrb[0].mxu0
    %v2703 = vadd.f32 %v542, %v2702
    %2704 = vdwg.mxu0
    %v2705 = vxor.u32 %v2630, 2147483648
    %v2706 = vmul.f32 %v2705, 1.442695
    %v2707 = vpow.pop %v2706
    %v2708 = vadd.f32 %v2707, 1.0
    %v2709 = vrcp.pop %v2708
    %v2710 = vmul.f32 1.0, %v2709
    %v2711 = vxor.u32 %v2632, 2147483648
    %v2712 = vmul.f32 %v2711, 1.442695
    %v2713 = vpow.pop %v2712
    %v2714 = vadd.f32 %v2713, 1.0
    %v2715 = vrcp.pop %v2714
    %v2716 = vmul.f32 1.0, %v2715
    %v2717 = vtanh.pop %v2701
    %v2718 = vxor.u32 %v2703, 2147483648
    %v2719 = vmul.f32 %v2718, 1.442695
    %v2720 = vpow.pop %v2719
    %v2721 = vadd.f32 %v2720, 1.0
    %v2722 = vrcp.pop %v2721
    %v2723 = vmul.f32 1.0, %v2722
    %v2724 = vmul.f32 %v2716, %v2390
    %v2725 = vmul.f32 %v2710, %v2717
    %v2726 = vadd.f32 %v2724, %v2725
    %v2727 = vtanh.pop %v2726
    %v2728 = vmul.f32 %v2723, %v2727
    %vm2729 = vcmp.eq.s32.totalorder %v79, 7
    %v2730 = vsel %vm2729, %v2728, %v2394
    %s2731 = scalar_lea.vmem %s1, 56
    %v2732 = vld [vmem:[%s2731] sm:$0xff]
    %2733 = vmatprep.subr.mxu0 %v82
    %2734 = vmatpush1.msra.mxu0 %v81
    %2735 = vmatprep.subr.mxu0 %v86
    %2736 = vmatpush1.msra.mxu0 %v85
    %2737 = vmatprep.subr.mxu0 %v90
    %2738 = vmatpush1.msra.mxu0 %v89
    %2739 = vmatprep.subr.mxu0 %v94
    %2740 = vmatpush1.msra.mxu0 %v93
    %2741 = vmatprep.subr.mxu0 %v98
    %2742 = vmatpush1.msra.mxu0 %v97
    %2743 = vmatprep.subr.mxu0 %v102
    %2744 = vmatpush1.msra.mxu0 %v101
    %2745 = vmatprep.subr.mxu0 %v106
    %2746 = vmatpush1.msra.mxu0 %v105
    %2747 = vmatprep.subr.mxu0 %v110
    %2748 = vmatpush1.msra.mxu0 %v109
    %2749 = vmatprep.subr.mxu0 %v114
    %2750 = vmatpush1.msra.mxu0 %v113
    %2751 = vmatprep.subr.mxu0 %v118
    %2752 = vmatpush1.msra.mxu0 %v117
    %2753 = vmatprep.subr.mxu0 %v122
    %2754 = vmatpush1.msra.mxu0 %v121
    %2755 = vmatprep.subr.mxu0 %v126
    %2756 = vmatpush1.msra.mxu0 %v125
    %2757 = vmatprep.subr.mxu0 %v130
    %2758 = vmatpush1.msra.mxu0 %v129
    %2759 = vmatprep.subr.mxu0 %v134
    %2760 = vmatpush1.msra.mxu0 %v133
    %2761 = vmatprep.subr.mxu0 %v138
    %2762 = vmatpush1.msra.mxu0 %v137
    %2763 = vmatprep.subr.mxu0 %v142
    %2764 = vmatpush1.msra.mxu0 %v141
    %2765 = vmatprep.subr.mxu0 %v146
    %2766 = vmatpush1.msra.mxu0 %v145
    %2767 = vmatprep.subr.mxu0 %v150
    %2768 = vmatpush1.msra.mxu0 %v149
    %2769 = vmatprep.subr.mxu0 %v154
    %2770 = vmatpush1.msra.mxu0 %v153
    %2771 = vmatprep.subr.mxu0 %v158
    %2772 = vmatpush1.msra.mxu0 %v157
    %2773 = vmatprep.subr.mxu0 %v162
    %2774 = vmatpush1.msra.mxu0 %v161
    %2775 = vmatprep.subr.mxu0 %v166
    %2776 = vmatpush1.msra.mxu0 %v165
    %2777 = vmatprep.subr.mxu0 %v170
    %2778 = vmatpush1.msra.mxu0 %v169
    %2779 = vmatprep.subr.mxu0 %v174
    %2780 = vmatpush1.msra.mxu0 %v173
    %2781 = vmatprep.subr.mxu0 %v178
    %2782 = vmatpush1.msra.mxu0 %v177
    %2783 = vmatprep.subr.mxu0 %v182
    %2784 = vmatpush1.msra.mxu0 %v181
    %2785 = vmatprep.subr.mxu0 %v186
    %2786 = vmatpush1.msra.mxu0 %v185
    %2787 = vmatprep.subr.mxu0 %v190
    %2788 = vmatpush1.msra.mxu0 %v189
    %2789 = vmatprep.subr.mxu0 %v194
    %2790 = vmatpush1.msra.mxu0 %v193
    %2791 = vmatprep.subr.mxu0 %v198
    %2792 = vmatpush1.msra.mxu0 %v197
    %2793 = vmatprep.subr.mxu0 %v202
    %2794 = vmatpush1.msra.mxu0 %v201
    %2795 = vmatprep.subr.mxu0 %v206
    %2796 = vmatpush1.msra.mxu0 %v205
    %2797 = vmatprep.mubr.f32.mxu0 %v2562
    %2798 = vmatmul.mubr.f32.gmra.mrb[0].mxu0 %v2732
    %v2799 = vpop.f32.mrb[0].mxu0
    %v2800 = vadd.f32 %v214, %v2799
    %v2801 = vpop.f32.mrb[0].mxu0
    %v2802 = vadd.f32 %v218, %v2801
    %2803 = vdwg.mxu0
    %2804 = vmatprep.subr.mxu0 %v84
    %2805 = vmatpush1.msra.mxu0 %v83
    %2806 = vmatprep.subr.mxu0 %v88
    %2807 = vmatpush1.msra.mxu0 %v87
    %2808 = vmatprep.subr.mxu0 %v92
    %2809 = vmatpush1.msra.mxu0 %v91
    %2810 = vmatprep.subr.mxu0 %v96
    %2811 = vmatpush1.msra.mxu0 %v95
    %2812 = vmatprep.subr.mxu0 %v100
    %2813 = vmatpush1.msra.mxu0 %v99
    %2814 = vmatprep.subr.mxu0 %v104
    %2815 = vmatpush1.msra.mxu0 %v103
    %2816 = vmatprep.subr.mxu0 %v108
    %2817 = vmatpush1.msra.mxu0 %v107
    %2818 = vmatprep.subr.mxu0 %v112
    %2819 = vmatpush1.msra.mxu0 %v111
    %2820 = vmatprep.subr.mxu0 %v116
    %2821 = vmatpush1.msra.mxu0 %v115
    %2822 = vmatprep.subr.mxu0 %v120
    %2823 = vmatpush1.msra.mxu0 %v119
    %2824 = vmatprep.subr.mxu0 %v124
    %2825 = vmatpush1.msra.mxu0 %v123
    %2826 = vmatprep.subr.mxu0 %v128
    %2827 = vmatpush1.msra.mxu0 %v127
    %2828 = vmatprep.subr.mxu0 %v132
    %2829 = vmatpush1.msra.mxu0 %v131
    %2830 = vmatprep.subr.mxu0 %v136
    %2831 = vmatpush1.msra.mxu0 %v135
    %2832 = vmatprep.subr.mxu0 %v140
    %2833 = vmatpush1.msra.mxu0 %v139
    %2834 = vmatprep.subr.mxu0 %v144
    %2835 = vmatpush1.msra.mxu0 %v143
    %2836 = vmatprep.subr.mxu0 %v148
    %2837 = vmatpush1.msra.mxu0 %v147
    %2838 = vmatprep.subr.mxu0 %v152
    %2839 = vmatpush1.msra.mxu0 %v151
    %2840 = vmatprep.subr.mxu0 %v156
    %2841 = vmatpush1.msra.mxu0 %v155
    %2842 = vmatprep.subr.mxu0 %v160
    %2843 = vmatpush1.msra.mxu0 %v159
    %2844 = vmatprep.subr.mxu0 %v164
    %2845 = vmatpush1.msra.mxu0 %v163
    %2846 = vmatprep.subr.mxu0 %v168
    %2847 = vmatpush1.msra.mxu0 %v167
    %2848 = vmatprep.subr.mxu0 %v172
    %2849 = vmatpush1.msra.mxu0 %v171
    %2850 = vmatprep.subr.mxu0 %v176
    %2851 = vmatpush1.msra.mxu0 %v175
    %2852 = vmatprep.subr.mxu0 %v180
    %2853 = vmatpush1.msra.mxu0 %v179
    %2854 = vmatprep.subr.mxu0 %v184
    %2855 = vmatpush1.msra.mxu0 %v183
    %2856 = vmatprep.subr.mxu0 %v188
    %2857 = vmatpush1.msra.mxu0 %v187
    %2858 = vmatprep.subr.mxu0 %v192
    %2859 = vmatpush1.msra.mxu0 %v191
    %2860 = vmatprep.subr.mxu0 %v196
    %2861 = vmatpush1.msra.mxu0 %v195
    %2862 = vmatprep.subr.mxu0 %v200
    %2863 = vmatpush1.msra.mxu0 %v199
    %2864 = vmatprep.subr.mxu0 %v204
    %2865 = vmatpush1.msra.mxu0 %v203
    %2866 = vmatprep.subr.mxu0 %v208
    %2867 = vmatpush1.msra.mxu0 %v207
    %2868 = vmatprep.mubr.f32.mxu0 %v2562
    %2869 = vmatmul.mubr.f32.gmra.mrb[0].mxu0 %v2732
    %v2870 = vpop.f32.mrb[0].mxu0
    %v2871 = vadd.f32 %v222, %v2870
    %v2872 = vpop.f32.mrb[0].mxu0
    %v2873 = vadd.f32 %v226, %v2872
    %2874 = vdwg.mxu0
    %v2875 = vxor.u32 %v2800, 2147483648
    %v2876 = vmul.f32 %v2875, 1.442695
    %v2877 = vpow.pop %v2876
    %v2878 = vadd.f32 %v2877, 1.0
    %v2879 = vrcp.pop %v2878
    %v2880 = vmul.f32 1.0, %v2879
    %v2881 = vxor.u32 %v2802, 2147483648
    %v2882 = vmul.f32 %v2881, 1.442695
    %v2883 = vpow.pop %v2882
    %v2884 = vadd.f32 %v2883, 1.0
    %v2885 = vrcp.pop %v2884
    %v2886 = vmul.f32 1.0, %v2885
    %v2887 = vtanh.pop %v2871
    %v2888 = vxor.u32 %v2873, 2147483648
    %v2889 = vmul.f32 %v2888, 1.442695
    %v2890 = vpow.pop %v2889
    %v2891 = vadd.f32 %v2890, 1.0
    %v2892 = vrcp.pop %v2891
    %v2893 = vmul.f32 1.0, %v2892
    %v2894 = vmul.f32 %v2886, %v2560
    %v2895 = vmul.f32 %v2880, %v2887
    %v2896 = vadd.f32 %v2894, %v2895
    %v2897 = vtanh.pop %v2896
    %v2898 = vmul.f32 %v2893, %v2897
    %2899 = vmatprep.subr.mxu0 %v398
    %2900 = vmatpush1.msra.mxu0 %v397
    %2901 = vmatprep.subr.mxu0 %v402
    %2902 = vmatpush1.msra.mxu0 %v401
    %2903 = vmatprep.subr.mxu0 %v406
    %2904 = vmatpush1.msra.mxu0 %v405
    %2905 = vmatprep.subr.mxu0 %v410
    %2906 = vmatpush1.msra.mxu0 %v409
    %2907 = vmatprep.subr.mxu0 %v414
    %2908 = vmatpush1.msra.mxu0 %v413
    %2909 = vmatprep.subr.mxu0 %v418
    %2910 = vmatpush1.msra.mxu0 %v417
    %2911 = vmatprep.subr.mxu0 %v422
    %2912 = vmatpush1.msra.mxu0 %v421
    %2913 = vmatprep.subr.mxu0 %v426
    %2914 = vmatpush1.msra.mxu0 %v425
    %2915 = vmatprep.subr.mxu0 %v430
    %2916 = vmatpush1.msra.mxu0 %v429
    %2917 = vmatprep.subr.mxu0 %v434
    %2918 = vmatpush1.msra.mxu0 %v433
    %2919 = vmatprep.subr.mxu0 %v438
    %2920 = vmatpush1.msra.mxu0 %v437
    %2921 = vmatprep.subr.mxu0 %v442
    %2922 = vmatpush1.msra.mxu0 %v441
    %2923 = vmatprep.subr.mxu0 %v446
    %2924 = vmatpush1.msra.mxu0 %v445
    %2925 = vmatprep.subr.mxu0 %v450
    %2926 = vmatpush1.msra.mxu0 %v449
    %2927 = vmatprep.subr.mxu0 %v454
    %2928 = vmatpush1.msra.mxu0 %v453
    %2929 = vmatprep.subr.mxu0 %v458
    %2930 = vmatpush1.msra.mxu0 %v457
    %2931 = vmatprep.subr.mxu0 %v462
    %2932 = vmatpush1.msra.mxu0 %v461
    %2933 = vmatprep.subr.mxu0 %v466
    %2934 = vmatpush1.msra.mxu0 %v465
    %2935 = vmatprep.subr.mxu0 %v470
    %2936 = vmatpush1.msra.mxu0 %v469
    %2937 = vmatprep.subr.mxu0 %v474
    %2938 = vmatpush1.msra.mxu0 %v473
    %2939 = vmatprep.subr.mxu0 %v478
    %2940 = vmatpush1.msra.mxu0 %v477
    %2941 = vmatprep.subr.mxu0 %v482
    %2942 = vmatpush1.msra.mxu0 %v481
    %2943 = vmatprep.subr.mxu0 %v486
    %2944 = vmatpush1.msra.mxu0 %v485
    %2945 = vmatprep.subr.mxu0 %v490
    %2946 = vmatpush1.msra.mxu0 %v489
    %2947 = vmatprep.subr.mxu0 %v494
    %2948 = vmatpush1.msra.mxu0 %v493
    %2949 = vmatprep.subr.mxu0 %v498
    %2950 = vmatpush1.msra.mxu0 %v497
    %2951 = vmatprep.subr.mxu0 %v502
    %2952 = vmatpush1.msra.mxu0 %v501
    %2953 = vmatprep.subr.mxu0 %v506
    %2954 = vmatpush1.msra.mxu0 %v505
    %2955 = vmatprep.subr.mxu0 %v510
    %2956 = vmatpush1.msra.mxu0 %v509
    %2957 = vmatprep.subr.mxu0 %v514
    %2958 = vmatpush1.msra.mxu0 %v513
    %2959 = vmatprep.subr.mxu0 %v518
    %2960 = vmatpush1.msra.mxu0 %v517
    %2961 = vmatprep.subr.mxu0 %v522
    %2962 = vmatpush1.msra.mxu0 %v521
    %2963 = vmatprep.mubr.f32.mxu0 %v2728
    %2964 = vmatmul.mubr.f32.gmra.mrb[0].mxu0 %v2898
    %v2965 = vpop.f32.mrb[0].mxu0
    %v2966 = vadd.f32 %v530, %v2965
    %v2967 = vpop.f32.mrb[0].mxu0
    %v2968 = vadd.f32 %v534, %v2967
    %2969 = vdwg.mxu0
    %2970 = vmatprep.subr.mxu0 %v400
    %2971 = vmatpush1.msra.mxu0 %v399
    %2972 = vmatprep.subr.mxu0 %v404
    %2973 = vmatpush1.msra.mxu0 %v403
    %2974 = vmatprep.subr.mxu0 %v408
    %2975 = vmatpush1.msra.mxu0 %v407
    %2976 = vmatprep.subr.mxu0 %v412
    %2977 = vmatpush1.msra.mxu0 %v411
    %2978 = vmatprep.subr.mxu0 %v416
    %2979 = vmatpush1.msra.mxu0 %v415
    %2980 = vmatprep.subr.mxu0 %v420
    %2981 = vmatpush1.msra.mxu0 %v419
    %2982 = vmatprep.subr.mxu0 %v424
    %2983 = vmatpush1.msra.mxu0 %v423
    %2984 = vmatprep.subr.mxu0 %v428
    %2985 = vmatpush1.msra.mxu0 %v427
    %2986 = vmatprep.subr.mxu0 %v432
    %2987 = vmatpush1.msra.mxu0 %v431
    %2988 = vmatprep.subr.mxu0 %v436
    %2989 = vmatpush1.msra.mxu0 %v435
    %2990 = vmatprep.subr.mxu0 %v440
    %2991 = vmatpush1.msra.mxu0 %v439
    %2992 = vmatprep.subr.mxu0 %v444
    %2993 = vmatpush1.msra.mxu0 %v443
    %2994 = vmatprep.subr.mxu0 %v448
    %2995 = vmatpush1.msra.mxu0 %v447
    %2996 = vmatprep.subr.mxu0 %v452
    %2997 = vmatpush1.msra.mxu0 %v451
    %2998 = vmatprep.subr.mxu0 %v456
    %2999 = vmatpush1.msra.mxu0 %v455
    %3000 = vmatprep.subr.mxu0 %v460
    %3001 = vmatpush1.msra.mxu0 %v459
    %3002 = vmatprep.subr.mxu0 %v464
    %3003 = vmatpush1.msra.mxu0 %v463
    %3004 = vmatprep.subr.mxu0 %v468
    %3005 = vmatpush1.msra.mxu0 %v467
    %3006 = vmatprep.subr.mxu0 %v472
    %3007 = vmatpush1.msra.mxu0 %v471
    %3008 = vmatprep.subr.mxu0 %v476
    %3009 = vmatpush1.msra.mxu0 %v475
    %3010 = vmatprep.subr.mxu0 %v480
    %3011 = vmatpush1.msra.mxu0 %v479
    %3012 = vmatprep.subr.mxu0 %v484
    %3013 = vmatpush1.msra.mxu0 %v483
    %3014 = vmatprep.subr.mxu0 %v488
    %3015 = vmatpush1.msra.mxu0 %v487
    %3016 = vmatprep.subr.mxu0 %v492
    %3017 = vmatpush1.msra.mxu0 %v491
    %3018 = vmatprep.subr.mxu0 %v496
    %3019 = vmatpush1.msra.mxu0 %v495
    %3020 = vmatprep.subr.mxu0 %v500
    %3021 = vmatpush1.msra.mxu0 %v499
    %3022 = vmatprep.subr.mxu0 %v504
    %3023 = vmatpush1.msra.mxu0 %v503
    %3024 = vmatprep.subr.mxu0 %v508
    %3025 = vmatpush1.msra.mxu0 %v507
    %3026 = vmatprep.subr.mxu0 %v512
    %3027 = vmatpush1.msra.mxu0 %v511
    %3028 = vmatprep.subr.mxu0 %v516
    %3029 = vmatpush1.msra.mxu0 %v515
    %3030 = vmatprep.subr.mxu0 %v520
    %3031 = vmatpush1.msra.mxu0 %v519
    %3032 = vmatprep.subr.mxu0 %v524
    %3033 = vmatpush1.msra.mxu0 %v523
    %3034 = vmatprep.mubr.f32.mxu0 %v2728
    %3035 = vmatmul.mubr.f32.gmra.mrb[0].mxu0 %v2898
    %v3036 = vpop.f32.mrb[0].mxu0
    %v3037 = vadd.f32 %v538, %v3036
    %v3038 = vpop.f32.mrb[0].mxu0
    %v3039 = vadd.f32 %v542, %v3038
    %3040 = vdwg.mxu0
    %v3041 = vxor.u32 %v2966, 2147483648
    %v3042 = vmul.f32 %v3041, 1.442695
    %v3043 = vpow.pop %v3042
    %v3044 = vadd.f32 %v3043, 1.0
    %v3045 = vrcp.pop %v3044
    %v3046 = vmul.f32 1.0, %v3045
    %v3047 = vxor.u32 %v2968, 2147483648
    %v3048 = vmul.f32 %v3047, 1.442695
    %v3049 = vpow.pop %v3048
    %v3050 = vadd.f32 %v3049, 1.0
    %v3051 = vrcp.pop %v3050
    %v3052 = vmul.f32 1.0, %v3051
    %v3053 = vtanh.pop %v3037
    %v3054 = vxor.u32 %v3039, 2147483648
    %v3055 = vmul.f32 %v3054, 1.442695
    %v3056 = vpow.pop %v3055
    %v3057 = vadd.f32 %v3056, 1.0
    %v3058 = vrcp.pop %v3057
    %v3059 = vmul.f32 1.0, %v3058
    %v3060 = vmul.f32 %v3052, %v2726
    %v3061 = vmul.f32 %v3046, %v3053
    %v3062 = vadd.f32 %v3060, %v3061
    %v3063 = vtanh.pop %v3062
    %v3064 = vmul.f32 %v3059, %v3063
    %vm3065 = vcmp.eq.s32.totalorder %v79, 8
    %v3066 = vsel %vm3065, %v3064, %v2730
    %v3067 = vld [vmem:[%s6] sm:$0xff]
    %v3068 = vld [vmem:[%s6 + $0x8] sm:$0xff]
    %v3069 = vld [vmem:[%s6 + $0x10] sm:$0xff]
    %v3070 = vld [vmem:[%s6 + $0x18] sm:$0xff]
    %v3071 = vld [vmem:[%s6 + $0x20] sm:$0xff]
    %v3072 = vld [vmem:[%s6 + $0x28] sm:$0xff]
    %v3073 = vld [vmem:[%s6 + $0x30] sm:$0xff]
    %v3074 = vld [vmem:[%s6 + $0x38] sm:$0xff]
    %v3075 = vld [vmem:[%s6 + $0x40] sm:$0xff]
    %v3076 = vld [vmem:[%s6 + $0x48] sm:$0xff]
    %v3077 = vld [vmem:[%s6 + $0x50] sm:$0xff]
    %v3078 = vld [vmem:[%s6 + $0x58] sm:$0xff]
    %v3079 = vld [vmem:[%s6 + $0x60] sm:$0xff]
    %v3080 = vld [vmem:[%s6 + $0x68] sm:$0xff]
    %v3081 = vld [vmem:[%s6 + $0x70] sm:$0xff]
    %v3082 = vld [vmem:[%s6 + $0x78] sm:$0xff]
    %v3083 = vld [vmem:[#allocation6] sm:$0xff]
    %v3084 = vld [vmem:[#allocation6 + $0x8] sm:$0xff]
    %v3085 = vld [vmem:[#allocation6 + $0x10] sm:$0xff]
    %v3086 = vld [vmem:[#allocation6 + $0x18] sm:$0xff]
    %v3087 = vld [vmem:[#allocation6 + $0x20] sm:$0xff]
    %v3088 = vld [vmem:[#allocation6 + $0x28] sm:$0xff]
    %v3089 = vld [vmem:[#allocation6 + $0x30] sm:$0xff]
    %v3090 = vld [vmem:[#allocation6 + $0x38] sm:$0xff]
    %v3091 = vld [vmem:[#allocation6 + $0x40] sm:$0xff]
    %v3092 = vld [vmem:[#allocation6 + $0x48] sm:$0xff]
    %v3093 = vld [vmem:[#allocation6 + $0x50] sm:$0xff]
    %v3094 = vld [vmem:[#allocation6 + $0x58] sm:$0xff]
    %v3095 = vld [vmem:[#allocation6 + $0x60] sm:$0xff]
    %v3096 = vld [vmem:[#allocation6 + $0x68] sm:$0xff]
    %v3097 = vld [vmem:[#allocation6 + $0x70] sm:$0xff]
    %v3098 = vld [vmem:[#allocation6 + $0x78] sm:$0xff]
    %v3099 = vld [vmem:[%s7] sm:$0x1]
    %v3101 = vlaneseq
    %v3102 = vshrl.u32 %v3101, 7
    %v3103 = vsub.s32 0, %v3102
    %v3104 = vrot.slane %v3099, %v3103
    %3106 = vmatprep.subr.mxu0 0.0
    %3107 = vmatpush1.msra.mxu0 %v3067
    %3108 = vmatprep.subr.mxu0 0.0
    %3109 = vmatpush1.msra.mxu0 %v3068
    %3110 = vmatprep.subr.mxu0 0.0
    %3111 = vmatpush1.msra.mxu0 %v3069
    %3112 = vmatprep.subr.mxu0 0.0
    %3113 = vmatpush1.msra.mxu0 %v3070
    %3114 = vmatprep.subr.mxu0 0.0
    %3115 = vmatpush1.msra.mxu0 %v3071
    %3116 = vmatprep.subr.mxu0 0.0
    %3117 = vmatpush1.msra.mxu0 %v3072
    %3118 = vmatprep.subr.mxu0 0.0
    %3119 = vmatpush1.msra.mxu0 %v3073
    %3120 = vmatprep.subr.mxu0 0.0
    %3121 = vmatpush1.msra.mxu0 %v3074
    %3122 = vmatprep.subr.mxu0 0.0
    %3123 = vmatpush1.msra.mxu0 %v3075
    %3124 = vmatprep.subr.mxu0 0.0
    %3125 = vmatpush1.msra.mxu0 %v3076
    %3126 = vmatprep.subr.mxu0 0.0
    %3127 = vmatpush1.msra.mxu0 %v3077
    %3128 = vmatprep.subr.mxu0 0.0
    %3129 = vmatpush1.msra.mxu0 %v3078
    %3130 = vmatprep.subr.mxu0 0.0
    %3131 = vmatpush1.msra.mxu0 %v3079
    %3132 = vmatprep.subr.mxu0 0.0
    %3133 = vmatpush1.msra.mxu0 %v3080
    %3134 = vmatprep.subr.mxu0 0.0
    %3135 = vmatpush1.msra.mxu0 %v3081
    %3136 = vmatprep.subr.mxu0 0.0
    %3137 = vmatpush1.msra.mxu0 %v3082
    %3138 = vmatprep.subr.mxu0 0.0
    %3139 = vmatpush1.msra.mxu0 0.0
    %3140 = vmatprep.subr.mxu0 0.0
    %3141 = vmatpush1.msra.mxu0 0.0
    %3142 = vmatprep.subr.mxu0 0.0
    %3143 = vmatpush1.msra.mxu0 0.0
    %3144 = vmatprep.subr.mxu0 0.0
    %3145 = vmatpush1.msra.mxu0 0.0
    %3146 = vmatprep.subr.mxu0 0.0
    %3147 = vmatpush1.msra.mxu0 0.0
    %3148 = vmatprep.subr.mxu0 0.0
    %3149 = vmatpush1.msra.mxu0 0.0
    %3150 = vmatprep.subr.mxu0 0.0
    %3151 = vmatpush1.msra.mxu0 0.0
    %3152 = vmatprep.subr.mxu0 0.0
    %3153 = vmatpush1.msra.mxu0 0.0
    %3154 = vmatprep.subr.mxu0 0.0
    %3155 = vmatpush1.msra.mxu0 0.0
    %3156 = vmatprep.subr.mxu0 0.0
    %3157 = vmatpush1.msra.mxu0 0.0
    %3158 = vmatprep.subr.mxu0 0.0
    %3159 = vmatpush1.msra.mxu0 0.0
    %3160 = vmatprep.subr.mxu0 0.0
    %3161 = vmatpush1.msra.mxu0 0.0
    %3162 = vmatprep.subr.mxu0 0.0
    %3163 = vmatpush1.msra.mxu0 0.0
    %3164 = vmatprep.subr.mxu0 0.0
    %3165 = vmatpush1.msra.mxu0 0.0
    %3166 = vmatprep.subr.mxu0 0.0
    %3167 = vmatpush1.msra.mxu0 0.0
    %3168 = vmatprep.subr.mxu0 0.0
    %3169 = vmatpush1.msra.mxu0 0.0
    %3170 = vmatprep.mubr.f32.mxu0 0.0
    %3171 = vmatmul.mubr.f32.gmra.mrb[0].mxu0 %v3066
    %v3172 = vpop.f32.mrb[0].mxu0
    %v3173 = vadd.f32 %v3104, %v3172
    %v3174 = vpop.f32.mrb[0].mxu0
    %3175 = vdwg.mxu0
    %v3176 = vmax.f32 %v3173, 0.0
    %v3177 = vld [vmem:[%s9] sm:$0x1]
    %v3179 = vlaneseq
    %v3180 = vshrl.u32 %v3179, 7
    %v3181 = vsub.s32 0, %v3180
    %v3182 = vrot.slane %v3177, %v3181
    %3184 = vmatprep.subr.mxu0 0.0
    %3185 = vmatpush1.msra.mxu0 %v3083
    %3186 = vmatprep.subr.mxu0 0.0
    %3187 = vmatpush1.msra.mxu0 %v3084
    %3188 = vmatprep.subr.mxu0 0.0
    %3189 = vmatpush1.msra.mxu0 %v3085
    %3190 = vmatprep.subr.mxu0 0.0
    %3191 = vmatpush1.msra.mxu0 %v3086
    %3192 = vmatprep.subr.mxu0 0.0
    %3193 = vmatpush1.msra.mxu0 %v3087
    %3194 = vmatprep.subr.mxu0 0.0
    %3195 = vmatpush1.msra.mxu0 %v3088
    %3196 = vmatprep.subr.mxu0 0.0
    %3197 = vmatpush1.msra.mxu0 %v3089
    %3198 = vmatprep.subr.mxu0 0.0
    %3199 = vmatpush1.msra.mxu0 %v3090
    %3200 = vmatprep.subr.mxu0 0.0
    %3201 = vmatpush1.msra.mxu0 %v3091
    %3202 = vmatprep.subr.mxu0 0.0
    %3203 = vmatpush1.msra.mxu0 %v3092
    %3204 = vmatprep.subr.mxu0 0.0
    %3205 = vmatpush1.msra.mxu0 %v3093
    %3206 = vmatprep.subr.mxu0 0.0
    %3207 = vmatpush1.msra.mxu0 %v3094
    %3208 = vmatprep.subr.mxu0 0.0
    %3209 = vmatpush1.msra.mxu0 %v3095
    %3210 = vmatprep.subr.mxu0 0.0
    %3211 = vmatpush1.msra.mxu0 %v3096
    %3212 = vmatprep.subr.mxu0 0.0
    %3213 = vmatpush1.msra.mxu0 %v3097
    %3214 = vmatprep.subr.mxu0 0.0
    %3215 = vmatpush1.msra.mxu0 %v3098
    %3216 = vmatprep.subr.mxu0 0.0
    %3217 = vmatpush1.msra.mxu0 0.0
    %3218 = vmatprep.subr.mxu0 0.0
    %3219 = vmatpush1.msra.mxu0 0.0
    %3220 = vmatprep.subr.mxu0 0.0
    %3221 = vmatpush1.msra.mxu0 0.0
    %3222 = vmatprep.subr.mxu0 0.0
    %3223 = vmatpush1.msra.mxu0 0.0
    %3224 = vmatprep.subr.mxu0 0.0
    %3225 = vmatpush1.msra.mxu0 0.0
    %3226 = vmatprep.subr.mxu0 0.0
    %3227 = vmatpush1.msra.mxu0 0.0
    %3228 = vmatprep.subr.mxu0 0.0
    %3229 = vmatpush1.msra.mxu0 0.0
    %3230 = vmatprep.subr.mxu0 0.0
    %3231 = vmatpush1.msra.mxu0 0.0
    %3232 = vmatprep.subr.mxu0 0.0
    %3233 = vmatpush1.msra.mxu0 0.0
    %3234 = vmatprep.subr.mxu0 0.0
    %3235 = vmatpush1.msra.mxu0 0.0
    %3236 = vmatprep.subr.mxu0 0.0
    %3237 = vmatpush1.msra.mxu0 0.0
    %3238 = vmatprep.subr.mxu0 0.0
    %3239 = vmatpush1.msra.mxu0 0.0
    %3240 = vmatprep.subr.mxu0 0.0
    %3241 = vmatpush1.msra.mxu0 0.0
    %3242 = vmatprep.subr.mxu0 0.0
    %3243 = vmatpush1.msra.mxu0 0.0
    %3244 = vmatprep.subr.mxu0 0.0
    %3245 = vmatpush1.msra.mxu0 0.0
    %3246 = vmatprep.subr.mxu0 0.0
    %3247 = vmatpush1.msra.mxu0 0.0
    %3248 = vmatprep.mubr.f32.mxu0 0.0
    %3249 = vmatmul.mubr.f32.gmra.mrb[0].mxu0 %v3176
    %v3250 = vpop.f32.mrb[0].mxu0
    %v3251 = vadd.f32 %v3182, %v3250
    %v3252 = vpop.f32.mrb[0].mxu0
    %3253 = vdwg.mxu0
    %3254 = vst [vmem:[%s10] sm:$0xff] %v3251
    // Predicated region
    $region54: #{lstm_model_forward.1} parent=1 // pred_check
      _
    $region55: #{lstm_model_forward.1} parent=1 // pred_check_branch
      %3256 = sbr.rel (0) target = $region57
    $region56: #{lstm_model_forward.1} parent=1 // pred_region
      _
    $region57: #{lstm_model_forward.1} parent=1 // pred_fallthru
      _
    // Predicated region
    $region58: #{lstm_model_forward.1} parent=1 // pred_check
      _
    $region59: #{lstm_model_forward.1} parent=1 // pred_check_branch
      %3258 = sbr.rel (0) target = $region61
    $region60: #{lstm_model_forward.1} parent=1 // pred_region
      _
    $region61: #{lstm_model_forward.1} parent=1 // pred_fallthru
      _
    %3259 = vsyncpa [#allocation3], 1
    %3260 = vsyncpa [#allocation5], 1

</llo_original>
